<compile_context>
chip_gen: v6e
topology: v6e:2x2x1
jax: 0.10.0
libtpu: 0.0.40
codegen_flags: <defaults>
</compile_context>

<pallas_src>
import math

import jax
import jax.numpy as jnp
import numpy as np
from jax.experimental import pallas as pl
from jax.experimental.pallas import tpu as pltpu


# -----------------------------------------------------------------------------
# Pallas kernel
# -----------------------------------------------------------------------------
def _segrnn_kernel(xp_ref, dec_ref, wp_ref, bp_ref, wih_ref, whh_ref,
                   bih_ref, bhh_ref, wre_ref, bre_ref, out_ref, gx_scr):
    P, D = wp_ref.shape                     # patch_len, d_model
    TB = out_ref.shape[0]                   # batch tile
    N = xp_ref.shape[0] // TB               # number of input patches
    M = dec_ref.shape[0] // TB              # number of output segments

    wp = wp_ref[...]                        # (P, D)
    bp = bp_ref[...].astype(jnp.float32)    # (1, D)
    wih = wih_ref[...]                      # (D, 3D)  fused gates [r|z|n]
    whh = whh_ref[...]                      # (D, 3D)
    bih = bih_ref[...].astype(jnp.float32)  # (1, 3D)
    bhh = bhh_ref[...].astype(jnp.float32)  # (1, 3D)
    wre = wre_ref[...]                      # (D, P)
    bre = bre_ref[...].astype(jnp.float32)  # (1, P)
    mm_dtype = wih.dtype                    # matmul operand dtype (f32 or bf16)

    # ---- hoisted input-side work: two big matmuls, off the critical path ----
    xd = jnp.dot(xp_ref[...], wp, preferred_element_type=jnp.float32) + bp
    xd = jnp.maximum(xd, 0.0)                                        # ReLU
    gx_scr[...] = jnp.dot(xd.astype(mm_dtype), wih,
                          preferred_element_type=jnp.float32) + bih  # (N*TB, 3D)

    def gates(gx, gh, h):
        # PyTorch GRU equations, gate order (r, z, n); math kept in f32.
        r = jax.nn.sigmoid(gx[:, :D] + gh[:, :D])
        z = jax.nn.sigmoid(gx[:, D:2 * D] + gh[:, D:2 * D])
        n = jnp.tanh(gx[:, 2 * D:] + r * gh[:, 2 * D:])
        return (1.0 - z) * n + z * h

    # ---- encoder recurrence: only h @ Whh_fused on the serial path ----------
    def enc_step(t, h):
        start = pl.multiple_of(t * TB, TB)
        gx = gx_scr[pl.ds(start, TB), :]                             # (TB, 3D)
        gh = jnp.dot(h.astype(mm_dtype), whh,
                     preferred_element_type=jnp.float32) + bhh
        return gates(gx, gh, h)

    h_enc = jax.lax.fori_loop(0, N, enc_step,
                              jnp.zeros((TB, D), jnp.float32),
                              unroll=True)                           # (TB, D)

    # ---- decoder: all M segments share h_enc -> batch them ------------------
    # TODO(synk): dropout on dec_out is identity (eval mode), so it is omitted.
    gh_dec = jnp.dot(h_enc.astype(mm_dtype), whh,
                     preferred_element_type=jnp.float32) + bhh       # once
    gx_dec = jnp.dot(dec_ref[...], wih,
                     preferred_element_type=jnp.float32) + bih       # (M*TB, 3D)

    outs = []
    for m in range(M):                                               # static, small
        h_dec = gates(gx_dec[m * TB:(m + 1) * TB], gh_dec, h_enc)    # (TB, D)
        outs.append(jnp.dot(h_dec.astype(mm_dtype), wre,
                            preferred_element_type=jnp.float32) + bre)
    # single full-tile store instead of M narrow masked stores
    out_ref[...] = jnp.concatenate(outs, axis=-1).astype(out_ref.dtype)


# -----------------------------------------------------------------------------
# Wrapper (glue: de-trend, layout shuffles, dec_in tile, pallas_call)
# -----------------------------------------------------------------------------
def segrnn_forward(x, x_mark, y, y_mark, params, *, patch_len, pred_len,
                   d_model, block_b, param_dtype=jnp.float32):
    del x_mark, y, y_mark            # unused by the reference forward
    B0, L, C = x.shape
    P, D = patch_len, d_model
    N = L // P
    M = pred_len // P
    B = B0 * C
    TB = block_b
    # TB multiple of C (so one dec_in tile serves every block) and of 8
    # (sublane alignment).  For real workloads raise block_b to >=256 and keep
    # the grid length >= 2 so both v7x TensorCores get work.
    assert B % TB == 0 and TB % C == 0 and TB % 8 == 0
    nblk = B // TB

    seq_last = x[:, -1:, :]                                     # (B0, 1, C)
    xn = x - seq_last
    xb = jnp.transpose(xn, (0, 2, 1)).reshape(B, L)             # (B, L), b=b0*C+c
    # t-major-within-tile 2-D layout: global row = i*(N*TB) + t*TB + b_local.
    xp2d = (xb.reshape(nblk, TB, N, P)
              .transpose(0, 2, 1, 3)
              .reshape(nblk * N * TB, P)).astype(param_dtype)

    # single decoder-input tile (M*TB, D), reused by every grid block
    pos_part = jnp.repeat(params["pos_emb"], TB, axis=0)        # (M*TB, D/2)
    ch_part = jnp.tile(params["channel_emb"], (TB // C, 1))     # (TB,   D/2)
    ch_part = jnp.tile(ch_part, (M, 1))                         # (M*TB, D/2)
    dec_tile = jnp.concatenate([pos_part, ch_part],
                               axis=-1).astype(param_dtype)     # (M*TB, D)

    castw = lambda a: a.astype(param_dtype)
    wp, wih, whh, wre = (castw(params["wp"]), castw(params["wih"]),
                         castw(params["whh"]), castw(params["wre"]))
    bp, bih, bhh, bre = (params["bp"], params["bih"],
                         params["bhh"], params["bre"])          # biases stay f32

    out = pl.pallas_call(
        _segrnn_kernel,
        out_shape=jax.ShapeDtypeStruct((B, M * P), jnp.float32),
        grid_spec=pltpu.PrefetchScalarGridSpec(
            num_scalar_prefetch=0,
            grid=(nblk,),
            in_specs=[
                pl.BlockSpec((N * TB, P), lambda i: (i, 0)),      # x patches
                pl.BlockSpec((M * TB, D), lambda i: (0, 0)),      # dec_in tile
                pl.BlockSpec((P, D), lambda i: (0, 0)),           # W_patch
                pl.BlockSpec((1, D), lambda i: (0, 0)),           # b_patch
                pl.BlockSpec((D, 3 * D), lambda i: (0, 0)),       # W_ih fused
                pl.BlockSpec((D, 3 * D), lambda i: (0, 0)),       # W_hh fused
                pl.BlockSpec((1, 3 * D), lambda i: (0, 0)),       # b_ih fused
                pl.BlockSpec((1, 3 * D), lambda i: (0, 0)),       # b_hh fused
                pl.BlockSpec((D, P), lambda i: (0, 0)),           # W_re
                pl.BlockSpec((1, P), lambda i: (0, 0)),           # b_re
            ],
            out_specs=pl.BlockSpec((TB, M * P), lambda i: (i, 0)),
            scratch_shapes=[pltpu.VMEM((N * TB, 3 * D), jnp.float32)],
        ),
        compiler_params=pltpu.CompilerParams(
            dimension_semantics=("parallel",)),
    )(xp2d, dec_tile, wp, bp, wih, whh, bih, bhh, wre, bre)

    pred = out.reshape(B0, C, pred_len).transpose(0, 2, 1)      # (B0, pred_len, C)
    return pred + seq_last


# -----------------------------------------------------------------------------
# Pure-JAX reference (for verification of the Pallas kernel)
# -----------------------------------------------------------------------------
def segrnn_reference(x, params, *, patch_len, pred_len, d_model):
    B0, L, C = x.shape
    P, D = patch_len, d_model
    N, M, B = L // P, pred_len // P, B0 * C
    wih, whh, bih, bhh = (params["wih"], params["whh"],
                          params["bih"], params["bhh"])

    seq_last = x[:, -1:, :]
    xb = jnp.transpose(x - seq_last, (0, 2, 1)).reshape(B, N, P)
    xd = jnp.maximum(jnp.einsum("bnp,pd->bnd", xb, params["wp"])
                     + params["bp"], 0.0)

    def cell(x_d, h):
        gx = x_d @ wih + bih
        gh = h @ whh + bhh
        r = jax.nn.sigmoid(gx[:, :D] + gh[:, :D])
        z = jax.nn.sigmoid(gx[:, D:2 * D] + gh[:, D:2 * D])
        n = jnp.tanh(gx[:, 2 * D:] + r * gh[:, 2 * D:])
        return (1.0 - z) * n + z * h

    h = jnp.zeros((B, D), jnp.float32)
    for t in range(N):
        h = cell(xd[:, t, :], h)

    half = D // 2
    pos = jnp.broadcast_to(params["pos_emb"][None, :, :], (B, M, half))
    ch = jnp.broadcast_to(
        jnp.tile(params["channel_emb"], (B0, 1))[:, None, :], (B, M, half))
    dec_in = jnp.concatenate([pos, ch], axis=-1)

    outs = []
    for m in range(M):
        hd = cell(dec_in[:, m, :], h)
        outs.append(hd @ params["wre"] + params["bre"])
    pred = jnp.concatenate(outs, axis=-1)                       # (B, pred_len)
    pred = pred.reshape(B0, C, pred_len).transpose(0, 2, 1)
    return pred + seq_last


# -----------------------------------------------------------------------------
# Deterministic parameter init (fused-gate layout; matches PyTorch shapes
# after transposing / concatenating the [r, z, n] gate blocks)
# -----------------------------------------------------------------------------
def init_params(key, *, enc_in, d_model, patch_len, pred_len):
    C, D, P = enc_in, d_model, patch_len
    M = pred_len // P
    ks = jax.random.split(key, 10)

    def uni(k, shape, fan_in):
        bound = 1.0 / math.sqrt(fan_in)
        return jax.random.uniform(k, shape, jnp.float32, -bound, bound)

    return dict(
        wp=uni(ks[0], (P, D), P),            # linear_patch.weight^T
        bp=uni(ks[1], (1, D), P),            # linear_patch.bias
        wih=uni(ks[2], (D, 3 * D), D),       # gru.weight_ih_l0^T, gates [r|z|n]
        whh=uni(ks[3], (D, 3 * D), D),       # gru.weight_hh_l0^T
        bih=uni(ks[4], (1, 3 * D), D),       # gru.bias_ih_l0
        bhh=uni(ks[5], (1, 3 * D), D),       # gru.bias_hh_l0
        pos_emb=jax.random.normal(ks[6], (M, D // 2), jnp.float32),
        channel_emb=jax.random.normal(ks[7], (C, D // 2), jnp.float32),
        wre=uni(ks[8], (D, P), D),           # linear_patch_re.weight^T
        bre=uni(ks[9], (1, P), D),           # linear_patch_re.bias
        # NOTE: nn.Embedding `channel_embed` is defined in __init__ but never
        # used in forward, so it is intentionally omitted.
    )


if __name__ == "__main__":
    # Small config: enc_in=4, seq_len=64, patch_len=8 (N=8), pred_len=16 (M=2),
    # d_model=128, batch B0=16 -> flattened batch B = 64, tiled as 2 blocks of
    # 32 (grid=2 keeps both v7x TensorCores busy; raise block_b for real sizes).
    enc_in, seq_len, patch_len, pred_len, d_model, B0 = 4, 64, 8, 16, 128, 16
    block_b = 32

    key = jax.random.PRNGKey(0)
    kx, kp = jax.random.split(key)
    x = jax.random.normal(kx, (B0, seq_len, enc_in), jnp.float32)
    x_mark = jnp.zeros((B0, seq_len, 1), jnp.float32)      # unused
    y = jnp.zeros((B0, pred_len, enc_in), jnp.float32)     # unused
    y_mark = jnp.zeros((B0, pred_len, 1), jnp.float32)     # unused

    params = init_params(kp, enc_in=enc_in, d_model=d_model,
                         patch_len=patch_len, pred_len=pred_len)

    # f32 path (exact check against the pure-JAX reference)
    pred = segrnn_forward(x, x_mark, y, y_mark, params,
                          patch_len=patch_len, pred_len=pred_len,
                          d_model=d_model, block_b=block_b)
    pred = jax.block_until_ready(pred)

    ref = segrnn_reference(x, params, patch_len=patch_len,
                           pred_len=pred_len, d_model=d_model)
    assert pred.shape == (B0, pred_len, enc_in), pred.shape
    np.testing.assert_allclose(np.asarray(pred), np.asarray(ref),
                               rtol=1e-4, atol=1e-4)

    # bf16 matmul-operand path (the v6e/v7x MXU/bandwidth lever); gate math
    # stays f32 in-kernel, so only a loose tolerance is needed.
    pred_bf16 = segrnn_forward(x, x_mark, y, y_mark, params,
                               patch_len=patch_len, pred_len=pred_len,
                               d_model=d_model, block_b=block_b,
                               param_dtype=jnp.bfloat16)
    pred_bf16 = jax.block_until_ready(pred_bf16)
    np.testing.assert_allclose(np.asarray(pred_bf16), np.asarray(ref),
                               rtol=5e-2, atol=5e-2)

    print("KERNEL_OK")
</pallas_src>

<mosaic_0001>
module attributes {stable_mosaic.version = 11 : i64} {
  func.func @_segrnn_kernel(%arg0: i32, %arg1: memref<256x8xf32, #tpu.memory_space<vmem>>, %arg2: memref<64x128xf32, #tpu.memory_space<vmem>>, %arg3: memref<8x128xf32, #tpu.memory_space<vmem>>, %arg4: memref<1x128xf32, #tpu.memory_space<vmem>>, %arg5: memref<128x384xf32, #tpu.memory_space<vmem>>, %arg6: memref<128x384xf32, #tpu.memory_space<vmem>>, %arg7: memref<1x384xf32, #tpu.memory_space<vmem>>, %arg8: memref<1x384xf32, #tpu.memory_space<vmem>>, %arg9: memref<128x8xf32, #tpu.memory_space<vmem>>, %arg10: memref<1x8xf32, #tpu.memory_space<vmem>>, %arg11: memref<32x16xf32, #tpu.memory_space<vmem>>, %arg12: memref<256x384xf32, #tpu.memory_space<vmem>>) attributes {dimension_semantics = [#tpu.dimension_semantics<parallel>], iteration_bounds = array<i64: 2>, scalar_prefetch = 0 : i64, scratch_operands = 1 : i64, tpu.core_type = #tpu.core_type<tc>, window_params = [{transform_indices = @transform_0, window_bounds = array<i64: 256, 8>}, {pipeline_mode = #tpu.pipeline_mode<synchronous>, transform_indices = @transform_1, window_bounds = array<i64: 64, 128>}, {pipeline_mode = #tpu.pipeline_mode<synchronous>, transform_indices = @transform_2, window_bounds = array<i64: 8, 128>}, {pipeline_mode = #tpu.pipeline_mode<synchronous>, transform_indices = @transform_3, window_bounds = array<i64: 1, 128>}, {pipeline_mode = #tpu.pipeline_mode<synchronous>, transform_indices = @transform_4, window_bounds = array<i64: 128, 384>}, {pipeline_mode = #tpu.pipeline_mode<synchronous>, transform_indices = @transform_5, window_bounds = array<i64: 128, 384>}, {pipeline_mode = #tpu.pipeline_mode<synchronous>, transform_indices = @transform_6, window_bounds = array<i64: 1, 384>}, {pipeline_mode = #tpu.pipeline_mode<synchronous>, transform_indices = @transform_7, window_bounds = array<i64: 1, 384>}, {pipeline_mode = #tpu.pipeline_mode<synchronous>, transform_indices = @transform_8, window_bounds = array<i64: 128, 8>}, {pipeline_mode = #tpu.pipeline_mode<synchronous>, transform_indices = @transform_9, window_bounds = array<i64: 1, 8>}, {transform_indices = @transform_10, window_bounds = array<i64: 32, 16>}]} {
    %c0 = arith.constant 0 : index
    %c0_0 = arith.constant 0 : index
    %0 = vector.load %arg3[%c0, %c0_0] : memref<8x128xf32, #tpu.memory_space<vmem>>, vector<8x128xf32>
    %c0_1 = arith.constant 0 : index
    %c0_2 = arith.constant 0 : index
    %1 = vector.load %arg4[%c0_1, %c0_2] : memref<1x128xf32, #tpu.memory_space<vmem>>, vector<1x128xf32>
    %c0_3 = arith.constant 0 : index
    %c0_4 = arith.constant 0 : index
    %2 = vector.load %arg5[%c0_3, %c0_4] : memref<128x384xf32, #tpu.memory_space<vmem>>, vector<128x384xf32>
    %c0_5 = arith.constant 0 : index
    %c0_6 = arith.constant 0 : index
    %3 = vector.load %arg6[%c0_5, %c0_6] : memref<128x384xf32, #tpu.memory_space<vmem>>, vector<128x384xf32>
    %c0_7 = arith.constant 0 : index
    %c0_8 = arith.constant 0 : index
    %4 = vector.load %arg7[%c0_7, %c0_8] : memref<1x384xf32, #tpu.memory_space<vmem>>, vector<1x384xf32>
    %c0_9 = arith.constant 0 : index
    %c0_10 = arith.constant 0 : index
    %5 = vector.load %arg8[%c0_9, %c0_10] : memref<1x384xf32, #tpu.memory_space<vmem>>, vector<1x384xf32>
    %c0_11 = arith.constant 0 : index
    %c0_12 = arith.constant 0 : index
    %6 = vector.load %arg9[%c0_11, %c0_12] : memref<128x8xf32, #tpu.memory_space<vmem>>, vector<128x8xf32>
    %c0_13 = arith.constant 0 : index
    %c0_14 = arith.constant 0 : index
    %7 = vector.load %arg10[%c0_13, %c0_14] : memref<1x8xf32, #tpu.memory_space<vmem>>, vector<1x8xf32>
    %c0_15 = arith.constant 0 : index
    %c0_16 = arith.constant 0 : index
    %8 = vector.load %arg1[%c0_15, %c0_16] : memref<256x8xf32, #tpu.memory_space<vmem>>, vector<256x8xf32>
    %cst = arith.constant dense<0.000000e+00> : vector<256x128xf32>
    %9 = tpu.matmul %8, %0, %cst {dimension_numbers = #tpu.dot_dimension_numbers<[1], [0], [0], [1], [0, 0, 1, 1], [], []>} : vector<256x8xf32>, vector<8x128xf32>, vector<256x128xf32> -> vector<256x128xf32>
    %10 = vector.broadcast %1 : vector<1x128xf32> to vector<256x128xf32>
    %11 = arith.addf %9, %10 : vector<256x128xf32>
    %cst_17 = arith.constant 0.000000e+00 : f32
    %12 = vector.broadcast %cst_17 : f32 to vector<256x128xf32>
    %13 = arith.maximumf %11, %12 : vector<256x128xf32>
    %cst_18 = arith.constant dense<0.000000e+00> : vector<256x384xf32>
    %14 = tpu.matmul %13, %2, %cst_18 {dimension_numbers = #tpu.dot_dimension_numbers<[1], [0], [0], [1], [0, 0, 1, 1], [], []>} : vector<256x128xf32>, vector<128x384xf32>, vector<256x384xf32> -> vector<256x384xf32>
    %15 = vector.broadcast %4 : vector<1x384xf32> to vector<256x384xf32>
    %16 = arith.addf %14, %15 : vector<256x384xf32>
    %c0_19 = arith.constant 0 : index
    %c0_20 = arith.constant 0 : index
    %17 = vector.load %arg12[%c0_19, %c0_20] : memref<256x384xf32, #tpu.memory_space<vmem>>, vector<256x384xf32>
    tpu.vector_store %arg12[%c0_19, %c0_20], %16 {strides = array<i32>} : memref<256x384xf32, #tpu.memory_space<vmem>>, vector<256x384xf32>,
    %cst_21 = arith.constant 0.000000e+00 : f32
    %18 = vector.broadcast %cst_21 : f32 to vector<32x128xf32>
    %c0_i32 = arith.constant 0 : i32
    %c32_i32 = arith.constant 32 : i32
    %19 = arith.muli %c0_i32, %c32_i32 : i32
    %20 = tpu.assume_multiple %19, 32 : i32
    %21 = arith.index_cast %20 : i32 to index
    %c0_22 = arith.constant 0 : index
    %22 = vector.load %arg12[%21, %c0_22] : memref<256x384xf32, #tpu.memory_space<vmem>>, vector<32x384xf32>
    %cst_23 = arith.constant dense<0.000000e+00> : vector<32x384xf32>
    %23 = tpu.matmul %18, %3, %cst_23 {dimension_numbers = #tpu.dot_dimension_numbers<[1], [0], [0], [1], [0, 0, 1, 1], [], []>} : vector<32x128xf32>, vector<128x384xf32>, vector<32x384xf32> -> vector<32x384xf32>
    %24 = vector.broadcast %5 : vector<1x384xf32> to vector<32x384xf32>
    %25 = arith.addf %23, %24 : vector<32x384xf32>
    %26 = vector.extract_strided_slice %22 {offsets = [0, 0], sizes = [32, 128], strides = [1, 1]} : vector<32x384xf32> to vector<32x128xf32>
    %27 = vector.extract_strided_slice %25 {offsets = [0, 0], sizes = [32, 128], strides = [1, 1]} : vector<32x384xf32> to vector<32x128xf32>
    %28 = arith.addf %26, %27 : vector<32x128xf32>
    %29 = arith.negf %28 : vector<32x128xf32>
    %30 = math.exp %29 : vector<32x128xf32>
    %cst_24 = arith.constant 1.000000e+00 : f32
    %31 = vector.broadcast %cst_24 : f32 to vector<32x128xf32>
    %32 = arith.addf %31, %30 : vector<32x128xf32>
    %33 = arith.divf %31, %32 : vector<32x128xf32>
    %34 = vector.extract_strided_slice %22 {offsets = [0, 128], sizes = [32, 128], strides = [1, 1]} : vector<32x384xf32> to vector<32x128xf32>
    %35 = vector.extract_strided_slice %25 {offsets = [0, 128], sizes = [32, 128], strides = [1, 1]} : vector<32x384xf32> to vector<32x128xf32>
    %36 = arith.addf %34, %35 : vector<32x128xf32>
    %37 = arith.negf %36 : vector<32x128xf32>
    %38 = math.exp %37 : vector<32x128xf32>
    %cst_25 = arith.constant 1.000000e+00 : f32
    %39 = vector.broadcast %cst_25 : f32 to vector<32x128xf32>
    %40 = arith.addf %39, %38 : vector<32x128xf32>
    %41 = arith.divf %39, %40 : vector<32x128xf32>
    %42 = vector.extract_strided_slice %22 {offsets = [0, 256], sizes = [32, 128], strides = [1, 1]} : vector<32x384xf32> to vector<32x128xf32>
    %43 = vector.extract_strided_slice %25 {offsets = [0, 256], sizes = [32, 128], strides = [1, 1]} : vector<32x384xf32> to vector<32x128xf32>
    %44 = arith.mulf %33, %43 : vector<32x128xf32>
    %45 = arith.addf %42, %44 : vector<32x128xf32>
    %46 = math.tanh %45 : vector<32x128xf32>
    %cst_26 = arith.constant 1.000000e+00 : f32
    %47 = vector.broadcast %cst_26 : f32 to vector<32x128xf32>
    %48 = arith.subf %47, %41 : vector<32x128xf32>
    %49 = arith.mulf %48, %46 : vector<32x128xf32>
    %50 = arith.mulf %41, %18 : vector<32x128xf32>
    %51 = arith.addf %49, %50 : vector<32x128xf32>
    %c1_i32 = arith.constant 1 : i32
    %c32_i32_27 = arith.constant 32 : i32
    %52 = arith.muli %c1_i32, %c32_i32_27 : i32
    %53 = tpu.assume_multiple %52, 32 : i32
    %54 = arith.index_cast %53 : i32 to index
    %c0_28 = arith.constant 0 : index
    %55 = vector.load %arg12[%54, %c0_28] : memref<256x384xf32, #tpu.memory_space<vmem>>, vector<32x384xf32>
    %cst_29 = arith.constant dense<0.000000e+00> : vector<32x384xf32>
    %56 = tpu.matmul %51, %3, %cst_29 {dimension_numbers = #tpu.dot_dimension_numbers<[1], [0], [0], [1], [0, 0, 1, 1], [], []>} : vector<32x128xf32>, vector<128x384xf32>, vector<32x384xf32> -> vector<32x384xf32>
    %57 = vector.broadcast %5 : vector<1x384xf32> to vector<32x384xf32>
    %58 = arith.addf %56, %57 : vector<32x384xf32>
    %59 = vector.extract_strided_slice %55 {offsets = [0, 0], sizes = [32, 128], strides = [1, 1]} : vector<32x384xf32> to vector<32x128xf32>
    %60 = vector.extract_strided_slice %58 {offsets = [0, 0], sizes = [32, 128], strides = [1, 1]} : vector<32x384xf32> to vector<32x128xf32>
    %61 = arith.addf %59, %60 : vector<32x128xf32>
    %62 = arith.negf %61 : vector<32x128xf32>
    %63 = math.exp %62 : vector<32x128xf32>
    %cst_30 = arith.constant 1.000000e+00 : f32
    %64 = vector.broadcast %cst_30 : f32 to vector<32x128xf32>
    %65 = arith.addf %64, %63 : vector<32x128xf32>
    %66 = arith.divf %64, %65 : vector<32x128xf32>
    %67 = vector.extract_strided_slice %55 {offsets = [0, 128], sizes = [32, 128], strides = [1, 1]} : vector<32x384xf32> to vector<32x128xf32>
    %68 = vector.extract_strided_slice %58 {offsets = [0, 128], sizes = [32, 128], strides = [1, 1]} : vector<32x384xf32> to vector<32x128xf32>
    %69 = arith.addf %67, %68 : vector<32x128xf32>
    %70 = arith.negf %69 : vector<32x128xf32>
    %71 = math.exp %70 : vector<32x128xf32>
    %cst_31 = arith.constant 1.000000e+00 : f32
    %72 = vector.broadcast %cst_31 : f32 to vector<32x128xf32>
    %73 = arith.addf %72, %71 : vector<32x128xf32>
    %74 = arith.divf %72, %73 : vector<32x128xf32>
    %75 = vector.extract_strided_slice %55 {offsets = [0, 256], sizes = [32, 128], strides = [1, 1]} : vector<32x384xf32> to vector<32x128xf32>
    %76 = vector.extract_strided_slice %58 {offsets = [0, 256], sizes = [32, 128], strides = [1, 1]} : vector<32x384xf32> to vector<32x128xf32>
    %77 = arith.mulf %66, %76 : vector<32x128xf32>
    %78 = arith.addf %75, %77 : vector<32x128xf32>
    %79 = math.tanh %78 : vector<32x128xf32>
    %cst_32 = arith.constant 1.000000e+00 : f32
    %80 = vector.broadcast %cst_32 : f32 to vector<32x128xf32>
    %81 = arith.subf %80, %74 : vector<32x128xf32>
    %82 = arith.mulf %81, %79 : vector<32x128xf32>
    %83 = arith.mulf %74, %51 : vector<32x128xf32>
    %84 = arith.addf %82, %83 : vector<32x128xf32>
    %c2_i32 = arith.constant 2 : i32
    %c32_i32_33 = arith.constant 32 : i32
    %85 = arith.muli %c2_i32, %c32_i32_33 : i32
    %86 = tpu.assume_multiple %85, 32 : i32
    %87 = arith.index_cast %86 : i32 to index
    %c0_34 = arith.constant 0 : index
    %88 = vector.load %arg12[%87, %c0_34] : memref<256x384xf32, #tpu.memory_space<vmem>>, vector<32x384xf32>
    %cst_35 = arith.constant dense<0.000000e+00> : vector<32x384xf32>
    %89 = tpu.matmul %84, %3, %cst_35 {dimension_numbers = #tpu.dot_dimension_numbers<[1], [0], [0], [1], [0, 0, 1, 1], [], []>} : vector<32x128xf32>, vector<128x384xf32>, vector<32x384xf32> -> vector<32x384xf32>
    %90 = vector.broadcast %5 : vector<1x384xf32> to vector<32x384xf32>
    %91 = arith.addf %89, %90 : vector<32x384xf32>
    %92 = vector.extract_strided_slice %88 {offsets = [0, 0], sizes = [32, 128], strides = [1, 1]} : vector<32x384xf32> to vector<32x128xf32>
    %93 = vector.extract_strided_slice %91 {offsets = [0, 0], sizes = [32, 128], strides = [1, 1]} : vector<32x384xf32> to vector<32x128xf32>
    %94 = arith.addf %92, %93 : vector<32x128xf32>
    %95 = arith.negf %94 : vector<32x128xf32>
    %96 = math.exp %95 : vector<32x128xf32>
    %cst_36 = arith.constant 1.000000e+00 : f32
    %97 = vector.broadcast %cst_36 : f32 to vector<32x128xf32>
    %98 = arith.addf %97, %96 : vector<32x128xf32>
    %99 = arith.divf %97, %98 : vector<32x128xf32>
    %100 = vector.extract_strided_slice %88 {offsets = [0, 128], sizes = [32, 128], strides = [1, 1]} : vector<32x384xf32> to vector<32x128xf32>
    %101 = vector.extract_strided_slice %91 {offsets = [0, 128], sizes = [32, 128], strides = [1, 1]} : vector<32x384xf32> to vector<32x128xf32>
    %102 = arith.addf %100, %101 : vector<32x128xf32>
    %103 = arith.negf %102 : vector<32x128xf32>
    %104 = math.exp %103 : vector<32x128xf32>
    %cst_37 = arith.constant 1.000000e+00 : f32
    %105 = vector.broadcast %cst_37 : f32 to vector<32x128xf32>
    %106 = arith.addf %105, %104 : vector<32x128xf32>
    %107 = arith.divf %105, %106 : vector<32x128xf32>
    %108 = vector.extract_strided_slice %88 {offsets = [0, 256], sizes = [32, 128], strides = [1, 1]} : vector<32x384xf32> to vector<32x128xf32>
    %109 = vector.extract_strided_slice %91 {offsets = [0, 256], sizes = [32, 128], strides = [1, 1]} : vector<32x384xf32> to vector<32x128xf32>
    %110 = arith.mulf %99, %109 : vector<32x128xf32>
    %111 = arith.addf %108, %110 : vector<32x128xf32>
    %112 = math.tanh %111 : vector<32x128xf32>
    %cst_38 = arith.constant 1.000000e+00 : f32
    %113 = vector.broadcast %cst_38 : f32 to vector<32x128xf32>
    %114 = arith.subf %113, %107 : vector<32x128xf32>
    %115 = arith.mulf %114, %112 : vector<32x128xf32>
    %116 = arith.mulf %107, %84 : vector<32x128xf32>
    %117 = arith.addf %115, %116 : vector<32x128xf32>
    %c3_i32 = arith.constant 3 : i32
    %c32_i32_39 = arith.constant 32 : i32
    %118 = arith.muli %c3_i32, %c32_i32_39 : i32
    %119 = tpu.assume_multiple %118, 32 : i32
    %120 = arith.index_cast %119 : i32 to index
    %c0_40 = arith.constant 0 : index
    %121 = vector.load %arg12[%120, %c0_40] : memref<256x384xf32, #tpu.memory_space<vmem>>, vector<32x384xf32>
    %cst_41 = arith.constant dense<0.000000e+00> : vector<32x384xf32>
    %122 = tpu.matmul %117, %3, %cst_41 {dimension_numbers = #tpu.dot_dimension_numbers<[1], [0], [0], [1], [0, 0, 1, 1], [], []>} : vector<32x128xf32>, vector<128x384xf32>, vector<32x384xf32> -> vector<32x384xf32>
    %123 = vector.broadcast %5 : vector<1x384xf32> to vector<32x384xf32>
    %124 = arith.addf %122, %123 : vector<32x384xf32>
    %125 = vector.extract_strided_slice %121 {offsets = [0, 0], sizes = [32, 128], strides = [1, 1]} : vector<32x384xf32> to vector<32x128xf32>
    %126 = vector.extract_strided_slice %124 {offsets = [0, 0], sizes = [32, 128], strides = [1, 1]} : vector<32x384xf32> to vector<32x128xf32>
    %127 = arith.addf %125, %126 : vector<32x128xf32>
    %128 = arith.negf %127 : vector<32x128xf32>
    %129 = math.exp %128 : vector<32x128xf32>
    %cst_42 = arith.constant 1.000000e+00 : f32
    %130 = vector.broadcast %cst_42 : f32 to vector<32x128xf32>
    %131 = arith.addf %130, %129 : vector<32x128xf32>
    %132 = arith.divf %130, %131 : vector<32x128xf32>
    %133 = vector.extract_strided_slice %121 {offsets = [0, 128], sizes = [32, 128], strides = [1, 1]} : vector<32x384xf32> to vector<32x128xf32>
    %134 = vector.extract_strided_slice %124 {offsets = [0, 128], sizes = [32, 128], strides = [1, 1]} : vector<32x384xf32> to vector<32x128xf32>
    %135 = arith.addf %133, %134 : vector<32x128xf32>
    %136 = arith.negf %135 : vector<32x128xf32>
    %137 = math.exp %136 : vector<32x128xf32>
    %cst_43 = arith.constant 1.000000e+00 : f32
    %138 = vector.broadcast %cst_43 : f32 to vector<32x128xf32>
    %139 = arith.addf %138, %137 : vector<32x128xf32>
    %140 = arith.divf %138, %139 : vector<32x128xf32>
    %141 = vector.extract_strided_slice %121 {offsets = [0, 256], sizes = [32, 128], strides = [1, 1]} : vector<32x384xf32> to vector<32x128xf32>
    %142 = vector.extract_strided_slice %124 {offsets = [0, 256], sizes = [32, 128], strides = [1, 1]} : vector<32x384xf32> to vector<32x128xf32>
    %143 = arith.mulf %132, %142 : vector<32x128xf32>
    %144 = arith.addf %141, %143 : vector<32x128xf32>
    %145 = math.tanh %144 : vector<32x128xf32>
    %cst_44 = arith.constant 1.000000e+00 : f32
    %146 = vector.broadcast %cst_44 : f32 to vector<32x128xf32>
    %147 = arith.subf %146, %140 : vector<32x128xf32>
    %148 = arith.mulf %147, %145 : vector<32x128xf32>
    %149 = arith.mulf %140, %117 : vector<32x128xf32>
    %150 = arith.addf %148, %149 : vector<32x128xf32>
    %c4_i32 = arith.constant 4 : i32
    %c32_i32_45 = arith.constant 32 : i32
    %151 = arith.muli %c4_i32, %c32_i32_45 : i32
    %152 = tpu.assume_multiple %151, 32 : i32
    %153 = arith.index_cast %152 : i32 to index
    %c0_46 = arith.constant 0 : index
    %154 = vector.load %arg12[%153, %c0_46] : memref<256x384xf32, #tpu.memory_space<vmem>>, vector<32x384xf32>
    %cst_47 = arith.constant dense<0.000000e+00> : vector<32x384xf32>
    %155 = tpu.matmul %150, %3, %cst_47 {dimension_numbers = #tpu.dot_dimension_numbers<[1], [0], [0], [1], [0, 0, 1, 1], [], []>} : vector<32x128xf32>, vector<128x384xf32>, vector<32x384xf32> -> vector<32x384xf32>
    %156 = vector.broadcast %5 : vector<1x384xf32> to vector<32x384xf32>
    %157 = arith.addf %155, %156 : vector<32x384xf32>
    %158 = vector.extract_strided_slice %154 {offsets = [0, 0], sizes = [32, 128], strides = [1, 1]} : vector<32x384xf32> to vector<32x128xf32>
    %159 = vector.extract_strided_slice %157 {offsets = [0, 0], sizes = [32, 128], strides = [1, 1]} : vector<32x384xf32> to vector<32x128xf32>
    %160 = arith.addf %158, %159 : vector<32x128xf32>
    %161 = arith.negf %160 : vector<32x128xf32>
    %162 = math.exp %161 : vector<32x128xf32>
    %cst_48 = arith.constant 1.000000e+00 : f32
    %163 = vector.broadcast %cst_48 : f32 to vector<32x128xf32>
    %164 = arith.addf %163, %162 : vector<32x128xf32>
    %165 = arith.divf %163, %164 : vector<32x128xf32>
    %166 = vector.extract_strided_slice %154 {offsets = [0, 128], sizes = [32, 128], strides = [1, 1]} : vector<32x384xf32> to vector<32x128xf32>
    %167 = vector.extract_strided_slice %157 {offsets = [0, 128], sizes = [32, 128], strides = [1, 1]} : vector<32x384xf32> to vector<32x128xf32>
    %168 = arith.addf %166, %167 : vector<32x128xf32>
    %169 = arith.negf %168 : vector<32x128xf32>
    %170 = math.exp %169 : vector<32x128xf32>
    %cst_49 = arith.constant 1.000000e+00 : f32
    %171 = vector.broadcast %cst_49 : f32 to vector<32x128xf32>
    %172 = arith.addf %171, %170 : vector<32x128xf32>
    %173 = arith.divf %171, %172 : vector<32x128xf32>
    %174 = vector.extract_strided_slice %154 {offsets = [0, 256], sizes = [32, 128], strides = [1, 1]} : vector<32x384xf32> to vector<32x128xf32>
    %175 = vector.extract_strided_slice %157 {offsets = [0, 256], sizes = [32, 128], strides = [1, 1]} : vector<32x384xf32> to vector<32x128xf32>
    %176 = arith.mulf %165, %175 : vector<32x128xf32>
    %177 = arith.addf %174, %176 : vector<32x128xf32>
    %178 = math.tanh %177 : vector<32x128xf32>
    %cst_50 = arith.constant 1.000000e+00 : f32
    %179 = vector.broadcast %cst_50 : f32 to vector<32x128xf32>
    %180 = arith.subf %179, %173 : vector<32x128xf32>
    %181 = arith.mulf %180, %178 : vector<32x128xf32>
    %182 = arith.mulf %173, %150 : vector<32x128xf32>
    %183 = arith.addf %181, %182 : vector<32x128xf32>
    %c5_i32 = arith.constant 5 : i32
    %c32_i32_51 = arith.constant 32 : i32
    %184 = arith.muli %c5_i32, %c32_i32_51 : i32
    %185 = tpu.assume_multiple %184, 32 : i32
    %186 = arith.index_cast %185 : i32 to index
    %c0_52 = arith.constant 0 : index
    %187 = vector.load %arg12[%186, %c0_52] : memref<256x384xf32, #tpu.memory_space<vmem>>, vector<32x384xf32>
    %cst_53 = arith.constant dense<0.000000e+00> : vector<32x384xf32>
    %188 = tpu.matmul %183, %3, %cst_53 {dimension_numbers = #tpu.dot_dimension_numbers<[1], [0], [0], [1], [0, 0, 1, 1], [], []>} : vector<32x128xf32>, vector<128x384xf32>, vector<32x384xf32> -> vector<32x384xf32>
    %189 = vector.broadcast %5 : vector<1x384xf32> to vector<32x384xf32>
    %190 = arith.addf %188, %189 : vector<32x384xf32>
    %191 = vector.extract_strided_slice %187 {offsets = [0, 0], sizes = [32, 128], strides = [1, 1]} : vector<32x384xf32> to vector<32x128xf32>
    %192 = vector.extract_strided_slice %190 {offsets = [0, 0], sizes = [32, 128], strides = [1, 1]} : vector<32x384xf32> to vector<32x128xf32>
    %193 = arith.addf %191, %192 : vector<32x128xf32>
    %194 = arith.negf %193 : vector<32x128xf32>
    %195 = math.exp %194 : vector<32x128xf32>
    %cst_54 = arith.constant 1.000000e+00 : f32
    %196 = vector.broadcast %cst_54 : f32 to vector<32x128xf32>
    %197 = arith.addf %196, %195 : vector<32x128xf32>
    %198 = arith.divf %196, %197 : vector<32x128xf32>
    %199 = vector.extract_strided_slice %187 {offsets = [0, 128], sizes = [32, 128], strides = [1, 1]} : vector<32x384xf32> to vector<32x128xf32>
    %200 = vector.extract_strided_slice %190 {offsets = [0, 128], sizes = [32, 128], strides = [1, 1]} : vector<32x384xf32> to vector<32x128xf32>
    %201 = arith.addf %199, %200 : vector<32x128xf32>
    %202 = arith.negf %201 : vector<32x128xf32>
    %203 = math.exp %202 : vector<32x128xf32>
    %cst_55 = arith.constant 1.000000e+00 : f32
    %204 = vector.broadcast %cst_55 : f32 to vector<32x128xf32>
    %205 = arith.addf %204, %203 : vector<32x128xf32>
    %206 = arith.divf %204, %205 : vector<32x128xf32>
    %207 = vector.extract_strided_slice %187 {offsets = [0, 256], sizes = [32, 128], strides = [1, 1]} : vector<32x384xf32> to vector<32x128xf32>
    %208 = vector.extract_strided_slice %190 {offsets = [0, 256], sizes = [32, 128], strides = [1, 1]} : vector<32x384xf32> to vector<32x128xf32>
    %209 = arith.mulf %198, %208 : vector<32x128xf32>
    %210 = arith.addf %207, %209 : vector<32x128xf32>
    %211 = math.tanh %210 : vector<32x128xf32>
    %cst_56 = arith.constant 1.000000e+00 : f32
    %212 = vector.broadcast %cst_56 : f32 to vector<32x128xf32>
    %213 = arith.subf %212, %206 : vector<32x128xf32>
    %214 = arith.mulf %213, %211 : vector<32x128xf32>
    %215 = arith.mulf %206, %183 : vector<32x128xf32>
    %216 = arith.addf %214, %215 : vector<32x128xf32>
    %c6_i32 = arith.constant 6 : i32
    %c32_i32_57 = arith.constant 32 : i32
    %217 = arith.muli %c6_i32, %c32_i32_57 : i32
    %218 = tpu.assume_multiple %217, 32 : i32
    %219 = arith.index_cast %218 : i32 to index
    %c0_58 = arith.constant 0 : index
    %220 = vector.load %arg12[%219, %c0_58] : memref<256x384xf32, #tpu.memory_space<vmem>>, vector<32x384xf32>
    %cst_59 = arith.constant dense<0.000000e+00> : vector<32x384xf32>
    %221 = tpu.matmul %216, %3, %cst_59 {dimension_numbers = #tpu.dot_dimension_numbers<[1], [0], [0], [1], [0, 0, 1, 1], [], []>} : vector<32x128xf32>, vector<128x384xf32>, vector<32x384xf32> -> vector<32x384xf32>
    %222 = vector.broadcast %5 : vector<1x384xf32> to vector<32x384xf32>
    %223 = arith.addf %221, %222 : vector<32x384xf32>
    %224 = vector.extract_strided_slice %220 {offsets = [0, 0], sizes = [32, 128], strides = [1, 1]} : vector<32x384xf32> to vector<32x128xf32>
    %225 = vector.extract_strided_slice %223 {offsets = [0, 0], sizes = [32, 128], strides = [1, 1]} : vector<32x384xf32> to vector<32x128xf32>
    %226 = arith.addf %224, %225 : vector<32x128xf32>
    %227 = arith.negf %226 : vector<32x128xf32>
    %228 = math.exp %227 : vector<32x128xf32>
    %cst_60 = arith.constant 1.000000e+00 : f32
    %229 = vector.broadcast %cst_60 : f32 to vector<32x128xf32>
    %230 = arith.addf %229, %228 : vector<32x128xf32>
    %231 = arith.divf %229, %230 : vector<32x128xf32>
    %232 = vector.extract_strided_slice %220 {offsets = [0, 128], sizes = [32, 128], strides = [1, 1]} : vector<32x384xf32> to vector<32x128xf32>
    %233 = vector.extract_strided_slice %223 {offsets = [0, 128], sizes = [32, 128], strides = [1, 1]} : vector<32x384xf32> to vector<32x128xf32>
    %234 = arith.addf %232, %233 : vector<32x128xf32>
    %235 = arith.negf %234 : vector<32x128xf32>
    %236 = math.exp %235 : vector<32x128xf32>
    %cst_61 = arith.constant 1.000000e+00 : f32
    %237 = vector.broadcast %cst_61 : f32 to vector<32x128xf32>
    %238 = arith.addf %237, %236 : vector<32x128xf32>
    %239 = arith.divf %237, %238 : vector<32x128xf32>
    %240 = vector.extract_strided_slice %220 {offsets = [0, 256], sizes = [32, 128], strides = [1, 1]} : vector<32x384xf32> to vector<32x128xf32>
    %241 = vector.extract_strided_slice %223 {offsets = [0, 256], sizes = [32, 128], strides = [1, 1]} : vector<32x384xf32> to vector<32x128xf32>
    %242 = arith.mulf %231, %241 : vector<32x128xf32>
    %243 = arith.addf %240, %242 : vector<32x128xf32>
    %244 = math.tanh %243 : vector<32x128xf32>
    %cst_62 = arith.constant 1.000000e+00 : f32
    %245 = vector.broadcast %cst_62 : f32 to vector<32x128xf32>
    %246 = arith.subf %245, %239 : vector<32x128xf32>
    %247 = arith.mulf %246, %244 : vector<32x128xf32>
    %248 = arith.mulf %239, %216 : vector<32x128xf32>
    %249 = arith.addf %247, %248 : vector<32x128xf32>
    %c7_i32 = arith.constant 7 : i32
    %c32_i32_63 = arith.constant 32 : i32
    %250 = arith.muli %c7_i32, %c32_i32_63 : i32
    %251 = tpu.assume_multiple %250, 32 : i32
    %252 = arith.index_cast %251 : i32 to index
    %c0_64 = arith.constant 0 : index
    %253 = vector.load %arg12[%252, %c0_64] : memref<256x384xf32, #tpu.memory_space<vmem>>, vector<32x384xf32>
    %cst_65 = arith.constant dense<0.000000e+00> : vector<32x384xf32>
    %254 = tpu.matmul %249, %3, %cst_65 {dimension_numbers = #tpu.dot_dimension_numbers<[1], [0], [0], [1], [0, 0, 1, 1], [], []>} : vector<32x128xf32>, vector<128x384xf32>, vector<32x384xf32> -> vector<32x384xf32>
    %255 = vector.broadcast %5 : vector<1x384xf32> to vector<32x384xf32>
    %256 = arith.addf %254, %255 : vector<32x384xf32>
    %257 = vector.extract_strided_slice %253 {offsets = [0, 0], sizes = [32, 128], strides = [1, 1]} : vector<32x384xf32> to vector<32x128xf32>
    %258 = vector.extract_strided_slice %256 {offsets = [0, 0], sizes = [32, 128], strides = [1, 1]} : vector<32x384xf32> to vector<32x128xf32>
    %259 = arith.addf %257, %258 : vector<32x128xf32>
    %260 = arith.negf %259 : vector<32x128xf32>
    %261 = math.exp %260 : vector<32x128xf32>
    %cst_66 = arith.constant 1.000000e+00 : f32
    %262 = vector.broadcast %cst_66 : f32 to vector<32x128xf32>
    %263 = arith.addf %262, %261 : vector<32x128xf32>
    %264 = arith.divf %262, %263 : vector<32x128xf32>
    %265 = vector.extract_strided_slice %253 {offsets = [0, 128], sizes = [32, 128], strides = [1, 1]} : vector<32x384xf32> to vector<32x128xf32>
    %266 = vector.extract_strided_slice %256 {offsets = [0, 128], sizes = [32, 128], strides = [1, 1]} : vector<32x384xf32> to vector<32x128xf32>
    %267 = arith.addf %265, %266 : vector<32x128xf32>
    %268 = arith.negf %267 : vector<32x128xf32>
    %269 = math.exp %268 : vector<32x128xf32>
    %cst_67 = arith.constant 1.000000e+00 : f32
    %270 = vector.broadcast %cst_67 : f32 to vector<32x128xf32>
    %271 = arith.addf %270, %269 : vector<32x128xf32>
    %272 = arith.divf %270, %271 : vector<32x128xf32>
    %273 = vector.extract_strided_slice %253 {offsets = [0, 256], sizes = [32, 128], strides = [1, 1]} : vector<32x384xf32> to vector<32x128xf32>
    %274 = vector.extract_strided_slice %256 {offsets = [0, 256], sizes = [32, 128], strides = [1, 1]} : vector<32x384xf32> to vector<32x128xf32>
    %275 = arith.mulf %264, %274 : vector<32x128xf32>
    %276 = arith.addf %273, %275 : vector<32x128xf32>
    %277 = math.tanh %276 : vector<32x128xf32>
    %cst_68 = arith.constant 1.000000e+00 : f32
    %278 = vector.broadcast %cst_68 : f32 to vector<32x128xf32>
    %279 = arith.subf %278, %272 : vector<32x128xf32>
    %280 = arith.mulf %279, %277 : vector<32x128xf32>
    %281 = arith.mulf %272, %249 : vector<32x128xf32>
    %282 = arith.addf %280, %281 : vector<32x128xf32>
    %c8_i32 = arith.constant 8 : i32
    %cst_69 = arith.constant dense<0.000000e+00> : vector<32x384xf32>
    %283 = tpu.matmul %282, %3, %cst_69 {dimension_numbers = #tpu.dot_dimension_numbers<[1], [0], [0], [1], [0, 0, 1, 1], [], []>} : vector<32x128xf32>, vector<128x384xf32>, vector<32x384xf32> -> vector<32x384xf32>
    %284 = vector.broadcast %5 : vector<1x384xf32> to vector<32x384xf32>
    %285 = arith.addf %283, %284 : vector<32x384xf32>
    %c0_70 = arith.constant 0 : index
    %c0_71 = arith.constant 0 : index
    %286 = vector.load %arg2[%c0_70, %c0_71] : memref<64x128xf32, #tpu.memory_space<vmem>>, vector<64x128xf32>
    %cst_72 = arith.constant dense<0.000000e+00> : vector<64x384xf32>
    %287 = tpu.matmul %286, %2, %cst_72 {dimension_numbers = #tpu.dot_dimension_numbers<[1], [0], [0], [1], [0, 0, 1, 1], [], []>} : vector<64x128xf32>, vector<128x384xf32>, vector<64x384xf32> -> vector<64x384xf32>
    %288 = vector.broadcast %4 : vector<1x384xf32> to vector<64x384xf32>
    %289 = arith.addf %287, %288 : vector<64x384xf32>
    %290 = vector.extract_strided_slice %289 {offsets = [0, 0], sizes = [32, 384], strides = [1, 1]} : vector<64x384xf32> to vector<32x384xf32>
    %291 = vector.extract_strided_slice %290 {offsets = [0, 0], sizes = [32, 128], strides = [1, 1]} : vector<32x384xf32> to vector<32x128xf32>
    %292 = vector.extract_strided_slice %285 {offsets = [0, 0], sizes = [32, 128], strides = [1, 1]} : vector<32x384xf32> to vector<32x128xf32>
    %293 = arith.addf %291, %292 : vector<32x128xf32>
    %294 = arith.negf %293 : vector<32x128xf32>
    %295 = math.exp %294 : vector<32x128xf32>
    %cst_73 = arith.constant 1.000000e+00 : f32
    %296 = vector.broadcast %cst_73 : f32 to vector<32x128xf32>
    %297 = arith.addf %296, %295 : vector<32x128xf32>
    %298 = arith.divf %296, %297 : vector<32x128xf32>
    %299 = vector.extract_strided_slice %290 {offsets = [0, 128], sizes = [32, 128], strides = [1, 1]} : vector<32x384xf32> to vector<32x128xf32>
    %300 = vector.extract_strided_slice %285 {offsets = [0, 128], sizes = [32, 128], strides = [1, 1]} : vector<32x384xf32> to vector<32x128xf32>
    %301 = arith.addf %299, %300 : vector<32x128xf32>
    %302 = arith.negf %301 : vector<32x128xf32>
    %303 = math.exp %302 : vector<32x128xf32>
    %cst_74 = arith.constant 1.000000e+00 : f32
    %304 = vector.broadcast %cst_74 : f32 to vector<32x128xf32>
    %305 = arith.addf %304, %303 : vector<32x128xf32>
    %306 = arith.divf %304, %305 : vector<32x128xf32>
    %307 = vector.extract_strided_slice %290 {offsets = [0, 256], sizes = [32, 128], strides = [1, 1]} : vector<32x384xf32> to vector<32x128xf32>
    %308 = vector.extract_strided_slice %285 {offsets = [0, 256], sizes = [32, 128], strides = [1, 1]} : vector<32x384xf32> to vector<32x128xf32>
    %309 = arith.mulf %298, %308 : vector<32x128xf32>
    %310 = arith.addf %307, %309 : vector<32x128xf32>
    %311 = math.tanh %310 : vector<32x128xf32>
    %cst_75 = arith.constant 1.000000e+00 : f32
    %312 = vector.broadcast %cst_75 : f32 to vector<32x128xf32>
    %313 = arith.subf %312, %306 : vector<32x128xf32>
    %314 = arith.mulf %313, %311 : vector<32x128xf32>
    %315 = arith.mulf %306, %282 : vector<32x128xf32>
    %316 = arith.addf %314, %315 : vector<32x128xf32>
    %cst_76 = arith.constant dense<0.000000e+00> : vector<32x8xf32>
    %317 = tpu.matmul %316, %6, %cst_76 {dimension_numbers = #tpu.dot_dimension_numbers<[1], [0], [0], [1], [0, 0, 1, 1], [], []>} : vector<32x128xf32>, vector<128x8xf32>, vector<32x8xf32> -> vector<32x8xf32>
    %318 = vector.broadcast %7 : vector<1x8xf32> to vector<32x8xf32>
    %319 = arith.addf %317, %318 : vector<32x8xf32>
    %320 = vector.extract_strided_slice %289 {offsets = [32, 0], sizes = [32, 384], strides = [1, 1]} : vector<64x384xf32> to vector<32x384xf32>
    %321 = vector.extract_strided_slice %320 {offsets = [0, 0], sizes = [32, 128], strides = [1, 1]} : vector<32x384xf32> to vector<32x128xf32>
    %322 = vector.extract_strided_slice %285 {offsets = [0, 0], sizes = [32, 128], strides = [1, 1]} : vector<32x384xf32> to vector<32x128xf32>
    %323 = arith.addf %321, %322 : vector<32x128xf32>
    %324 = arith.negf %323 : vector<32x128xf32>
    %325 = math.exp %324 : vector<32x128xf32>
    %cst_77 = arith.constant 1.000000e+00 : f32
    %326 = vector.broadcast %cst_77 : f32 to vector<32x128xf32>
    %327 = arith.addf %326, %325 : vector<32x128xf32>
    %328 = arith.divf %326, %327 : vector<32x128xf32>
    %329 = vector.extract_strided_slice %320 {offsets = [0, 128], sizes = [32, 128], strides = [1, 1]} : vector<32x384xf32> to vector<32x128xf32>
    %330 = vector.extract_strided_slice %285 {offsets = [0, 128], sizes = [32, 128], strides = [1, 1]} : vector<32x384xf32> to vector<32x128xf32>
    %331 = arith.addf %329, %330 : vector<32x128xf32>
    %332 = arith.negf %331 : vector<32x128xf32>
    %333 = math.exp %332 : vector<32x128xf32>
    %cst_78 = arith.constant 1.000000e+00 : f32
    %334 = vector.broadcast %cst_78 : f32 to vector<32x128xf32>
    %335 = arith.addf %334, %333 : vector<32x128xf32>
    %336 = arith.divf %334, %335 : vector<32x128xf32>
    %337 = vector.extract_strided_slice %320 {offsets = [0, 256], sizes = [32, 128], strides = [1, 1]} : vector<32x384xf32> to vector<32x128xf32>
    %338 = vector.extract_strided_slice %285 {offsets = [0, 256], sizes = [32, 128], strides = [1, 1]} : vector<32x384xf32> to vector<32x128xf32>
    %339 = arith.mulf %328, %338 : vector<32x128xf32>
    %340 = arith.addf %337, %339 : vector<32x128xf32>
    %341 = math.tanh %340 : vector<32x128xf32>
    %cst_79 = arith.constant 1.000000e+00 : f32
    %342 = vector.broadcast %cst_79 : f32 to vector<32x128xf32>
    %343 = arith.subf %342, %336 : vector<32x128xf32>
    %344 = arith.mulf %343, %341 : vector<32x128xf32>
    %345 = arith.mulf %336, %282 : vector<32x128xf32>
    %346 = arith.addf %344, %345 : vector<32x128xf32>
    %cst_80 = arith.constant dense<0.000000e+00> : vector<32x8xf32>
    %347 = tpu.matmul %346, %6, %cst_80 {dimension_numbers = #tpu.dot_dimension_numbers<[1], [0], [0], [1], [0, 0, 1, 1], [], []>} : vector<32x128xf32>, vector<128x8xf32>, vector<32x8xf32> -> vector<32x8xf32>
    %348 = vector.broadcast %7 : vector<1x8xf32> to vector<32x8xf32>
    %349 = arith.addf %347, %348 : vector<32x8xf32>
    %350 = tpu.concatenate %319, %349 in 1 : vector<32x8xf32>, vector<32x8xf32> -> vector<32x16xf32>
    %c0_81 = arith.constant 0 : index
    %c0_82 = arith.constant 0 : index
    %351 = vector.load %arg11[%c0_81, %c0_82] : memref<32x16xf32, #tpu.memory_space<vmem>>, vector<32x16xf32>
    tpu.vector_store %arg11[%c0_81, %c0_82], %350 {strides = array<i32>} : memref<32x16xf32, #tpu.memory_space<vmem>>, vector<32x16xf32>,
    return
  }
  func.func @transform_0(%arg0: i32) -> (i32, i32) {
    %c0_i32 = arith.constant 0 : i32
    %c0_i32_0 = arith.constant 0 : i32
    return %arg0, %c0_i32 : i32, i32
  }
  func.func @transform_1(%arg0: i32) -> (i32, i32) {
    %c0_i32 = arith.constant 0 : i32
    %c0_i32_0 = arith.constant 0 : i32
    %c0_i32_1 = arith.constant 0 : i32
    return %c0_i32, %c0_i32_0 : i32, i32
  }
  func.func @transform_2(%arg0: i32) -> (i32, i32) {
    %c0_i32 = arith.constant 0 : i32
    %c0_i32_0 = arith.constant 0 : i32
    %c0_i32_1 = arith.constant 0 : i32
    return %c0_i32, %c0_i32_0 : i32, i32
  }
  func.func @transform_3(%arg0: i32) -> (i32, i32) {
    %c0_i32 = arith.constant 0 : i32
    %c0_i32_0 = arith.constant 0 : i32
    %c0_i32_1 = arith.constant 0 : i32
    return %c0_i32, %c0_i32_0 : i32, i32
  }
  func.func @transform_4(%arg0: i32) -> (i32, i32) {
    %c0_i32 = arith.constant 0 : i32
    %c0_i32_0 = arith.constant 0 : i32
    %c0_i32_1 = arith.constant 0 : i32
    return %c0_i32, %c0_i32_0 : i32, i32
  }
  func.func @transform_5(%arg0: i32) -> (i32, i32) {
    %c0_i32 = arith.constant 0 : i32
    %c0_i32_0 = arith.constant 0 : i32
    %c0_i32_1 = arith.constant 0 : i32
    return %c0_i32, %c0_i32_0 : i32, i32
  }
  func.func @transform_6(%arg0: i32) -> (i32, i32) {
    %c0_i32 = arith.constant 0 : i32
    %c0_i32_0 = arith.constant 0 : i32
    %c0_i32_1 = arith.constant 0 : i32
    return %c0_i32, %c0_i32_0 : i32, i32
  }
  func.func @transform_7(%arg0: i32) -> (i32, i32) {
    %c0_i32 = arith.constant 0 : i32
    %c0_i32_0 = arith.constant 0 : i32
    %c0_i32_1 = arith.constant 0 : i32
    return %c0_i32, %c0_i32_0 : i32, i32
  }
  func.func @transform_8(%arg0: i32) -> (i32, i32) {
    %c0_i32 = arith.constant 0 : i32
    %c0_i32_0 = arith.constant 0 : i32
    %c0_i32_1 = arith.constant 0 : i32
    return %c0_i32, %c0_i32_0 : i32, i32
  }
  func.func @transform_9(%arg0: i32) -> (i32, i32) {
    %c0_i32 = arith.constant 0 : i32
    %c0_i32_0 = arith.constant 0 : i32
    %c0_i32_1 = arith.constant 0 : i32
    return %c0_i32, %c0_i32_0 : i32, i32
  }
  func.func @transform_10(%arg0: i32) -> (i32, i32) {
    %c0_i32 = arith.constant 0 : i32
    %c0_i32_0 = arith.constant 0 : i32
    return %arg0, %c0_i32 : i32, i32
  }
}

</mosaic_0001>

<llo_original>
// kernel: tpu_custom_call.1
$region0: #{tpu_custom_call.1}
  #allocation0 [shape = 'u32[]', space=smem, size = 0x4, offset = 0x4, fixed_abs, tag = 'smem constant byte address 0x4 - core index']
  #allocation1 [shape = 'u32[144,128]{1,0:T(1,128)}', space=vmem, size = 0x12000, scoped, tag = 'internal scratch']
  #allocation2 [shape = 'f32[256,384]{1,0:T(8,128)}', space=vmem, size = 0x60000, scoped, tag = 'scratch operand']
  %s0 = inlined_call_operand.vmem [shape: f32[512,8], index: 0, kind: input, shape index: {}]
  %s1 = inlined_call_operand.vmem [shape: f32[64,128], index: 1, kind: input, shape index: {}]
  %s2 = inlined_call_operand.vmem [shape: f32[8,128], index: 2, kind: input, shape index: {}]
  %s3 = inlined_call_operand.vmem [shape: f32[1,128], index: 3, kind: input, shape index: {}]
  %s4 = inlined_call_operand.vmem [shape: f32[128,384], index: 4, kind: input, shape index: {}]
  %s5 = inlined_call_operand.hbm [shape: f32[128,384], index: 5, kind: input, shape index: {}]
  %s6 = inlined_call_operand.vmem [shape: f32[1,384], index: 6, kind: input, shape index: {}]
  %s7 = inlined_call_operand.vmem [shape: f32[1,384], index: 7, kind: input, shape index: {}]
  %s8 = inlined_call_operand.vmem [shape: f32[128,8], index: 8, kind: input, shape index: {}]
  %s9 = inlined_call_operand.vmem [shape: f32[1,8], index: 9, kind: input, shape index: {}]
  %s10 = inlined_call_operand.vmem [shape: f32[64,16], index: 10, kind: output, shape index: {}]
  %s11 = sld [smem:[#allocation0]]
  $region77: #{tpu_custom_call.1} parent=0
    _
  %s13 = ssub.s32 1, %s11
  %s14 = scalar_select 0, %s13, %s11
  $region1: #{tpu_custom_call.1} parent=0
    #allocation3 [shape = 'u8[196608]{0}', space=vmem, size = 0x30000, scoped, tag = 'input window, operand 5, single buffered']
    #allocation4 [shape = 's32[2]{0}', space=sflag, size = 0x8, scoped, tag = 'scoped memory for tpu_custom_call.1']
    %15 = vsyncpa [#allocation4], 0
    loop: start=0, step=1, limit=4
    $region2: #{tpu_custom_call.1} parent=1 // loop_pre_header
      _
    $region3: #{tpu_custom_call.1} parent=1 // loop_header
      %s17 = sphi 0, %s21
      %p18 = scmp.ge.s32.totalorder %s17, 4
      %s27 = sphi 0, %s29
      %s30 = sphi 0, %s27
      %s31 = sphi 0, %s30
      %s47 = sphi 0, %s31
      %s51 = sphi 0, %s51
      %s53 = sphi 0, %s51
      %s54 = sphi 0, %s53
      %s68 = sphi 0, %s54
      %s72 = sphi 0, %s72
      %s74 = sphi 0, %s72
      %s75 = sphi 0, %s74
      %s89 = sphi 0, %s75
      %s93 = sphi 0, %s93
      %s95 = sphi 0, %s93
      %s96 = sphi 0, %s95
      %s110 = sphi 0, %s96
      %s114 = sphi 0, %s114
      %s116 = sphi 0, %s114
      %s117 = sphi 0, %s116
      %s131 = sphi 0, %s117
      %s135 = sphi 0, %s135
      %s137 = sphi 0, %s135
      %s138 = sphi 0, %s137
      %s152 = sphi 0, %s138
      %s156 = sphi 0, %s156
      %s158 = sphi 0, %s156
      %s159 = sphi 0, %s158
      %s173 = sphi 0, %s159
      %s177 = sphi 0, %s177
      %s179 = sphi 0, %s177
      %s180 = sphi 0, %s179
      %s194 = sphi 0, %s180
      %s198 = sphi 0, %s198
      %s200 = sphi 0, %s198
      %s201 = sphi 0, %s200
      %s215 = sphi 0, %s201
      %s219 = sphi 0, %s219
      %s221 = sphi 0, %s219
      %s222 = sphi 0, %s221
      %s236 = sphi 0, %s222
      %s242 = sphi 0, %s244
      %s245 = sphi 0, %s242
      %s246 = sphi 0, %s245
      %s262 = sphi 0, %s246
    $region4: #{tpu_custom_call.1} parent=1 // loop_header_branch
      %20 = sbr.rel (%p18) target = $region8
    $region5: #{tpu_custom_call.1} parent=1 // loop_body
      %s22 = ssub.s32 %s17, 1
      %s23 = ssub.s32 %s17, 2
      %s24 = sadd.s32 %s17, 1
      %s25 = ssub.s32 %s17, %s24
      %p26 = scmp.eq.s32.totalorder %s25, 0
      %s28 = sadd.s32 %s27, 1
      %s29 = scalar_select %p26, %s27, %s28
      %p32 = pneg %p26
      %p33 = scmp.eq.s32.totalorder %s17, 1
      %p34 = por %p32, %p33
      %p35 = scmp.ne.s32.totalorder %s27, %s30
      %p36 = scmp.eq.s32.totalorder %s17, 0
      %p37 = por %p35, %p36
      %p38 = scmp.ne.s32.totalorder %s27, %s30
      %p39 = scmp.eq.s32.totalorder %s22, 1
      %p40 = por %p38, %p39
      %p41 = scmp.ne.s32.totalorder %s30, %s31
      %p42 = scmp.eq.s32.totalorder %s22, 0
      %p43 = por %p41, %p42
      %p44 = scmp.ne.s32.totalorder %s30, %s31
      %p45 = scmp.eq.s32.totalorder %s23, 1
      %p46 = por %p44, %p45
      %p48 = scmp.ne.s32.totalorder %s31, %s47
      %p49 = scmp.eq.s32.totalorder %s23, 0
      %p50 = por %p48, %p49
      %s52 = sadd.s32 %s51, 1
      %p55 = scmp.eq.s32.totalorder %s17, 1
      %p56 = scmp.ne.s32.totalorder %s51, %s53
      %p57 = scmp.eq.s32.totalorder %s17, 0
      %p58 = por %p56, %p57
      %p59 = scmp.ne.s32.totalorder %s51, %s53
      %p60 = scmp.eq.s32.totalorder %s22, 1
      %p61 = por %p59, %p60
      %p62 = scmp.ne.s32.totalorder %s53, %s54
      %p63 = scmp.eq.s32.totalorder %s22, 0
      %p64 = por %p62, %p63
      %p65 = scmp.ne.s32.totalorder %s53, %s54
      %p66 = scmp.eq.s32.totalorder %s23, 1
      %p67 = por %p65, %p66
      %p69 = scmp.ne.s32.totalorder %s54, %s68
      %p70 = scmp.eq.s32.totalorder %s23, 0
      %p71 = por %p69, %p70
      %s73 = sadd.s32 %s72, 1
      %p76 = scmp.eq.s32.totalorder %s17, 1
      %p77 = scmp.ne.s32.totalorder %s72, %s74
      %p78 = scmp.eq.s32.totalorder %s17, 0
      %p79 = por %p77, %p78
      %p80 = scmp.ne.s32.totalorder %s72, %s74
      %p81 = scmp.eq.s32.totalorder %s22, 1
      %p82 = por %p80, %p81
      %p83 = scmp.ne.s32.totalorder %s74, %s75
      %p84 = scmp.eq.s32.totalorder %s22, 0
      %p85 = por %p83, %p84
      %p86 = scmp.ne.s32.totalorder %s74, %s75
      %p87 = scmp.eq.s32.totalorder %s23, 1
      %p88 = por %p86, %p87
      %p90 = scmp.ne.s32.totalorder %s75, %s89
      %p91 = scmp.eq.s32.totalorder %s23, 0
      %p92 = por %p90, %p91
      %s94 = sadd.s32 %s93, 1
      %p97 = scmp.eq.s32.totalorder %s17, 1
      %p98 = scmp.ne.s32.totalorder %s93, %s95
      %p99 = scmp.eq.s32.totalorder %s17, 0
      %p100 = por %p98, %p99
      %p101 = scmp.ne.s32.totalorder %s93, %s95
      %p102 = scmp.eq.s32.totalorder %s22, 1
      %p103 = por %p101, %p102
      %p104 = scmp.ne.s32.totalorder %s95, %s96
      %p105 = scmp.eq.s32.totalorder %s22, 0
      %p106 = por %p104, %p105
      %p107 = scmp.ne.s32.totalorder %s95, %s96
      %p108 = scmp.eq.s32.totalorder %s23, 1
      %p109 = por %p107, %p108
      %p111 = scmp.ne.s32.totalorder %s96, %s110
      %p112 = scmp.eq.s32.totalorder %s23, 0
      %p113 = por %p111, %p112
      %s115 = sadd.s32 %s114, 1
      %p118 = scmp.eq.s32.totalorder %s17, 1
      %p119 = scmp.ne.s32.totalorder %s114, %s116
      %p120 = scmp.eq.s32.totalorder %s17, 0
      %p121 = por %p119, %p120
      %p122 = scmp.ne.s32.totalorder %s114, %s116
      %p123 = scmp.eq.s32.totalorder %s22, 1
      %p124 = por %p122, %p123
      %p125 = scmp.ne.s32.totalorder %s116, %s117
      %p126 = scmp.eq.s32.totalorder %s22, 0
      %p127 = por %p125, %p126
      %p128 = scmp.ne.s32.totalorder %s116, %s117
      %p129 = scmp.eq.s32.totalorder %s23, 1
      %p130 = por %p128, %p129
      %p132 = scmp.ne.s32.totalorder %s117, %s131
      %p133 = scmp.eq.s32.totalorder %s23, 0
      %p134 = por %p132, %p133
      %s136 = sadd.s32 %s135, 1
      %p139 = scmp.eq.s32.totalorder %s17, 1
      %p140 = scmp.ne.s32.totalorder %s135, %s137
      %p141 = scmp.eq.s32.totalorder %s17, 0
      %p142 = por %p140, %p141
      %p143 = scmp.ne.s32.totalorder %s135, %s137
      %p144 = scmp.eq.s32.totalorder %s22, 1
      %p145 = por %p143, %p144
      %p146 = scmp.ne.s32.totalorder %s137, %s138
      %p147 = scmp.eq.s32.totalorder %s22, 0
      %p148 = por %p146, %p147
      %p149 = scmp.ne.s32.totalorder %s137, %s138
      %p150 = scmp.eq.s32.totalorder %s23, 1
      %p151 = por %p149, %p150
      %p153 = scmp.ne.s32.totalorder %s138, %s152
      %p154 = scmp.eq.s32.totalorder %s23, 0
      %p155 = por %p153, %p154
      %s157 = sadd.s32 %s156, 1
      %p160 = scmp.eq.s32.totalorder %s17, 1
      %p161 = scmp.ne.s32.totalorder %s156, %s158
      %p162 = scmp.eq.s32.totalorder %s17, 0
      %p163 = por %p161, %p162
      %p164 = scmp.ne.s32.totalorder %s156, %s158
      %p165 = scmp.eq.s32.totalorder %s22, 1
      %p166 = por %p164, %p165
      %p167 = scmp.ne.s32.totalorder %s158, %s159
      %p168 = scmp.eq.s32.totalorder %s22, 0
      %p169 = por %p167, %p168
      %p170 = scmp.ne.s32.totalorder %s158, %s159
      %p171 = scmp.eq.s32.totalorder %s23, 1
      %p172 = por %p170, %p171
      %p174 = scmp.ne.s32.totalorder %s159, %s173
      %p175 = scmp.eq.s32.totalorder %s23, 0
      %p176 = por %p174, %p175
      %s178 = sadd.s32 %s177, 1
      %p181 = scmp.eq.s32.totalorder %s17, 1
      %p182 = scmp.ne.s32.totalorder %s177, %s179
      %p183 = scmp.eq.s32.totalorder %s17, 0
      %p184 = por %p182, %p183
      %p185 = scmp.ne.s32.totalorder %s177, %s179
      %p186 = scmp.eq.s32.totalorder %s22, 1
      %p187 = por %p185, %p186
      %p188 = scmp.ne.s32.totalorder %s179, %s180
      %p189 = scmp.eq.s32.totalorder %s22, 0
      %p190 = por %p188, %p189
      %p191 = scmp.ne.s32.totalorder %s179, %s180
      %p192 = scmp.eq.s32.totalorder %s23, 1
      %p193 = por %p191, %p192
      %p195 = scmp.ne.s32.totalorder %s180, %s194
      %p196 = scmp.eq.s32.totalorder %s23, 0
      %p197 = por %p195, %p196
      %s199 = sadd.s32 %s198, 1
      %p202 = scmp.eq.s32.totalorder %s17, 1
      %p203 = scmp.ne.s32.totalorder %s198, %s200
      %p204 = scmp.eq.s32.totalorder %s17, 0
      %p205 = por %p203, %p204
      %p206 = scmp.ne.s32.totalorder %s198, %s200
      %p207 = scmp.eq.s32.totalorder %s22, 1
      %p208 = por %p206, %p207
      %p209 = scmp.ne.s32.totalorder %s200, %s201
      %p210 = scmp.eq.s32.totalorder %s22, 0
      %p211 = por %p209, %p210
      %p212 = scmp.ne.s32.totalorder %s200, %s201
      %p213 = scmp.eq.s32.totalorder %s23, 1
      %p214 = por %p212, %p213
      %p216 = scmp.ne.s32.totalorder %s201, %s215
      %p217 = scmp.eq.s32.totalorder %s23, 0
      %p218 = por %p216, %p217
      %s220 = sadd.s32 %s219, 1
      %p223 = scmp.eq.s32.totalorder %s17, 1
      %p224 = scmp.ne.s32.totalorder %s219, %s221
      %p225 = scmp.eq.s32.totalorder %s17, 0
      %p226 = por %p224, %p225
      %p227 = scmp.ne.s32.totalorder %s219, %s221
      %p228 = scmp.eq.s32.totalorder %s22, 1
      %p229 = por %p227, %p228
      %p230 = scmp.ne.s32.totalorder %s221, %s222
      %p231 = scmp.eq.s32.totalorder %s22, 0
      %p232 = por %p230, %p231
      %p233 = scmp.ne.s32.totalorder %s221, %s222
      %p234 = scmp.eq.s32.totalorder %s23, 1
      %p235 = por %p233, %p234
      %p237 = scmp.ne.s32.totalorder %s222, %s236
      %p238 = scmp.eq.s32.totalorder %s23, 0
      %p239 = por %p237, %p238
      %s240 = ssub.s32 %s17, %s24
      %p241 = scmp.eq.s32.totalorder %s240, 0
      %s243 = sadd.s32 %s242, 1
      %s244 = scalar_select %p241, %s242, %s243
      %p247 = pneg %p241
      %p248 = scmp.eq.s32.totalorder %s17, 1
      %p249 = por %p247, %p248
      %p250 = scmp.ne.s32.totalorder %s242, %s245
      %p251 = scmp.eq.s32.totalorder %s17, 0
      %p252 = por %p250, %p251
      %p253 = scmp.ne.s32.totalorder %s242, %s245
      %p254 = scmp.eq.s32.totalorder %s22, 1
      %p255 = por %p253, %p254
      %p256 = scmp.ne.s32.totalorder %s245, %s246
      %p257 = scmp.eq.s32.totalorder %s22, 0
      %p258 = por %p256, %p257
      %p259 = scmp.ne.s32.totalorder %s245, %s246
      %p260 = scmp.eq.s32.totalorder %s23, 1
      %p261 = por %p259, %p260
      %p263 = scmp.ne.s32.totalorder %s246, %s262
      %p264 = scmp.eq.s32.totalorder %s23, 0
      %p265 = por %p263, %p264
      %p266 = scmp.le.s32.totalorder 1, %s17
      %p267 = scmp.lt.s32.totalorder %s17, 3
      %p268 = pnand %p266, %p267
      %p269 = pneg %p268
      // Predicated region
      $region9: #{tpu_custom_call.1} parent=5 // pred_check
        _
      $region10: #{tpu_custom_call.1} parent=5 // pred_check_branch
        %271 = sbr.rel (%p268) target = $region12
      $region11: #{tpu_custom_call.1} parent=5 // pred_region
        %s272 = ssub.s32 %s17, 1
        // Predicated region
        $region13: #{tpu_custom_call.1} parent=11 // pred_check
          %p273 = pneg %p64
        $region14: #{tpu_custom_call.1} parent=11 // pred_check_branch
          %275 = sbr.rel (%p273) target = $region16
        $region15: #{tpu_custom_call.1} parent=11 // pred_region
          _
        $region16: #{tpu_custom_call.1} parent=11 // pred_fallthru
          _
        // Predicated region
        $region17: #{tpu_custom_call.1} parent=11 // pred_check
          %p276 = pneg %p85
        $region18: #{tpu_custom_call.1} parent=11 // pred_check_branch
          %278 = sbr.rel (%p276) target = $region20
        $region19: #{tpu_custom_call.1} parent=11 // pred_region
          _
        $region20: #{tpu_custom_call.1} parent=11 // pred_fallthru
          _
        // Predicated region
        $region21: #{tpu_custom_call.1} parent=11 // pred_check
          %p279 = pneg %p106
        $region22: #{tpu_custom_call.1} parent=11 // pred_check_branch
          %281 = sbr.rel (%p279) target = $region24
        $region23: #{tpu_custom_call.1} parent=11 // pred_region
          _
        $region24: #{tpu_custom_call.1} parent=11 // pred_fallthru
          _
        // Predicated region
        $region25: #{tpu_custom_call.1} parent=11 // pred_check
          %p282 = pneg %p127
        $region26: #{tpu_custom_call.1} parent=11 // pred_check_branch
          %284 = sbr.rel (%p282) target = $region28
        $region27: #{tpu_custom_call.1} parent=11 // pred_region
          _
        $region28: #{tpu_custom_call.1} parent=11 // pred_fallthru
          _
        // Predicated region
        $region29: #{tpu_custom_call.1} parent=11 // pred_check
          %p285 = pneg %p148
        $region30: #{tpu_custom_call.1} parent=11 // pred_check_branch
          %287 = sbr.rel (%p285) target = $region32
        $region31: #{tpu_custom_call.1} parent=11 // pred_region
          %s289 = ssub.s32 6144, 6144
          %290 = vsyncadd [#allocation4], %s289
          %s291 = sshll.u32 [#allocation3], 4
          %s292 = int_to_ptr.vmem [resolvable:$true] %s291
          %297 = dma.hbm_to_vmem [thread:$0]  %s5, 6144, %s292, [#allocation4], 384, 384, 24
        $region32: #{tpu_custom_call.1} parent=11 // pred_fallthru
          _
        // Predicated region
        $region33: #{tpu_custom_call.1} parent=11 // pred_check
          %p298 = pneg %p169
        $region34: #{tpu_custom_call.1} parent=11 // pred_check_branch
          %300 = sbr.rel (%p298) target = $region36
        $region35: #{tpu_custom_call.1} parent=11 // pred_region
          _
        $region36: #{tpu_custom_call.1} parent=11 // pred_fallthru
          _
        // Predicated region
        $region37: #{tpu_custom_call.1} parent=11 // pred_check
          %p301 = pneg %p190
        $region38: #{tpu_custom_call.1} parent=11 // pred_check_branch
          %303 = sbr.rel (%p301) target = $region40
        $region39: #{tpu_custom_call.1} parent=11 // pred_region
          _
        $region40: #{tpu_custom_call.1} parent=11 // pred_fallthru
          _
        // Predicated region
        $region41: #{tpu_custom_call.1} parent=11 // pred_check
          %p304 = pneg %p211
        $region42: #{tpu_custom_call.1} parent=11 // pred_check_branch
          %306 = sbr.rel (%p304) target = $region44
        $region43: #{tpu_custom_call.1} parent=11 // pred_region
          _
        $region44: #{tpu_custom_call.1} parent=11 // pred_fallthru
          _
        // Predicated region
        $region45: #{tpu_custom_call.1} parent=11 // pred_check
          %p307 = pneg %p232
        $region46: #{tpu_custom_call.1} parent=11 // pred_check_branch
          %309 = sbr.rel (%p307) target = $region48
        $region47: #{tpu_custom_call.1} parent=11 // pred_region
          _
        $region48: #{tpu_custom_call.1} parent=11 // pred_fallthru
          _
      $region12: #{tpu_custom_call.1} parent=5 // pred_fallthru
        _
      %p310 = scmp.lt.s32.totalorder %s17, 2
      // Predicated region
      $region49: #{tpu_custom_call.1} parent=5 // pred_check
        %p311 = pneg %p310
      $region50: #{tpu_custom_call.1} parent=5 // pred_check_branch
        %313 = sbr.rel (%p311) target = $region52
      $region51: #{tpu_custom_call.1} parent=5 // pred_region
        // Predicated region
        $region53: #{tpu_custom_call.1} parent=51 // pred_check
          %p314 = pneg %p37
        $region54: #{tpu_custom_call.1} parent=51 // pred_check_branch
          %316 = sbr.rel (%p314) target = $region56
        $region55: #{tpu_custom_call.1} parent=51 // pred_region
          %s317 = smul.u32 32, %s17
          %p318 = scmp.lt.s32.totalorder %s317, 63
          %s319 = scalar_select %p318, %s317, 63
          %s320 = smul.addr %s319, 8
          %s321 = scalar_lea.vmem %s0, %s320
          %s322 = smul.u32 32, %s17
        $region56: #{tpu_custom_call.1} parent=51 // pred_fallthru
          _
      $region52: #{tpu_custom_call.1} parent=5 // pred_fallthru
        _
      %p323 = scmp.le.s32.totalorder 1, %s17
      %p324 = scmp.lt.s32.totalorder %s17, 3
      %p325 = pnand %p323, %p324
      %p326 = pneg %p325
      // Predicated region
      $region57: #{tpu_custom_call.1} parent=5 // pred_check
        _
      $region58: #{tpu_custom_call.1} parent=5 // pred_check_branch
        %328 = sbr.rel (%p325) target = $region60
      $region59: #{tpu_custom_call.1} parent=5 // pred_region
        %s329 = ssub.s32 %s17, 1
        // Predicated region
        $region61: #{tpu_custom_call.1} parent=59 // pred_check
          %p330 = pneg %p148
        $region62: #{tpu_custom_call.1} parent=59 // pred_check_branch
          %332 = sbr.rel (%p330) target = $region64
        $region63: #{tpu_custom_call.1} parent=59 // pred_region
          %333 = dma.done [#allocation4], 6144
        $region64: #{tpu_custom_call.1} parent=59 // pred_fallthru
          _
        %s334 = smul.u32 32, %s22
        %p335 = scmp.lt.s32.totalorder %s334, 63
        %s336 = scalar_select %p335, %s334, 63
        %s337 = smul.addr %s336, 8
        %s338 = scalar_lea.vmem %s0, %s337
        %p339 = pneg %p43
        %p340 = pneg %p40
        %p341 = pneg %p64
        %p342 = pneg %p61
        %p343 = pneg %p85
        %p344 = pneg %p82
        %p345 = pneg %p106
        %p346 = pneg %p103
        %p347 = pneg %p127
        %p348 = pneg %p124
        %p349 = pneg %p148
        %p350 = pneg %p145
        %p351 = pneg %p169
        %p352 = pneg %p166
        %p353 = pneg %p190
        %p354 = pneg %p187
        %p355 = pneg %p211
        %p356 = pneg %p208
        %p357 = pneg %p232
        %p358 = pneg %p229
        %p359 = pneg %p258
        %p360 = pneg %p255
        %s361 = smul.u32 4, %s22
        %p362 = scmp.lt.s32.totalorder %s361, 7
        %s363 = scalar_select %p362, %s361, 7
        %s364 = smul.addr %s363, 8
        %s365 = scalar_lea.vmem %s10, %s364
        %s366 = smul.u32 32, %s22
        %p367 = scmp.lt.s32.totalorder %s366, 63
        %s368 = scalar_select %p367, %s366, 63
        %s369 = smul.addr %s368, 8
        %s370 = scalar_lea.vmem %s0, %s369
        %s371 = smul.u32 32, %s22
        %s372 = smul.u32 4, %s22
        %p373 = scmp.lt.s32.totalorder %s372, 7
        %s374 = scalar_select %p373, %s372, 7
        %s375 = smul.addr %s374, 8
        %s376 = scalar_lea.vmem %s10, %s375
        %s377 = smul.u32 4, %s22
        %v378 = vld [vmem:[%s2] sm:$0xff]
        %v379 = vld [vmem:[%s3] sm:$0x1]
        %v380 = vld [vmem:[%s4] sm:$0xff]
        %v381 = vld [vmem:[%s4 + $0x8] sm:$0xff]
        %v382 = vld [vmem:[%s4 + $0x10] sm:$0xff]
        %v383 = vld [vmem:[%s4 + $0x18] sm:$0xff]
        %v384 = vld [vmem:[%s4 + $0x20] sm:$0xff]
        %v385 = vld [vmem:[%s4 + $0x28] sm:$0xff]
        %v386 = vld [vmem:[%s4 + $0x30] sm:$0xff]
        %v387 = vld [vmem:[%s4 + $0x38] sm:$0xff]
        %v388 = vld [vmem:[%s4 + $0x40] sm:$0xff]
        %v389 = vld [vmem:[%s4 + $0x48] sm:$0xff]
        %v390 = vld [vmem:[%s4 + $0x50] sm:$0xff]
        %v391 = vld [vmem:[%s4 + $0x58] sm:$0xff]
        %v392 = vld [vmem:[%s4 + $0x60] sm:$0xff]
        %v393 = vld [vmem:[%s4 + $0x68] sm:$0xff]
        %v394 = vld [vmem:[%s4 + $0x70] sm:$0xff]
        %v395 = vld [vmem:[%s4 + $0x78] sm:$0xff]
        %v396 = vld [vmem:[%s4 + $0x80] sm:$0xff]
        %v397 = vld [vmem:[%s4 + $0x88] sm:$0xff]
        %v398 = vld [vmem:[%s4 + $0x90] sm:$0xff]
        %v399 = vld [vmem:[%s4 + $0x98] sm:$0xff]
        %v400 = vld [vmem:[%s4 + $0xa0] sm:$0xff]
        %v401 = vld [vmem:[%s4 + $0xa8] sm:$0xff]
        %v402 = vld [vmem:[%s4 + $0xb0] sm:$0xff]
        %v403 = vld [vmem:[%s4 + $0xb8] sm:$0xff]
        %v404 = vld [vmem:[%s4 + $0xc0] sm:$0xff]
        %v405 = vld [vmem:[%s4 + $0xc8] sm:$0xff]
        %v406 = vld [vmem:[%s4 + $0xd0] sm:$0xff]
        %v407 = vld [vmem:[%s4 + $0xd8] sm:$0xff]
        %v408 = vld [vmem:[%s4 + $0xe0] sm:$0xff]
        %v409 = vld [vmem:[%s4 + $0xe8] sm:$0xff]
        %v410 = vld [vmem:[%s4 + $0xf0] sm:$0xff]
        %v411 = vld [vmem:[%s4 + $0xf8] sm:$0xff]
        %v412 = vld [vmem:[%s4 + $0x100] sm:$0xff]
        %v413 = vld [vmem:[%s4 + $0x108] sm:$0xff]
        %v414 = vld [vmem:[%s4 + $0x110] sm:$0xff]
        %v415 = vld [vmem:[%s4 + $0x118] sm:$0xff]
        %v416 = vld [vmem:[%s4 + $0x120] sm:$0xff]
        %v417 = vld [vmem:[%s4 + $0x128] sm:$0xff]
        %v418 = vld [vmem:[%s4 + $0x130] sm:$0xff]
        %v419 = vld [vmem:[%s4 + $0x138] sm:$0xff]
        %v420 = vld [vmem:[%s4 + $0x140] sm:$0xff]
        %v421 = vld [vmem:[%s4 + $0x148] sm:$0xff]
        %v422 = vld [vmem:[%s4 + $0x150] sm:$0xff]
        %v423 = vld [vmem:[%s4 + $0x158] sm:$0xff]
        %v424 = vld [vmem:[%s4 + $0x160] sm:$0xff]
        %v425 = vld [vmem:[%s4 + $0x168] sm:$0xff]
        %v426 = vld [vmem:[%s4 + $0x170] sm:$0xff]
        %v427 = vld [vmem:[%s4 + $0x178] sm:$0xff]
        %v428 = vld [vmem:[#allocation3] sm:$0xff]
        %v429 = vld [vmem:[#allocation3 + $0x8] sm:$0xff]
        %v430 = vld [vmem:[#allocation3 + $0x10] sm:$0xff]
        %v431 = vld [vmem:[#allocation3 + $0x18] sm:$0xff]
        %v432 = vld [vmem:[#allocation3 + $0x20] sm:$0xff]
        %v433 = vld [vmem:[#allocation3 + $0x28] sm:$0xff]
        %v434 = vld [vmem:[#allocation3 + $0x30] sm:$0xff]
        %v435 = vld [vmem:[#allocation3 + $0x38] sm:$0xff]
        %v436 = vld [vmem:[#allocation3 + $0x40] sm:$0xff]
        %v437 = vld [vmem:[#allocation3 + $0x48] sm:$0xff]
        %v438 = vld [vmem:[#allocation3 + $0x50] sm:$0xff]
        %v439 = vld [vmem:[#allocation3 + $0x58] sm:$0xff]
        %v440 = vld [vmem:[#allocation3 + $0x60] sm:$0xff]
        %v441 = vld [vmem:[#allocation3 + $0x68] sm:$0xff]
        %v442 = vld [vmem:[#allocation3 + $0x70] sm:$0xff]
        %v443 = vld [vmem:[#allocation3 + $0x78] sm:$0xff]
        %v444 = vld [vmem:[#allocation3 + $0x80] sm:$0xff]
        %v445 = vld [vmem:[#allocation3 + $0x88] sm:$0xff]
        %v446 = vld [vmem:[#allocation3 + $0x90] sm:$0xff]
        %v447 = vld [vmem:[#allocation3 + $0x98] sm:$0xff]
        %v448 = vld [vmem:[#allocation3 + $0xa0] sm:$0xff]
        %v449 = vld [vmem:[#allocation3 + $0xa8] sm:$0xff]
        %v450 = vld [vmem:[#allocation3 + $0xb0] sm:$0xff]
        %v451 = vld [vmem:[#allocation3 + $0xb8] sm:$0xff]
        %v452 = vld [vmem:[#allocation3 + $0xc0] sm:$0xff]
        %v453 = vld [vmem:[#allocation3 + $0xc8] sm:$0xff]
        %v454 = vld [vmem:[#allocation3 + $0xd0] sm:$0xff]
        %v455 = vld [vmem:[#allocation3 + $0xd8] sm:$0xff]
        %v456 = vld [vmem:[#allocation3 + $0xe0] sm:$0xff]
        %v457 = vld [vmem:[#allocation3 + $0xe8] sm:$0xff]
        %v458 = vld [vmem:[#allocation3 + $0xf0] sm:$0xff]
        %v459 = vld [vmem:[#allocation3 + $0xf8] sm:$0xff]
        %v460 = vld [vmem:[#allocation3 + $0x100] sm:$0xff]
        %v461 = vld [vmem:[#allocation3 + $0x108] sm:$0xff]
        %v462 = vld [vmem:[#allocation3 + $0x110] sm:$0xff]
        %v463 = vld [vmem:[#allocation3 + $0x118] sm:$0xff]
        %v464 = vld [vmem:[#allocation3 + $0x120] sm:$0xff]
        %v465 = vld [vmem:[#allocation3 + $0x128] sm:$0xff]
        %v466 = vld [vmem:[#allocation3 + $0x130] sm:$0xff]
        %v467 = vld [vmem:[#allocation3 + $0x138] sm:$0xff]
        %v468 = vld [vmem:[#allocation3 + $0x140] sm:$0xff]
        %v469 = vld [vmem:[#allocation3 + $0x148] sm:$0xff]
        %v470 = vld [vmem:[#allocation3 + $0x150] sm:$0xff]
        %v471 = vld [vmem:[#allocation3 + $0x158] sm:$0xff]
        %v472 = vld [vmem:[#allocation3 + $0x160] sm:$0xff]
        %v473 = vld [vmem:[#allocation3 + $0x168] sm:$0xff]
        %v474 = vld [vmem:[#allocation3 + $0x170] sm:$0xff]
        %v475 = vld [vmem:[#allocation3 + $0x178] sm:$0xff]
        %v476 = vld [vmem:[%s6] sm:$0x7]
        %v477 = vld [vmem:[%s7] sm:$0x7]
        %v478 = vld [vmem:[%s8] sm:$0xff]
        %v479 = vld [vmem:[%s8 + $0x8] sm:$0xff]
        %v480 = vld [vmem:[%s8 + $0x10] sm:$0xff]
        %v481 = vld [vmem:[%s8 + $0x18] sm:$0xff]
        %v482 = vld [vmem:[%s8 + $0x20] sm:$0xff]
        %v483 = vld [vmem:[%s8 + $0x28] sm:$0xff]
        %v484 = vld [vmem:[%s8 + $0x30] sm:$0xff]
        %v485 = vld [vmem:[%s8 + $0x38] sm:$0xff]
        %v486 = vld [vmem:[%s8 + $0x40] sm:$0xff]
        %v487 = vld [vmem:[%s8 + $0x48] sm:$0xff]
        %v488 = vld [vmem:[%s8 + $0x50] sm:$0xff]
        %v489 = vld [vmem:[%s8 + $0x58] sm:$0xff]
        %v490 = vld [vmem:[%s8 + $0x60] sm:$0xff]
        %v491 = vld [vmem:[%s8 + $0x68] sm:$0xff]
        %v492 = vld [vmem:[%s8 + $0x70] sm:$0xff]
        %v493 = vld [vmem:[%s8 + $0x78] sm:$0xff]
        %v494 = vld [vmem:[%s9] sm:$0x1]
        %v495 = vld [vmem:[%s370] sm:$0xff]
        %v496 = vld [vmem:[%s370 + $0x8] sm:$0xff]
        %v497 = vld [vmem:[%s370 + $0x10] sm:$0xff]
        %v498 = vld [vmem:[%s370 + $0x18] sm:$0xff]
        %v499 = vld [vmem:[%s370 + $0x20] sm:$0xff]
        %v500 = vld [vmem:[%s370 + $0x28] sm:$0xff]
        %v501 = vld [vmem:[%s370 + $0x30] sm:$0xff]
        %v502 = vld [vmem:[%s370 + $0x38] sm:$0xff]
        %v503 = vld [vmem:[%s370 + $0x40] sm:$0xff]
        %v504 = vld [vmem:[%s370 + $0x48] sm:$0xff]
        %v505 = vld [vmem:[%s370 + $0x50] sm:$0xff]
        %v506 = vld [vmem:[%s370 + $0x58] sm:$0xff]
        %v507 = vld [vmem:[%s370 + $0x60] sm:$0xff]
        %v508 = vld [vmem:[%s370 + $0x68] sm:$0xff]
        %v509 = vld [vmem:[%s370 + $0x70] sm:$0xff]
        %v510 = vld [vmem:[%s370 + $0x78] sm:$0xff]
        %v511 = vld [vmem:[%s370 + $0x80] sm:$0xff]
        %v512 = vld [vmem:[%s370 + $0x88] sm:$0xff]
        %v513 = vld [vmem:[%s370 + $0x90] sm:$0xff]
        %v514 = vld [vmem:[%s370 + $0x98] sm:$0xff]
        %v515 = vld [vmem:[%s370 + $0xa0] sm:$0xff]
        %v516 = vld [vmem:[%s370 + $0xa8] sm:$0xff]
        %v517 = vld [vmem:[%s370 + $0xb0] sm:$0xff]
        %v518 = vld [vmem:[%s370 + $0xb8] sm:$0xff]
        %v519 = vld [vmem:[%s370 + $0xc0] sm:$0xff]
        %v520 = vld [vmem:[%s370 + $0xc8] sm:$0xff]
        %v521 = vld [vmem:[%s370 + $0xd0] sm:$0xff]
        %v522 = vld [vmem:[%s370 + $0xd8] sm:$0xff]
        %v523 = vld [vmem:[%s370 + $0xe0] sm:$0xff]
        %v524 = vld [vmem:[%s370 + $0xe8] sm:$0xff]
        %v525 = vld [vmem:[%s370 + $0xf0] sm:$0xff]
        %v526 = vld [vmem:[%s370 + $0xf8] sm:$0xff]
        %v528 = vlaneseq
        %v529 = vshrl.u32 %v528, 7
        %v530 = vsub.s32 0, %v529
        %v531 = vrot.slane %v379, %v530
        %vm533 = vcmask 64512
        %v535 = vsel %vm533, %v495, 0
        %v538 = vsel %vm533, %v496, 0
        %v541 = vsel %vm533, %v497, 0
        %v544 = vsel %vm533, %v498, 0
        %v547 = vsel %vm533, %v499, 0
        %v550 = vsel %vm533, %v500, 0
        %v553 = vsel %vm533, %v501, 0
        %v556 = vsel %vm533, %v502, 0
        %v559 = vsel %vm533, %v503, 0
        %v562 = vsel %vm533, %v504, 0
        %v565 = vsel %vm533, %v505, 0
        %v568 = vsel %vm533, %v506, 0
        %v571 = vsel %vm533, %v507, 0
        %v574 = vsel %vm533, %v508, 0
        %v577 = vsel %vm533, %v509, 0
        %v580 = vsel %vm533, %v510, 0
        %v583 = vsel %vm533, %v511, 0
        %v586 = vsel %vm533, %v512, 0
        %v589 = vsel %vm533, %v513, 0
        %v592 = vsel %vm533, %v514, 0
        %v595 = vsel %vm533, %v515, 0
        %v598 = vsel %vm533, %v516, 0
        %v601 = vsel %vm533, %v517, 0
        %v604 = vsel %vm533, %v518, 0
        %v607 = vsel %vm533, %v519, 0
        %v610 = vsel %vm533, %v520, 0
        %v613 = vsel %vm533, %v521, 0
        %v616 = vsel %vm533, %v522, 0
        %v619 = vsel %vm533, %v523, 0
        %v622 = vsel %vm533, %v524, 0
        %v625 = vsel %vm533, %v525, 0
        %v628 = vsel %vm533, %v526, 0
        %630 = vmatprep.subr.mxu0 0.0
        %631 = vmatpush1.msra.mxu0 0.0
        %632 = vmatprep.subr.mxu0 0.0
        %633 = vmatpush1.msra.mxu0 0.0
        %634 = vmatprep.subr.mxu0 0.0
        %635 = vmatpush1.msra.mxu0 0.0
        %636 = vmatprep.subr.mxu0 0.0
        %637 = vmatpush1.msra.mxu0 0.0
        %638 = vmatprep.subr.mxu0 0.0
        %639 = vmatpush1.msra.mxu0 0.0
        %640 = vmatprep.subr.mxu0 0.0
        %641 = vmatpush1.msra.mxu0 0.0
        %642 = vmatprep.subr.mxu0 0.0
        %643 = vmatpush1.msra.mxu0 0.0
        %644 = vmatprep.subr.mxu0 0.0
        %645 = vmatpush1.msra.mxu0 0.0
        %646 = vmatprep.subr.mxu0 0.0
        %647 = vmatpush1.msra.mxu0 0.0
        %648 = vmatprep.subr.mxu0 0.0
        %649 = vmatpush1.msra.mxu0 0.0
        %650 = vmatprep.subr.mxu0 0.0
        %651 = vmatpush1.msra.mxu0 0.0
        %652 = vmatprep.subr.mxu0 0.0
        %653 = vmatpush1.msra.mxu0 0.0
        %654 = vmatprep.subr.mxu0 0.0
        %655 = vmatpush1.msra.mxu0 0.0
        %656 = vmatprep.subr.mxu0 0.0
        %657 = vmatpush1.msra.mxu0 0.0
        %658 = vmatprep.subr.mxu0 0.0
        %659 = vmatpush1.msra.mxu0 0.0
        %660 = vmatprep.subr.mxu0 0.0
        %661 = vmatpush1.msra.mxu0 %v378
        %662 = vmatprep.subr.mxu0 0.0
        %663 = vmatpush2.msra.mxu0 0.0
        %664 = vmatprep.subr.mxu0 0.0
        %665 = vmatpush2.msra.mxu0 0.0
        %666 = vmatprep.subr.mxu0 0.0
        %667 = vmatpush2.msra.mxu0 0.0
        %668 = vmatprep.subr.mxu0 0.0
        %669 = vmatpush2.msra.mxu0 0.0
        %670 = vmatprep.subr.mxu0 0.0
        %671 = vmatpush2.msra.mxu0 0.0
        %672 = vmatprep.subr.mxu0 0.0
        %673 = vmatpush2.msra.mxu0 0.0
        %674 = vmatprep.subr.mxu0 0.0
        %675 = vmatpush2.msra.mxu0 0.0
        %676 = vmatprep.subr.mxu0 0.0
        %677 = vmatpush2.msra.mxu0 0.0
        %678 = vmatprep.subr.mxu0 0.0
        %679 = vmatpush2.msra.mxu0 0.0
        %680 = vmatprep.subr.mxu0 0.0
        %681 = vmatpush2.msra.mxu0 0.0
        %682 = vmatprep.subr.mxu0 0.0
        %683 = vmatpush2.msra.mxu0 0.0
        %684 = vmatprep.subr.mxu0 0.0
        %685 = vmatpush2.msra.mxu0 0.0
        %686 = vmatprep.subr.mxu0 0.0
        %687 = vmatpush2.msra.mxu0 0.0
        %688 = vmatprep.subr.mxu0 0.0
        %689 = vmatpush2.msra.mxu0 0.0
        %690 = vmatprep.subr.mxu0 0.0
        %691 = vmatpush2.msra.mxu0 0.0
        %692 = vmatprep.subr.mxu0 0.0
        %693 = vmatpush2.msra.mxu0 0.0
        %694 = vmatprep.mubr.f32.mxu0 0.0
        %695 = vmatmul.mubr.f32.gmra.mxu0 %v535
        %v696 = vpop.f32.mrf.mxu0
        %v697 = vadd.f32 %v531, %v696
        %v698 = vpop.f32.mrf.mxu0
        %699 = vmatprep.mubr.f32.mxu0 0.0
        %700 = vmatmul.mubr.f32.gmra.mxu0 %v538
        %v701 = vpop.f32.mrf.mxu0
        %v702 = vadd.f32 %v531, %v701
        %v703 = vpop.f32.mrf.mxu0
        %704 = vmatprep.mubr.f32.mxu0 0.0
        %705 = vmatmul.mubr.f32.gmra.mxu0 %v541
        %v706 = vpop.f32.mrf.mxu0
        %v707 = vadd.f32 %v531, %v706
        %v708 = vpop.f32.mrf.mxu0
        %709 = vmatprep.mubr.f32.mxu0 0.0
        %710 = vmatmul.mubr.f32.gmra.mxu0 %v544
        %v711 = vpop.f32.mrf.mxu0
        %v712 = vadd.f32 %v531, %v711
        %v713 = vpop.f32.mrf.mxu0
        %714 = vmatprep.mubr.f32.mxu0 0.0
        %715 = vmatmul.mubr.f32.gmra.mxu0 %v547
        %v716 = vpop.f32.mrf.mxu0
        %v717 = vadd.f32 %v531, %v716
        %v718 = vpop.f32.mrf.mxu0
        %719 = vmatprep.mubr.f32.mxu0 0.0
        %720 = vmatmul.mubr.f32.gmra.mxu0 %v550
        %v721 = vpop.f32.mrf.mxu0
        %v722 = vadd.f32 %v531, %v721
        %v723 = vpop.f32.mrf.mxu0
        %724 = vmatprep.mubr.f32.mxu0 0.0
        %725 = vmatmul.mubr.f32.gmra.mxu0 %v553
        %v726 = vpop.f32.mrf.mxu0
        %v727 = vadd.f32 %v531, %v726
        %v728 = vpop.f32.mrf.mxu0
        %729 = vmatprep.mubr.f32.mxu0 0.0
        %730 = vmatmul.mubr.f32.gmra.mxu0 %v556
        %v731 = vpop.f32.mrf.mxu0
        %v732 = vadd.f32 %v531, %v731
        %v733 = vpop.f32.mrf.mxu0
        %734 = vmatprep.mubr.f32.mxu0 0.0
        %735 = vmatmul.mubr.f32.gmra.mxu0 %v559
        %v736 = vpop.f32.mrf.mxu0
        %v737 = vadd.f32 %v531, %v736
        %v738 = vpop.f32.mrf.mxu0
        %739 = vmatprep.mubr.f32.mxu0 0.0
        %740 = vmatmul.mubr.f32.gmra.mxu0 %v562
        %v741 = vpop.f32.mrf.mxu0
        %v742 = vadd.f32 %v531, %v741
        %v743 = vpop.f32.mrf.mxu0
        %744 = vmatprep.mubr.f32.mxu0 0.0
        %745 = vmatmul.mubr.f32.gmra.mxu0 %v565
        %v746 = vpop.f32.mrf.mxu0
        %v747 = vadd.f32 %v531, %v746
        %v748 = vpop.f32.mrf.mxu0
        %749 = vmatprep.mubr.f32.mxu0 0.0
        %750 = vmatmul.mubr.f32.gmra.mxu0 %v568
        %v751 = vpop.f32.mrf.mxu0
        %v752 = vadd.f32 %v531, %v751
        %v753 = vpop.f32.mrf.mxu0
        %754 = vmatprep.mubr.f32.mxu0 0.0
        %755 = vmatmul.mubr.f32.gmra.mxu0 %v571
        %v756 = vpop.f32.mrf.mxu0
        %v757 = vadd.f32 %v531, %v756
        %v758 = vpop.f32.mrf.mxu0
        %759 = vmatprep.mubr.f32.mxu0 0.0
        %760 = vmatmul.mubr.f32.gmra.mxu0 %v574
        %v761 = vpop.f32.mrf.mxu0
        %v762 = vadd.f32 %v531, %v761
        %v763 = vpop.f32.mrf.mxu0
        %764 = vmatprep.mubr.f32.mxu0 0.0
        %765 = vmatmul.mubr.f32.gmra.mxu0 %v577
        %v766 = vpop.f32.mrf.mxu0
        %v767 = vadd.f32 %v531, %v766
        %v768 = vpop.f32.mrf.mxu0
        %769 = vmatprep.mubr.f32.mxu0 0.0
        %770 = vmatmul.mubr.f32.gmra.mxu0 %v580
        %v771 = vpop.f32.mrf.mxu0
        %v772 = vadd.f32 %v531, %v771
        %v773 = vpop.f32.mrf.mxu0
        %774 = vmatprep.mubr.f32.mxu0 0.0
        %775 = vmatmul.mubr.f32.gmra.mxu0 %v583
        %v776 = vpop.f32.mrf.mxu0
        %v777 = vadd.f32 %v531, %v776
        %v778 = vpop.f32.mrf.mxu0
        %779 = vmatprep.mubr.f32.mxu0 0.0
        %780 = vmatmul.mubr.f32.gmra.mxu0 %v586
        %v781 = vpop.f32.mrf.mxu0
        %v782 = vadd.f32 %v531, %v781
        %v783 = vpop.f32.mrf.mxu0
        %784 = vmatprep.mubr.f32.mxu0 0.0
        %785 = vmatmul.mubr.f32.gmra.mxu0 %v589
        %v786 = vpop.f32.mrf.mxu0
        %v787 = vadd.f32 %v531, %v786
        %v788 = vpop.f32.mrf.mxu0
        %789 = vmatprep.mubr.f32.mxu0 0.0
        %790 = vmatmul.mubr.f32.gmra.mxu0 %v592
        %v791 = vpop.f32.mrf.mxu0
        %v792 = vadd.f32 %v531, %v791
        %v793 = vpop.f32.mrf.mxu0
        %794 = vmatprep.mubr.f32.mxu0 0.0
        %795 = vmatmul.mubr.f32.gmra.mxu0 %v595
        %v796 = vpop.f32.mrf.mxu0
        %v797 = vadd.f32 %v531, %v796
        %v798 = vpop.f32.mrf.mxu0
        %799 = vmatprep.mubr.f32.mxu0 0.0
        %800 = vmatmul.mubr.f32.gmra.mxu0 %v598
        %v801 = vpop.f32.mrf.mxu0
        %v802 = vadd.f32 %v531, %v801
        %v803 = vpop.f32.mrf.mxu0
        %804 = vmatprep.mubr.f32.mxu0 0.0
        %805 = vmatmul.mubr.f32.gmra.mxu0 %v601
        %v806 = vpop.f32.mrf.mxu0
        %v807 = vadd.f32 %v531, %v806
        %v808 = vpop.f32.mrf.mxu0
        %809 = vmatprep.mubr.f32.mxu0 0.0
        %810 = vmatmul.mubr.f32.gmra.mxu0 %v604
        %v811 = vpop.f32.mrf.mxu0
        %v812 = vadd.f32 %v531, %v811
        %v813 = vpop.f32.mrf.mxu0
        %814 = vmatprep.mubr.f32.mxu0 0.0
        %815 = vmatmul.mubr.f32.gmra.mxu0 %v607
        %v816 = vpop.f32.mrf.mxu0
        %v817 = vadd.f32 %v531, %v816
        %v818 = vpop.f32.mrf.mxu0
        %819 = vmatprep.mubr.f32.mxu0 0.0
        %820 = vmatmul.mubr.f32.gmra.mxu0 %v610
        %v821 = vpop.f32.mrf.mxu0
        %v822 = vadd.f32 %v531, %v821
        %v823 = vpop.f32.mrf.mxu0
        %824 = vmatprep.mubr.f32.mxu0 0.0
        %825 = vmatmul.mubr.f32.gmra.mxu0 %v613
        %v826 = vpop.f32.mrf.mxu0
        %v827 = vadd.f32 %v531, %v826
        %v828 = vpop.f32.mrf.mxu0
        %829 = vmatprep.mubr.f32.mxu0 0.0
        %830 = vmatmul.mubr.f32.gmra.mxu0 %v616
        %v831 = vpop.f32.mrf.mxu0
        %v832 = vadd.f32 %v531, %v831
        %v833 = vpop.f32.mrf.mxu0
        %834 = vmatprep.mubr.f32.mxu0 0.0
        %835 = vmatmul.mubr.f32.gmra.mxu0 %v619
        %v836 = vpop.f32.mrf.mxu0
        %v837 = vadd.f32 %v531, %v836
        %v838 = vpop.f32.mrf.mxu0
        %839 = vmatprep.mubr.f32.mxu0 0.0
        %840 = vmatmul.mubr.f32.gmra.mxu0 %v622
        %v841 = vpop.f32.mrf.mxu0
        %v842 = vadd.f32 %v531, %v841
        %v843 = vpop.f32.mrf.mxu0
        %844 = vmatprep.mubr.f32.mxu0 0.0
        %845 = vmatmul.mubr.f32.gmra.mxu0 %v625
        %v846 = vpop.f32.mrf.mxu0
        %v847 = vadd.f32 %v531, %v846
        %v848 = vpop.f32.mrf.mxu0
        %849 = vmatprep.mubr.f32.mxu0 0.0
        %850 = vmatmul.mubr.f32.gmra.mxu0 %v628
        %v851 = vpop.f32.mrf.mxu0
        %v852 = vadd.f32 %v531, %v851
        %v853 = vpop.f32.mrf.mxu0
        %854 = vdwg.mxu0
        %v855 = vmax.f32 %v697, 0.0
        %v856 = vmax.f32 %v702, 0.0
        %v857 = vmax.f32 %v707, 0.0
        %v858 = vmax.f32 %v712, 0.0
        %v859 = vmax.f32 %v717, 0.0
        %v860 = vmax.f32 %v722, 0.0
        %v861 = vmax.f32 %v727, 0.0
        %v862 = vmax.f32 %v732, 0.0
        %v863 = vmax.f32 %v737, 0.0
        %v864 = vmax.f32 %v742, 0.0
        %v865 = vmax.f32 %v747, 0.0
        %v866 = vmax.f32 %v752, 0.0
        %v867 = vmax.f32 %v757, 0.0
        %v868 = vmax.f32 %v762, 0.0
        %v869 = vmax.f32 %v767, 0.0
        %v870 = vmax.f32 %v772, 0.0
        %v871 = vmax.f32 %v777, 0.0
        %v872 = vmax.f32 %v782, 0.0
        %v873 = vmax.f32 %v787, 0.0
        %v874 = vmax.f32 %v792, 0.0
        %v875 = vmax.f32 %v797, 0.0
        %v876 = vmax.f32 %v802, 0.0
        %v877 = vmax.f32 %v807, 0.0
        %v878 = vmax.f32 %v812, 0.0
        %v879 = vmax.f32 %v817, 0.0
        %v880 = vmax.f32 %v822, 0.0
        %v881 = vmax.f32 %v827, 0.0
        %v882 = vmax.f32 %v832, 0.0
        %v883 = vmax.f32 %v837, 0.0
        %v884 = vmax.f32 %v842, 0.0
        %v885 = vmax.f32 %v847, 0.0
        %v886 = vmax.f32 %v852, 0.0
        %v888 = vlaneseq
        %v889 = vshrl.u32 %v888, 7
        %v890 = vsub.s32 0, %v889
        %v891 = vrot.slane %v476, %v890
        %v892 = vlaneseq
        %v893 = vshrl.u32 %v892, 7
        %v894 = vsub.s32 1, %v893
        %v895 = vrot.slane %v476, %v894
        %v896 = vlaneseq
        %v897 = vshrl.u32 %v896, 7
        %v898 = vsub.s32 2, %v897
        %v899 = vrot.slane %v476, %v898
        %903 = vmatprep.subr.mxu0 %v426
        %904 = vmatpush1.msra.mxu0 %v425
        %905 = vmatprep.subr.mxu0 %v423
        %906 = vmatpush1.msra.mxu0 %v422
        %907 = vmatprep.subr.mxu0 %v420
        %908 = vmatpush1.msra.mxu0 %v419
        %909 = vmatprep.subr.mxu0 %v417
        %910 = vmatpush1.msra.mxu0 %v416
        %911 = vmatprep.subr.mxu0 %v414
        %912 = vmatpush1.msra.mxu0 %v413
        %913 = vmatprep.subr.mxu0 %v411
        %914 = vmatpush1.msra.mxu0 %v410
        %915 = vmatprep.subr.mxu0 %v408
        %916 = vmatpush1.msra.mxu0 %v407
        %917 = vmatprep.subr.mxu0 %v405
        %918 = vmatpush1.msra.mxu0 %v404
        %919 = vmatprep.subr.mxu0 %v402
        %920 = vmatpush1.msra.mxu0 %v401
        %921 = vmatprep.subr.mxu0 %v399
        %922 = vmatpush1.msra.mxu0 %v398
        %923 = vmatprep.subr.mxu0 %v396
        %924 = vmatpush1.msra.mxu0 %v395
        %925 = vmatprep.subr.mxu0 %v393
        %926 = vmatpush1.msra.mxu0 %v392
        %927 = vmatprep.subr.mxu0 %v390
        %928 = vmatpush1.msra.mxu0 %v389
        %929 = vmatprep.subr.mxu0 %v387
        %930 = vmatpush1.msra.mxu0 %v386
        %931 = vmatprep.subr.mxu0 %v384
        %932 = vmatpush1.msra.mxu0 %v383
        %933 = vmatprep.subr.mxu0 %v381
        %934 = vmatpush1.msra.mxu0 %v380
        %935 = vmatprep.subr.mxu0 0.0
        %936 = vmatpush2.msra.mxu0 0.0
        %937 = vmatprep.subr.mxu0 0.0
        %938 = vmatpush2.msra.mxu0 0.0
        %939 = vmatprep.subr.mxu0 0.0
        %940 = vmatpush2.msra.mxu0 0.0
        %941 = vmatprep.subr.mxu0 0.0
        %942 = vmatpush2.msra.mxu0 0.0
        %943 = vmatprep.subr.mxu0 0.0
        %944 = vmatpush2.msra.mxu0 0.0
        %945 = vmatprep.subr.mxu0 0.0
        %946 = vmatpush2.msra.mxu0 0.0
        %947 = vmatprep.subr.mxu0 0.0
        %948 = vmatpush2.msra.mxu0 0.0
        %949 = vmatprep.subr.mxu0 0.0
        %950 = vmatpush2.msra.mxu0 0.0
        %951 = vmatprep.subr.mxu0 0.0
        %952 = vmatpush2.msra.mxu0 0.0
        %953 = vmatprep.subr.mxu0 0.0
        %954 = vmatpush2.msra.mxu0 0.0
        %955 = vmatprep.subr.mxu0 0.0
        %956 = vmatpush2.msra.mxu0 0.0
        %957 = vmatprep.subr.mxu0 0.0
        %958 = vmatpush2.msra.mxu0 0.0
        %959 = vmatprep.subr.mxu0 0.0
        %960 = vmatpush2.msra.mxu0 0.0
        %961 = vmatprep.subr.mxu0 0.0
        %962 = vmatpush2.msra.mxu0 0.0
        %963 = vmatprep.subr.mxu0 0.0
        %964 = vmatpush2.msra.mxu0 0.0
        %965 = vmatprep.subr.mxu0 0.0
        %966 = vmatpush2.msra.mxu0 0.0
        %967 = vmatprep.mubr.f32.mxu0 0.0
        %968 = vmatmul.mubr.f32.gmra.mxu0 %v855
        %v969 = vpop.f32.mrf.mxu0
        %v970 = vadd.f32 %v891, %v969
        %v971 = vpop.f32.mrf.mxu0
        %v972 = vadd.f32 %v895, %v971
        %973 = vmatprep.mubr.f32.mxu0 0.0
        %974 = vmatmul.mubr.f32.gmra.mxu0 %v856
        %v975 = vpop.f32.mrf.mxu0
        %v976 = vadd.f32 %v891, %v975
        %v977 = vpop.f32.mrf.mxu0
        %v978 = vadd.f32 %v895, %v977
        %979 = vmatprep.mubr.f32.mxu0 0.0
        %980 = vmatmul.mubr.f32.gmra.mxu0 %v857
        %v981 = vpop.f32.mrf.mxu0
        %v982 = vadd.f32 %v891, %v981
        %v983 = vpop.f32.mrf.mxu0
        %v984 = vadd.f32 %v895, %v983
        %985 = vmatprep.mubr.f32.mxu0 0.0
        %986 = vmatmul.mubr.f32.gmra.mxu0 %v858
        %v987 = vpop.f32.mrf.mxu0
        %v988 = vadd.f32 %v891, %v987
        %v989 = vpop.f32.mrf.mxu0
        %v990 = vadd.f32 %v895, %v989
        %991 = vmatprep.mubr.f32.mxu0 0.0
        %992 = vmatmul.mubr.f32.gmra.mxu0 %v859
        %v993 = vpop.f32.mrf.mxu0
        %v994 = vadd.f32 %v891, %v993
        %v995 = vpop.f32.mrf.mxu0
        %v996 = vadd.f32 %v895, %v995
        %997 = vmatprep.mubr.f32.mxu0 0.0
        %998 = vmatmul.mubr.f32.gmra.mxu0 %v860
        %v999 = vpop.f32.mrf.mxu0
        %v1000 = vadd.f32 %v891, %v999
        %v1001 = vpop.f32.mrf.mxu0
        %v1002 = vadd.f32 %v895, %v1001
        %1003 = vmatprep.mubr.f32.mxu0 0.0
        %1004 = vmatmul.mubr.f32.gmra.mxu0 %v861
        %v1005 = vpop.f32.mrf.mxu0
        %v1006 = vadd.f32 %v891, %v1005
        %v1007 = vpop.f32.mrf.mxu0
        %v1008 = vadd.f32 %v895, %v1007
        %1009 = vmatprep.mubr.f32.mxu0 0.0
        %1010 = vmatmul.mubr.f32.gmra.mxu0 %v862
        %v1011 = vpop.f32.mrf.mxu0
        %v1012 = vadd.f32 %v891, %v1011
        %v1013 = vpop.f32.mrf.mxu0
        %v1014 = vadd.f32 %v895, %v1013
        %1015 = vmatprep.mubr.f32.mxu0 0.0
        %1016 = vmatmul.mubr.f32.gmra.mxu0 %v863
        %v1017 = vpop.f32.mrf.mxu0
        %v1018 = vadd.f32 %v891, %v1017
        %v1019 = vpop.f32.mrf.mxu0
        %v1020 = vadd.f32 %v895, %v1019
        %1021 = vmatprep.mubr.f32.mxu0 0.0
        %1022 = vmatmul.mubr.f32.gmra.mxu0 %v864
        %v1023 = vpop.f32.mrf.mxu0
        %v1024 = vadd.f32 %v891, %v1023
        %v1025 = vpop.f32.mrf.mxu0
        %v1026 = vadd.f32 %v895, %v1025
        %1027 = vmatprep.mubr.f32.mxu0 0.0
        %1028 = vmatmul.mubr.f32.gmra.mxu0 %v865
        %v1029 = vpop.f32.mrf.mxu0
        %v1030 = vadd.f32 %v891, %v1029
        %v1031 = vpop.f32.mrf.mxu0
        %v1032 = vadd.f32 %v895, %v1031
        %1033 = vmatprep.mubr.f32.mxu0 0.0
        %1034 = vmatmul.mubr.f32.gmra.mxu0 %v866
        %v1035 = vpop.f32.mrf.mxu0
        %v1036 = vadd.f32 %v891, %v1035
        %v1037 = vpop.f32.mrf.mxu0
        %v1038 = vadd.f32 %v895, %v1037
        %1039 = vmatprep.mubr.f32.mxu0 0.0
        %1040 = vmatmul.mubr.f32.gmra.mxu0 %v867
        %v1041 = vpop.f32.mrf.mxu0
        %v1042 = vadd.f32 %v891, %v1041
        %v1043 = vpop.f32.mrf.mxu0
        %v1044 = vadd.f32 %v895, %v1043
        %1045 = vmatprep.mubr.f32.mxu0 0.0
        %1046 = vmatmul.mubr.f32.gmra.mxu0 %v868
        %v1047 = vpop.f32.mrf.mxu0
        %v1048 = vadd.f32 %v891, %v1047
        %v1049 = vpop.f32.mrf.mxu0
        %v1050 = vadd.f32 %v895, %v1049
        %1051 = vmatprep.mubr.f32.mxu0 0.0
        %1052 = vmatmul.mubr.f32.gmra.mxu0 %v869
        %v1053 = vpop.f32.mrf.mxu0
        %v1054 = vadd.f32 %v891, %v1053
        %v1055 = vpop.f32.mrf.mxu0
        %v1056 = vadd.f32 %v895, %v1055
        %1057 = vmatprep.mubr.f32.mxu0 0.0
        %1058 = vmatmul.mubr.f32.gmra.mxu0 %v870
        %v1059 = vpop.f32.mrf.mxu0
        %v1060 = vadd.f32 %v891, %v1059
        %v1061 = vpop.f32.mrf.mxu0
        %v1062 = vadd.f32 %v895, %v1061
        %1063 = vmatprep.mubr.f32.mxu0 0.0
        %1064 = vmatmul.mubr.f32.gmra.mxu0 %v871
        %v1065 = vpop.f32.mrf.mxu0
        %v1066 = vadd.f32 %v891, %v1065
        %v1067 = vpop.f32.mrf.mxu0
        %v1068 = vadd.f32 %v895, %v1067
        %1069 = vmatprep.mubr.f32.mxu0 0.0
        %1070 = vmatmul.mubr.f32.gmra.mxu0 %v872
        %v1071 = vpop.f32.mrf.mxu0
        %v1072 = vadd.f32 %v891, %v1071
        %v1073 = vpop.f32.mrf.mxu0
        %v1074 = vadd.f32 %v895, %v1073
        %1075 = vmatprep.mubr.f32.mxu0 0.0
        %1076 = vmatmul.mubr.f32.gmra.mxu0 %v873
        %v1077 = vpop.f32.mrf.mxu0
        %v1078 = vadd.f32 %v891, %v1077
        %v1079 = vpop.f32.mrf.mxu0
        %v1080 = vadd.f32 %v895, %v1079
        %1081 = vmatprep.mubr.f32.mxu0 0.0
        %1082 = vmatmul.mubr.f32.gmra.mxu0 %v874
        %v1083 = vpop.f32.mrf.mxu0
        %v1084 = vadd.f32 %v891, %v1083
        %v1085 = vpop.f32.mrf.mxu0
        %v1086 = vadd.f32 %v895, %v1085
        %1087 = vmatprep.mubr.f32.mxu0 0.0
        %1088 = vmatmul.mubr.f32.gmra.mxu0 %v875
        %v1089 = vpop.f32.mrf.mxu0
        %v1090 = vadd.f32 %v891, %v1089
        %v1091 = vpop.f32.mrf.mxu0
        %v1092 = vadd.f32 %v895, %v1091
        %1093 = vmatprep.mubr.f32.mxu0 0.0
        %1094 = vmatmul.mubr.f32.gmra.mxu0 %v876
        %v1095 = vpop.f32.mrf.mxu0
        %v1096 = vadd.f32 %v891, %v1095
        %v1097 = vpop.f32.mrf.mxu0
        %v1098 = vadd.f32 %v895, %v1097
        %1099 = vmatprep.mubr.f32.mxu0 0.0
        %1100 = vmatmul.mubr.f32.gmra.mxu0 %v877
        %v1101 = vpop.f32.mrf.mxu0
        %v1102 = vadd.f32 %v891, %v1101
        %v1103 = vpop.f32.mrf.mxu0
        %v1104 = vadd.f32 %v895, %v1103
        %1105 = vmatprep.mubr.f32.mxu0 0.0
        %1106 = vmatmul.mubr.f32.gmra.mxu0 %v878
        %v1107 = vpop.f32.mrf.mxu0
        %v1108 = vadd.f32 %v891, %v1107
        %v1109 = vpop.f32.mrf.mxu0
        %v1110 = vadd.f32 %v895, %v1109
        %1111 = vmatprep.mubr.f32.mxu0 0.0
        %1112 = vmatmul.mubr.f32.gmra.mxu0 %v879
        %v1113 = vpop.f32.mrf.mxu0
        %v1114 = vadd.f32 %v891, %v1113
        %v1115 = vpop.f32.mrf.mxu0
        %v1116 = vadd.f32 %v895, %v1115
        %1117 = vmatprep.mubr.f32.mxu0 0.0
        %1118 = vmatmul.mubr.f32.gmra.mxu0 %v880
        %v1119 = vpop.f32.mrf.mxu0
        %v1120 = vadd.f32 %v891, %v1119
        %v1121 = vpop.f32.mrf.mxu0
        %v1122 = vadd.f32 %v895, %v1121
        %1123 = vmatprep.mubr.f32.mxu0 0.0
        %1124 = vmatmul.mubr.f32.gmra.mxu0 %v881
        %v1125 = vpop.f32.mrf.mxu0
        %v1126 = vadd.f32 %v891, %v1125
        %v1127 = vpop.f32.mrf.mxu0
        %v1128 = vadd.f32 %v895, %v1127
        %1129 = vmatprep.mubr.f32.mxu0 0.0
        %1130 = vmatmul.mubr.f32.gmra.mxu0 %v882
        %v1131 = vpop.f32.mrf.mxu0
        %v1132 = vadd.f32 %v891, %v1131
        %v1133 = vpop.f32.mrf.mxu0
        %v1134 = vadd.f32 %v895, %v1133
        %1135 = vmatprep.mubr.f32.mxu0 0.0
        %1136 = vmatmul.mubr.f32.gmra.mxu0 %v883
        %v1137 = vpop.f32.mrf.mxu0
        %v1138 = vadd.f32 %v891, %v1137
        %v1139 = vpop.f32.mrf.mxu0
        %v1140 = vadd.f32 %v895, %v1139
        %1141 = vmatprep.mubr.f32.mxu0 0.0
        %1142 = vmatmul.mubr.f32.gmra.mxu0 %v884
        %v1143 = vpop.f32.mrf.mxu0
        %v1144 = vadd.f32 %v891, %v1143
        %v1145 = vpop.f32.mrf.mxu0
        %v1146 = vadd.f32 %v895, %v1145
        %1147 = vmatprep.mubr.f32.mxu0 0.0
        %1148 = vmatmul.mubr.f32.gmra.mxu0 %v885
        %v1149 = vpop.f32.mrf.mxu0
        %v1150 = vadd.f32 %v891, %v1149
        %v1151 = vpop.f32.mrf.mxu0
        %v1152 = vadd.f32 %v895, %v1151
        %1153 = vmatprep.mubr.f32.mxu0 0.0
        %1154 = vmatmul.mubr.f32.gmra.mxu0 %v886
        %v1155 = vpop.f32.mrf.mxu0
        %v1156 = vadd.f32 %v891, %v1155
        %v1157 = vpop.f32.mrf.mxu0
        %v1158 = vadd.f32 %v895, %v1157
        %1159 = vdwg.mxu0
        %1160 = vmatprep.subr.mxu0 0.0
        %1161 = vmatpush1.msra.mxu0 %v427
        %1162 = vmatprep.subr.mxu0 0.0
        %1163 = vmatpush1.msra.mxu0 %v424
        %1164 = vmatprep.subr.mxu0 0.0
        %1165 = vmatpush1.msra.mxu0 %v421
        %1166 = vmatprep.subr.mxu0 0.0
        %1167 = vmatpush1.msra.mxu0 %v418
        %1168 = vmatprep.subr.mxu0 0.0
        %1169 = vmatpush1.msra.mxu0 %v415
        %1170 = vmatprep.subr.mxu0 0.0
        %1171 = vmatpush1.msra.mxu0 %v412
        %1172 = vmatprep.subr.mxu0 0.0
        %1173 = vmatpush1.msra.mxu0 %v409
        %1174 = vmatprep.subr.mxu0 0.0
        %1175 = vmatpush1.msra.mxu0 %v406
        %1176 = vmatprep.subr.mxu0 0.0
        %1177 = vmatpush1.msra.mxu0 %v403
        %1178 = vmatprep.subr.mxu0 0.0
        %1179 = vmatpush1.msra.mxu0 %v400
        %1180 = vmatprep.subr.mxu0 0.0
        %1181 = vmatpush1.msra.mxu0 %v397
        %1182 = vmatprep.subr.mxu0 0.0
        %1183 = vmatpush1.msra.mxu0 %v394
        %1184 = vmatprep.subr.mxu0 0.0
        %1185 = vmatpush1.msra.mxu0 %v391
        %1186 = vmatprep.subr.mxu0 0.0
        %1187 = vmatpush1.msra.mxu0 %v388
        %1188 = vmatprep.subr.mxu0 0.0
        %1189 = vmatpush1.msra.mxu0 %v385
        %1190 = vmatprep.subr.mxu0 0.0
        %1191 = vmatpush1.msra.mxu0 %v382
        %1192 = vmatprep.subr.mxu0 0.0
        %1193 = vmatpush2.msra.mxu0 0.0
        %1194 = vmatprep.subr.mxu0 0.0
        %1195 = vmatpush2.msra.mxu0 0.0
        %1196 = vmatprep.subr.mxu0 0.0
        %1197 = vmatpush2.msra.mxu0 0.0
        %1198 = vmatprep.subr.mxu0 0.0
        %1199 = vmatpush2.msra.mxu0 0.0
        %1200 = vmatprep.subr.mxu0 0.0
        %1201 = vmatpush2.msra.mxu0 0.0
        %1202 = vmatprep.subr.mxu0 0.0
        %1203 = vmatpush2.msra.mxu0 0.0
        %1204 = vmatprep.subr.mxu0 0.0
        %1205 = vmatpush2.msra.mxu0 0.0
        %1206 = vmatprep.subr.mxu0 0.0
        %1207 = vmatpush2.msra.mxu0 0.0
        %1208 = vmatprep.subr.mxu0 0.0
        %1209 = vmatpush2.msra.mxu0 0.0
        %1210 = vmatprep.subr.mxu0 0.0
        %1211 = vmatpush2.msra.mxu0 0.0
        %1212 = vmatprep.subr.mxu0 0.0
        %1213 = vmatpush2.msra.mxu0 0.0
        %1214 = vmatprep.subr.mxu0 0.0
        %1215 = vmatpush2.msra.mxu0 0.0
        %1216 = vmatprep.subr.mxu0 0.0
        %1217 = vmatpush2.msra.mxu0 0.0
        %1218 = vmatprep.subr.mxu0 0.0
        %1219 = vmatpush2.msra.mxu0 0.0
        %1220 = vmatprep.subr.mxu0 0.0
        %1221 = vmatpush2.msra.mxu0 0.0
        %1222 = vmatprep.subr.mxu0 0.0
        %1223 = vmatpush2.msra.mxu0 0.0
        %1224 = vmatprep.mubr.f32.mxu0 0.0
        %1225 = vmatmul.mubr.f32.gmra.mxu0 %v855
        %v1226 = vpop.f32.mrf.mxu0
        %v1227 = vadd.f32 %v899, %v1226
        %v1228 = vpop.f32.mrf.mxu0
        %1229 = vmatprep.mubr.f32.mxu0 0.0
        %1230 = vmatmul.mubr.f32.gmra.mxu0 %v856
        %v1231 = vpop.f32.mrf.mxu0
        %v1232 = vadd.f32 %v899, %v1231
        %v1233 = vpop.f32.mrf.mxu0
        %1234 = vmatprep.mubr.f32.mxu0 0.0
        %1235 = vmatmul.mubr.f32.gmra.mxu0 %v857
        %v1236 = vpop.f32.mrf.mxu0
        %v1237 = vadd.f32 %v899, %v1236
        %v1238 = vpop.f32.mrf.mxu0
        %1239 = vmatprep.mubr.f32.mxu0 0.0
        %1240 = vmatmul.mubr.f32.gmra.mxu0 %v858
        %v1241 = vpop.f32.mrf.mxu0
        %v1242 = vadd.f32 %v899, %v1241
        %v1243 = vpop.f32.mrf.mxu0
        %1244 = vmatprep.mubr.f32.mxu0 0.0
        %1245 = vmatmul.mubr.f32.gmra.mxu0 %v859
        %v1246 = vpop.f32.mrf.mxu0
        %v1247 = vadd.f32 %v899, %v1246
        %v1248 = vpop.f32.mrf.mxu0
        %1249 = vmatprep.mubr.f32.mxu0 0.0
        %1250 = vmatmul.mubr.f32.gmra.mxu0 %v860
        %v1251 = vpop.f32.mrf.mxu0
        %v1252 = vadd.f32 %v899, %v1251
        %v1253 = vpop.f32.mrf.mxu0
        %1254 = vmatprep.mubr.f32.mxu0 0.0
        %1255 = vmatmul.mubr.f32.gmra.mxu0 %v861
        %v1256 = vpop.f32.mrf.mxu0
        %v1257 = vadd.f32 %v899, %v1256
        %v1258 = vpop.f32.mrf.mxu0
        %1259 = vmatprep.mubr.f32.mxu0 0.0
        %1260 = vmatmul.mubr.f32.gmra.mxu0 %v862
        %v1261 = vpop.f32.mrf.mxu0
        %v1262 = vadd.f32 %v899, %v1261
        %v1263 = vpop.f32.mrf.mxu0
        %1264 = vmatprep.mubr.f32.mxu0 0.0
        %1265 = vmatmul.mubr.f32.gmra.mxu0 %v863
        %v1266 = vpop.f32.mrf.mxu0
        %v1267 = vadd.f32 %v899, %v1266
        %v1268 = vpop.f32.mrf.mxu0
        %1269 = vmatprep.mubr.f32.mxu0 0.0
        %1270 = vmatmul.mubr.f32.gmra.mxu0 %v864
        %v1271 = vpop.f32.mrf.mxu0
        %v1272 = vadd.f32 %v899, %v1271
        %v1273 = vpop.f32.mrf.mxu0
        %1274 = vmatprep.mubr.f32.mxu0 0.0
        %1275 = vmatmul.mubr.f32.gmra.mxu0 %v865
        %v1276 = vpop.f32.mrf.mxu0
        %v1277 = vadd.f32 %v899, %v1276
        %v1278 = vpop.f32.mrf.mxu0
        %1279 = vmatprep.mubr.f32.mxu0 0.0
        %1280 = vmatmul.mubr.f32.gmra.mxu0 %v866
        %v1281 = vpop.f32.mrf.mxu0
        %v1282 = vadd.f32 %v899, %v1281
        %v1283 = vpop.f32.mrf.mxu0
        %1284 = vmatprep.mubr.f32.mxu0 0.0
        %1285 = vmatmul.mubr.f32.gmra.mxu0 %v867
        %v1286 = vpop.f32.mrf.mxu0
        %v1287 = vadd.f32 %v899, %v1286
        %v1288 = vpop.f32.mrf.mxu0
        %1289 = vmatprep.mubr.f32.mxu0 0.0
        %1290 = vmatmul.mubr.f32.gmra.mxu0 %v868
        %v1291 = vpop.f32.mrf.mxu0
        %v1292 = vadd.f32 %v899, %v1291
        %v1293 = vpop.f32.mrf.mxu0
        %1294 = vmatprep.mubr.f32.mxu0 0.0
        %1295 = vmatmul.mubr.f32.gmra.mxu0 %v869
        %v1296 = vpop.f32.mrf.mxu0
        %v1297 = vadd.f32 %v899, %v1296
        %v1298 = vpop.f32.mrf.mxu0
        %1299 = vmatprep.mubr.f32.mxu0 0.0
        %1300 = vmatmul.mubr.f32.gmra.mxu0 %v870
        %v1301 = vpop.f32.mrf.mxu0
        %v1302 = vadd.f32 %v899, %v1301
        %v1303 = vpop.f32.mrf.mxu0
        %1304 = vmatprep.mubr.f32.mxu0 0.0
        %1305 = vmatmul.mubr.f32.gmra.mxu0 %v871
        %v1306 = vpop.f32.mrf.mxu0
        %v1307 = vadd.f32 %v899, %v1306
        %v1308 = vpop.f32.mrf.mxu0
        %1309 = vmatprep.mubr.f32.mxu0 0.0
        %1310 = vmatmul.mubr.f32.gmra.mxu0 %v872
        %v1311 = vpop.f32.mrf.mxu0
        %v1312 = vadd.f32 %v899, %v1311
        %v1313 = vpop.f32.mrf.mxu0
        %1314 = vmatprep.mubr.f32.mxu0 0.0
        %1315 = vmatmul.mubr.f32.gmra.mxu0 %v873
        %v1316 = vpop.f32.mrf.mxu0
        %v1317 = vadd.f32 %v899, %v1316
        %v1318 = vpop.f32.mrf.mxu0
        %1319 = vmatprep.mubr.f32.mxu0 0.0
        %1320 = vmatmul.mubr.f32.gmra.mxu0 %v874
        %v1321 = vpop.f32.mrf.mxu0
        %v1322 = vadd.f32 %v899, %v1321
        %v1323 = vpop.f32.mrf.mxu0
        %1324 = vmatprep.mubr.f32.mxu0 0.0
        %1325 = vmatmul.mubr.f32.gmra.mxu0 %v875
        %v1326 = vpop.f32.mrf.mxu0
        %v1327 = vadd.f32 %v899, %v1326
        %v1328 = vpop.f32.mrf.mxu0
        %1329 = vmatprep.mubr.f32.mxu0 0.0
        %1330 = vmatmul.mubr.f32.gmra.mxu0 %v876
        %v1331 = vpop.f32.mrf.mxu0
        %v1332 = vadd.f32 %v899, %v1331
        %v1333 = vpop.f32.mrf.mxu0
        %1334 = vmatprep.mubr.f32.mxu0 0.0
        %1335 = vmatmul.mubr.f32.gmra.mxu0 %v877
        %v1336 = vpop.f32.mrf.mxu0
        %v1337 = vadd.f32 %v899, %v1336
        %v1338 = vpop.f32.mrf.mxu0
        %1339 = vmatprep.mubr.f32.mxu0 0.0
        %1340 = vmatmul.mubr.f32.gmra.mxu0 %v878
        %v1341 = vpop.f32.mrf.mxu0
        %v1342 = vadd.f32 %v899, %v1341
        %v1343 = vpop.f32.mrf.mxu0
        %1344 = vmatprep.mubr.f32.mxu0 0.0
        %1345 = vmatmul.mubr.f32.gmra.mxu0 %v879
        %v1346 = vpop.f32.mrf.mxu0
        %v1347 = vadd.f32 %v899, %v1346
        %v1348 = vpop.f32.mrf.mxu0
        %1349 = vmatprep.mubr.f32.mxu0 0.0
        %1350 = vmatmul.mubr.f32.gmra.mxu0 %v880
        %v1351 = vpop.f32.mrf.mxu0
        %v1352 = vadd.f32 %v899, %v1351
        %v1353 = vpop.f32.mrf.mxu0
        %1354 = vmatprep.mubr.f32.mxu0 0.0
        %1355 = vmatmul.mubr.f32.gmra.mxu0 %v881
        %v1356 = vpop.f32.mrf.mxu0
        %v1357 = vadd.f32 %v899, %v1356
        %v1358 = vpop.f32.mrf.mxu0
        %1359 = vmatprep.mubr.f32.mxu0 0.0
        %1360 = vmatmul.mubr.f32.gmra.mxu0 %v882
        %v1361 = vpop.f32.mrf.mxu0
        %v1362 = vadd.f32 %v899, %v1361
        %v1363 = vpop.f32.mrf.mxu0
        %1364 = vmatprep.mubr.f32.mxu0 0.0
        %1365 = vmatmul.mubr.f32.gmra.mxu0 %v883
        %v1366 = vpop.f32.mrf.mxu0
        %v1367 = vadd.f32 %v899, %v1366
        %v1368 = vpop.f32.mrf.mxu0
        %1369 = vmatprep.mubr.f32.mxu0 0.0
        %1370 = vmatmul.mubr.f32.gmra.mxu0 %v884
        %v1371 = vpop.f32.mrf.mxu0
        %v1372 = vadd.f32 %v899, %v1371
        %v1373 = vpop.f32.mrf.mxu0
        %1374 = vmatprep.mubr.f32.mxu0 0.0
        %1375 = vmatmul.mubr.f32.gmra.mxu0 %v885
        %v1376 = vpop.f32.mrf.mxu0
        %v1377 = vadd.f32 %v899, %v1376
        %v1378 = vpop.f32.mrf.mxu0
        %1379 = vmatprep.mubr.f32.mxu0 0.0
        %1380 = vmatmul.mubr.f32.gmra.mxu0 %v886
        %v1381 = vpop.f32.mrf.mxu0
        %v1382 = vadd.f32 %v899, %v1381
        %v1383 = vpop.f32.mrf.mxu0
        %1384 = vdwg.mxu0
        %1385 = vst [vmem:[#allocation2] sm:$0xff] %v970
        %1386 = vst [vmem:[#allocation2 + $0x8] sm:$0xff] %v972
        %1387 = vst [vmem:[#allocation2 + $0x10] sm:$0xff] %v1227
        %1388 = vst [vmem:[#allocation2 + $0x18] sm:$0xff] %v976
        %1389 = vst [vmem:[#allocation2 + $0x20] sm:$0xff] %v978
        %1390 = vst [vmem:[#allocation2 + $0x28] sm:$0xff] %v1232
        %1391 = vst [vmem:[#allocation2 + $0x30] sm:$0xff] %v982
        %1392 = vst [vmem:[#allocation2 + $0x38] sm:$0xff] %v984
        %1393 = vst [vmem:[#allocation2 + $0x40] sm:$0xff] %v1237
        %1394 = vst [vmem:[#allocation2 + $0x48] sm:$0xff] %v988
        %1395 = vst [vmem:[#allocation2 + $0x50] sm:$0xff] %v990
        %1396 = vst [vmem:[#allocation2 + $0x58] sm:$0xff] %v1242
        %1397 = vst [vmem:[#allocation2 + $0x60] sm:$0xff] %v994
        %1398 = vst [vmem:[#allocation2 + $0x68] sm:$0xff] %v996
        %1399 = vst [vmem:[#allocation2 + $0x70] sm:$0xff] %v1247
        %1400 = vst [vmem:[#allocation2 + $0x78] sm:$0xff] %v1000
        %1401 = vst [vmem:[#allocation2 + $0x80] sm:$0xff] %v1002
        %1402 = vst [vmem:[#allocation2 + $0x88] sm:$0xff] %v1252
        %1403 = vst [vmem:[#allocation2 + $0x90] sm:$0xff] %v1006
        %1404 = vst [vmem:[#allocation2 + $0x98] sm:$0xff] %v1008
        %1405 = vst [vmem:[#allocation2 + $0xa0] sm:$0xff] %v1257
        %1406 = vst [vmem:[#allocation2 + $0xa8] sm:$0xff] %v1012
        %1407 = vst [vmem:[#allocation2 + $0xb0] sm:$0xff] %v1014
        %1408 = vst [vmem:[#allocation2 + $0xb8] sm:$0xff] %v1262
        %1409 = vst [vmem:[#allocation2 + $0xc0] sm:$0xff] %v1018
        %1410 = vst [vmem:[#allocation2 + $0xc8] sm:$0xff] %v1020
        %1411 = vst [vmem:[#allocation2 + $0xd0] sm:$0xff] %v1267
        %1412 = vst [vmem:[#allocation2 + $0xd8] sm:$0xff] %v1024
        %1413 = vst [vmem:[#allocation2 + $0xe0] sm:$0xff] %v1026
        %1414 = vst [vmem:[#allocation2 + $0xe8] sm:$0xff] %v1272
        %1415 = vst [vmem:[#allocation2 + $0xf0] sm:$0xff] %v1030
        %1416 = vst [vmem:[#allocation2 + $0xf8] sm:$0xff] %v1032
        %1417 = vst [vmem:[#allocation2 + $0x100] sm:$0xff] %v1277
        %1418 = vst [vmem:[#allocation2 + $0x108] sm:$0xff] %v1036
        %1419 = vst [vmem:[#allocation2 + $0x110] sm:$0xff] %v1038
        %1420 = vst [vmem:[#allocation2 + $0x118] sm:$0xff] %v1282
        %1421 = vst [vmem:[#allocation2 + $0x120] sm:$0xff] %v1042
        %1422 = vst [vmem:[#allocation2 + $0x128] sm:$0xff] %v1044
        %1423 = vst [vmem:[#allocation2 + $0x130] sm:$0xff] %v1287
        %1424 = vst [vmem:[#allocation2 + $0x138] sm:$0xff] %v1048
        %1425 = vst [vmem:[#allocation2 + $0x140] sm:$0xff] %v1050
        %1426 = vst [vmem:[#allocation2 + $0x148] sm:$0xff] %v1292
        %1427 = vst [vmem:[#allocation2 + $0x150] sm:$0xff] %v1054
        %1428 = vst [vmem:[#allocation2 + $0x158] sm:$0xff] %v1056
        %1429 = vst [vmem:[#allocation2 + $0x160] sm:$0xff] %v1297
        %1430 = vst [vmem:[#allocation2 + $0x168] sm:$0xff] %v1060
        %1431 = vst [vmem:[#allocation2 + $0x170] sm:$0xff] %v1062
        %1432 = vst [vmem:[#allocation2 + $0x178] sm:$0xff] %v1302
        %1433 = vst [vmem:[#allocation2 + $0x180] sm:$0xff] %v1066
        %1434 = vst [vmem:[#allocation2 + $0x188] sm:$0xff] %v1068
        %1435 = vst [vmem:[#allocation2 + $0x190] sm:$0xff] %v1307
        %1436 = vst [vmem:[#allocation2 + $0x198] sm:$0xff] %v1072
        %1437 = vst [vmem:[#allocation2 + $0x1a0] sm:$0xff] %v1074
        %1438 = vst [vmem:[#allocation2 + $0x1a8] sm:$0xff] %v1312
        %1439 = vst [vmem:[#allocation2 + $0x1b0] sm:$0xff] %v1078
        %1440 = vst [vmem:[#allocation2 + $0x1b8] sm:$0xff] %v1080
        %1441 = vst [vmem:[#allocation2 + $0x1c0] sm:$0xff] %v1317
        %1442 = vst [vmem:[#allocation2 + $0x1c8] sm:$0xff] %v1084
        %1443 = vst [vmem:[#allocation2 + $0x1d0] sm:$0xff] %v1086
        %1444 = vst [vmem:[#allocation2 + $0x1d8] sm:$0xff] %v1322
        %1445 = vst [vmem:[#allocation2 + $0x1e0] sm:$0xff] %v1090
        %1446 = vst [vmem:[#allocation2 + $0x1e8] sm:$0xff] %v1092
        %1447 = vst [vmem:[#allocation2 + $0x1f0] sm:$0xff] %v1327
        %1448 = vst [vmem:[#allocation2 + $0x1f8] sm:$0xff] %v1096
        %1449 = vst [vmem:[#allocation2 + $0x200] sm:$0xff] %v1098
        %1450 = vst [vmem:[#allocation2 + $0x208] sm:$0xff] %v1332
        %1451 = vst [vmem:[#allocation2 + $0x210] sm:$0xff] %v1102
        %1452 = vst [vmem:[#allocation2 + $0x218] sm:$0xff] %v1104
        %1453 = vst [vmem:[#allocation2 + $0x220] sm:$0xff] %v1337
        %1454 = vst [vmem:[#allocation2 + $0x228] sm:$0xff] %v1108
        %1455 = vst [vmem:[#allocation2 + $0x230] sm:$0xff] %v1110
        %1456 = vst [vmem:[#allocation2 + $0x238] sm:$0xff] %v1342
        %1457 = vst [vmem:[#allocation2 + $0x240] sm:$0xff] %v1114
        %1458 = vst [vmem:[#allocation2 + $0x248] sm:$0xff] %v1116
        %1459 = vst [vmem:[#allocation2 + $0x250] sm:$0xff] %v1347
        %1460 = vst [vmem:[#allocation2 + $0x258] sm:$0xff] %v1120
        %1461 = vst [vmem:[#allocation2 + $0x260] sm:$0xff] %v1122
        %1462 = vst [vmem:[#allocation2 + $0x268] sm:$0xff] %v1352
        %1463 = vst [vmem:[#allocation2 + $0x270] sm:$0xff] %v1126
        %1464 = vst [vmem:[#allocation2 + $0x278] sm:$0xff] %v1128
        %1465 = vst [vmem:[#allocation2 + $0x280] sm:$0xff] %v1357
        %1466 = vst [vmem:[#allocation2 + $0x288] sm:$0xff] %v1132
        %1467 = vst [vmem:[#allocation2 + $0x290] sm:$0xff] %v1134
        %1468 = vst [vmem:[#allocation2 + $0x298] sm:$0xff] %v1362
        %1469 = vst [vmem:[#allocation2 + $0x2a0] sm:$0xff] %v1138
        %1470 = vst [vmem:[#allocation2 + $0x2a8] sm:$0xff] %v1140
        %1471 = vst [vmem:[#allocation2 + $0x2b0] sm:$0xff] %v1367
        %1472 = vst [vmem:[#allocation2 + $0x2b8] sm:$0xff] %v1144
        %1473 = vst [vmem:[#allocation2 + $0x2c0] sm:$0xff] %v1146
        %1474 = vst [vmem:[#allocation2 + $0x2c8] sm:$0xff] %v1372
        %1475 = vst [vmem:[#allocation2 + $0x2d0] sm:$0xff] %v1150
        %1476 = vst [vmem:[#allocation2 + $0x2d8] sm:$0xff] %v1152
        %1477 = vst [vmem:[#allocation2 + $0x2e0] sm:$0xff] %v1377
        %1478 = vst [vmem:[#allocation2 + $0x2e8] sm:$0xff] %v1156
        %1479 = vst [vmem:[#allocation2 + $0x2f0] sm:$0xff] %v1158
        %1480 = vst [vmem:[#allocation2 + $0x2f8] sm:$0xff] %v1382
        %s1481 = smul.u32 0, 3
        %s1482 = smul.addr %s1481, 8
        %s1483 = scalar_lea.vmem [#allocation2], %s1482
        %v1484 = vld [vmem:[%s1483] sm:$0xff]
        %v1485 = vld [vmem:[%s1483 + $0x8] sm:$0xff]
        %v1486 = vld [vmem:[%s1483 + $0x10] sm:$0xff]
        %v1487 = vld [vmem:[%s1483 + $0x18] sm:$0xff]
        %v1488 = vld [vmem:[%s1483 + $0x20] sm:$0xff]
        %v1489 = vld [vmem:[%s1483 + $0x28] sm:$0xff]
        %v1490 = vld [vmem:[%s1483 + $0x30] sm:$0xff]
        %v1491 = vld [vmem:[%s1483 + $0x38] sm:$0xff]
        %v1492 = vld [vmem:[%s1483 + $0x40] sm:$0xff]
        %v1493 = vld [vmem:[%s1483 + $0x48] sm:$0xff]
        %v1494 = vld [vmem:[%s1483 + $0x50] sm:$0xff]
        %v1495 = vld [vmem:[%s1483 + $0x58] sm:$0xff]
        %v1497 = vlaneseq
        %v1498 = vshrl.u32 %v1497, 7
        %v1499 = vsub.s32 0, %v1498
        %v1500 = vrot.slane %v477, %v1499
        %v1501 = vlaneseq
        %v1502 = vshrl.u32 %v1501, 7
        %v1503 = vsub.s32 1, %v1502
        %v1504 = vrot.slane %v477, %v1503
        %v1505 = vlaneseq
        %v1506 = vshrl.u32 %v1505, 7
        %v1507 = vsub.s32 2, %v1506
        %v1508 = vrot.slane %v477, %v1507
        %1512 = vmatprep.subr.mxu0 %v474
        %1513 = vmatpush1.msra.mxu0 %v473
        %1514 = vmatprep.subr.mxu0 %v471
        %1515 = vmatpush1.msra.mxu0 %v470
        %1516 = vmatprep.subr.mxu0 %v468
        %1517 = vmatpush1.msra.mxu0 %v467
        %1518 = vmatprep.subr.mxu0 %v465
        %1519 = vmatpush1.msra.mxu0 %v464
        %1520 = vmatprep.subr.mxu0 %v462
        %1521 = vmatpush1.msra.mxu0 %v461
        %1522 = vmatprep.subr.mxu0 %v459
        %1523 = vmatpush1.msra.mxu0 %v458
        %1524 = vmatprep.subr.mxu0 %v456
        %1525 = vmatpush1.msra.mxu0 %v455
        %1526 = vmatprep.subr.mxu0 %v453
        %1527 = vmatpush1.msra.mxu0 %v452
        %1528 = vmatprep.subr.mxu0 %v450
        %1529 = vmatpush1.msra.mxu0 %v449
        %1530 = vmatprep.subr.mxu0 %v447
        %1531 = vmatpush1.msra.mxu0 %v446
        %1532 = vmatprep.subr.mxu0 %v444
        %1533 = vmatpush1.msra.mxu0 %v443
        %1534 = vmatprep.subr.mxu0 %v441
        %1535 = vmatpush1.msra.mxu0 %v440
        %1536 = vmatprep.subr.mxu0 %v438
        %1537 = vmatpush1.msra.mxu0 %v437
        %1538 = vmatprep.subr.mxu0 %v435
        %1539 = vmatpush1.msra.mxu0 %v434
        %1540 = vmatprep.subr.mxu0 %v432
        %1541 = vmatpush1.msra.mxu0 %v431
        %1542 = vmatprep.subr.mxu0 %v429
        %1543 = vmatpush1.msra.mxu0 %v428
        %1544 = vmatprep.subr.mxu0 0.0
        %1545 = vmatpush2.msra.mxu0 0.0
        %1546 = vmatprep.subr.mxu0 0.0
        %1547 = vmatpush2.msra.mxu0 0.0
        %1548 = vmatprep.subr.mxu0 0.0
        %1549 = vmatpush2.msra.mxu0 0.0
        %1550 = vmatprep.subr.mxu0 0.0
        %1551 = vmatpush2.msra.mxu0 0.0
        %1552 = vmatprep.subr.mxu0 0.0
        %1553 = vmatpush2.msra.mxu0 0.0
        %1554 = vmatprep.subr.mxu0 0.0
        %1555 = vmatpush2.msra.mxu0 0.0
        %1556 = vmatprep.subr.mxu0 0.0
        %1557 = vmatpush2.msra.mxu0 0.0
        %1558 = vmatprep.subr.mxu0 0.0
        %1559 = vmatpush2.msra.mxu0 0.0
        %1560 = vmatprep.subr.mxu0 0.0
        %1561 = vmatpush2.msra.mxu0 0.0
        %1562 = vmatprep.subr.mxu0 0.0
        %1563 = vmatpush2.msra.mxu0 0.0
        %1564 = vmatprep.subr.mxu0 0.0
        %1565 = vmatpush2.msra.mxu0 0.0
        %1566 = vmatprep.subr.mxu0 0.0
        %1567 = vmatpush2.msra.mxu0 0.0
        %1568 = vmatprep.subr.mxu0 0.0
        %1569 = vmatpush2.msra.mxu0 0.0
        %1570 = vmatprep.subr.mxu0 0.0
        %1571 = vmatpush2.msra.mxu0 0.0
        %1572 = vmatprep.subr.mxu0 0.0
        %1573 = vmatpush2.msra.mxu0 0.0
        %1574 = vmatprep.subr.mxu0 0.0
        %1575 = vmatpush2.msra.mxu0 0.0
        %1576 = vmatprep.mubr.f32.mxu0 0.0
        %1577 = vmatmul.mubr.f32.gmra.mxu0 0.0
        %v1578 = vpop.f32.mrf.mxu0
        %v1579 = vadd.f32 %v1500, %v1578
        %v1580 = vpop.f32.mrf.mxu0
        %v1581 = vadd.f32 %v1504, %v1580
        %1582 = vmatprep.mubr.f32.mxu0 0.0
        %1583 = vmatmul.mubr.f32.gmra.mxu0 0.0
        %v1584 = vpop.f32.mrf.mxu0
        %v1585 = vadd.f32 %v1500, %v1584
        %v1586 = vpop.f32.mrf.mxu0
        %v1587 = vadd.f32 %v1504, %v1586
        %1588 = vmatprep.mubr.f32.mxu0 0.0
        %1589 = vmatmul.mubr.f32.gmra.mxu0 0.0
        %v1590 = vpop.f32.mrf.mxu0
        %v1591 = vadd.f32 %v1500, %v1590
        %v1592 = vpop.f32.mrf.mxu0
        %v1593 = vadd.f32 %v1504, %v1592
        %1594 = vmatprep.mubr.f32.mxu0 0.0
        %1595 = vmatmul.mubr.f32.gmra.mxu0 0.0
        %v1596 = vpop.f32.mrf.mxu0
        %v1597 = vadd.f32 %v1500, %v1596
        %v1598 = vpop.f32.mrf.mxu0
        %v1599 = vadd.f32 %v1504, %v1598
        %1600 = vdwg.mxu0
        %1601 = vmatprep.subr.mxu0 0.0
        %1602 = vmatpush1.msra.mxu0 %v475
        %1603 = vmatprep.subr.mxu0 0.0
        %1604 = vmatpush1.msra.mxu0 %v472
        %1605 = vmatprep.subr.mxu0 0.0
        %1606 = vmatpush1.msra.mxu0 %v469
        %1607 = vmatprep.subr.mxu0 0.0
        %1608 = vmatpush1.msra.mxu0 %v466
        %1609 = vmatprep.subr.mxu0 0.0
        %1610 = vmatpush1.msra.mxu0 %v463
        %1611 = vmatprep.subr.mxu0 0.0
        %1612 = vmatpush1.msra.mxu0 %v460
        %1613 = vmatprep.subr.mxu0 0.0
        %1614 = vmatpush1.msra.mxu0 %v457
        %1615 = vmatprep.subr.mxu0 0.0
        %1616 = vmatpush1.msra.mxu0 %v454
        %1617 = vmatprep.subr.mxu0 0.0
        %1618 = vmatpush1.msra.mxu0 %v451
        %1619 = vmatprep.subr.mxu0 0.0
        %1620 = vmatpush1.msra.mxu0 %v448
        %1621 = vmatprep.subr.mxu0 0.0
        %1622 = vmatpush1.msra.mxu0 %v445
        %1623 = vmatprep.subr.mxu0 0.0
        %1624 = vmatpush1.msra.mxu0 %v442
        %1625 = vmatprep.subr.mxu0 0.0
        %1626 = vmatpush1.msra.mxu0 %v439
        %1627 = vmatprep.subr.mxu0 0.0
        %1628 = vmatpush1.msra.mxu0 %v436
        %1629 = vmatprep.subr.mxu0 0.0
        %1630 = vmatpush1.msra.mxu0 %v433
        %1631 = vmatprep.subr.mxu0 0.0
        %1632 = vmatpush1.msra.mxu0 %v430
        %1633 = vmatprep.subr.mxu0 0.0
        %1634 = vmatpush2.msra.mxu0 0.0
        %1635 = vmatprep.subr.mxu0 0.0
        %1636 = vmatpush2.msra.mxu0 0.0
        %1637 = vmatprep.subr.mxu0 0.0
        %1638 = vmatpush2.msra.mxu0 0.0
        %1639 = vmatprep.subr.mxu0 0.0
        %1640 = vmatpush2.msra.mxu0 0.0
        %1641 = vmatprep.subr.mxu0 0.0
        %1642 = vmatpush2.msra.mxu0 0.0
        %1643 = vmatprep.subr.mxu0 0.0
        %1644 = vmatpush2.msra.mxu0 0.0
        %1645 = vmatprep.subr.mxu0 0.0
        %1646 = vmatpush2.msra.mxu0 0.0
        %1647 = vmatprep.subr.mxu0 0.0
        %1648 = vmatpush2.msra.mxu0 0.0
        %1649 = vmatprep.subr.mxu0 0.0
        %1650 = vmatpush2.msra.mxu0 0.0
        %1651 = vmatprep.subr.mxu0 0.0
        %1652 = vmatpush2.msra.mxu0 0.0
        %1653 = vmatprep.subr.mxu0 0.0
        %1654 = vmatpush2.msra.mxu0 0.0
        %1655 = vmatprep.subr.mxu0 0.0
        %1656 = vmatpush2.msra.mxu0 0.0
        %1657 = vmatprep.subr.mxu0 0.0
        %1658 = vmatpush2.msra.mxu0 0.0
        %1659 = vmatprep.subr.mxu0 0.0
        %1660 = vmatpush2.msra.mxu0 0.0
        %1661 = vmatprep.subr.mxu0 0.0
        %1662 = vmatpush2.msra.mxu0 0.0
        %1663 = vmatprep.subr.mxu0 0.0
        %1664 = vmatpush2.msra.mxu0 0.0
        %1665 = vmatprep.mubr.f32.mxu0 0.0
        %1666 = vmatmul.mubr.f32.gmra.mxu0 0.0
        %v1667 = vpop.f32.mrf.mxu0
        %v1668 = vadd.f32 %v1508, %v1667
        %v1669 = vpop.f32.mrf.mxu0
        %1670 = vmatprep.mubr.f32.mxu0 0.0
        %1671 = vmatmul.mubr.f32.gmra.mxu0 0.0
        %v1672 = vpop.f32.mrf.mxu0
        %v1673 = vadd.f32 %v1508, %v1672
        %v1674 = vpop.f32.mrf.mxu0
        %1675 = vmatprep.mubr.f32.mxu0 0.0
        %1676 = vmatmul.mubr.f32.gmra.mxu0 0.0
        %v1677 = vpop.f32.mrf.mxu0
        %v1678 = vadd.f32 %v1508, %v1677
        %v1679 = vpop.f32.mrf.mxu0
        %1680 = vmatprep.mubr.f32.mxu0 0.0
        %1681 = vmatmul.mubr.f32.gmra.mxu0 0.0
        %v1682 = vpop.f32.mrf.mxu0
        %v1683 = vadd.f32 %v1508, %v1682
        %v1684 = vpop.f32.mrf.mxu0
        %1685 = vdwg.mxu0
        %v1686 = vadd.f32 %v1484, %v1579
        %v1687 = vadd.f32 %v1487, %v1585
        %v1688 = vadd.f32 %v1490, %v1591
        %v1689 = vadd.f32 %v1493, %v1597
        %v1690 = vxor.u32 %v1686, 2147483648
        %v1691 = vxor.u32 %v1687, 2147483648
        %v1692 = vxor.u32 %v1688, 2147483648
        %v1693 = vxor.u32 %v1689, 2147483648
        %v1694 = vmul.f32 %v1690, 1.442695
        %v1695 = vpow.pop %v1694
        %v1696 = vmul.f32 %v1691, 1.442695
        %v1697 = vpow.pop %v1696
        %v1698 = vmul.f32 %v1692, 1.442695
        %v1699 = vpow.pop %v1698
        %v1700 = vmul.f32 %v1693, 1.442695
        %v1701 = vpow.pop %v1700
        %v1702 = vadd.f32 %v1695, 1.0
        %v1703 = vadd.f32 %v1697, 1.0
        %v1704 = vadd.f32 %v1699, 1.0
        %v1705 = vadd.f32 %v1701, 1.0
        %v1706 = vrcp.pop %v1702
        %v1707 = vmul.f32 1.0, %v1706
        %v1708 = vrcp.pop %v1703
        %v1709 = vmul.f32 1.0, %v1708
        %v1710 = vrcp.pop %v1704
        %v1711 = vmul.f32 1.0, %v1710
        %v1712 = vrcp.pop %v1705
        %v1713 = vmul.f32 1.0, %v1712
        %v1714 = vadd.f32 %v1485, %v1581
        %v1715 = vadd.f32 %v1488, %v1587
        %v1716 = vadd.f32 %v1491, %v1593
        %v1717 = vadd.f32 %v1494, %v1599
        %v1718 = vxor.u32 %v1714, 2147483648
        %v1719 = vxor.u32 %v1715, 2147483648
        %v1720 = vxor.u32 %v1716, 2147483648
        %v1721 = vxor.u32 %v1717, 2147483648
        %v1722 = vmul.f32 %v1718, 1.442695
        %v1723 = vpow.pop %v1722
        %v1724 = vmul.f32 %v1719, 1.442695
        %v1725 = vpow.pop %v1724
        %v1726 = vmul.f32 %v1720, 1.442695
        %v1727 = vpow.pop %v1726
        %v1728 = vmul.f32 %v1721, 1.442695
        %v1729 = vpow.pop %v1728
        %v1730 = vadd.f32 %v1723, 1.0
        %v1731 = vadd.f32 %v1725, 1.0
        %v1732 = vadd.f32 %v1727, 1.0
        %v1733 = vadd.f32 %v1729, 1.0
        %v1734 = vrcp.pop %v1730
        %v1735 = vmul.f32 1.0, %v1734
        %v1736 = vrcp.pop %v1731
        %v1737 = vmul.f32 1.0, %v1736
        %v1738 = vrcp.pop %v1732
        %v1739 = vmul.f32 1.0, %v1738
        %v1740 = vrcp.pop %v1733
        %v1741 = vmul.f32 1.0, %v1740
        %v1742 = vmul.f32 %v1707, %v1668
        %v1743 = vmul.f32 %v1709, %v1673
        %v1744 = vmul.f32 %v1711, %v1678
        %v1745 = vmul.f32 %v1713, %v1683
        %v1746 = vadd.f32 %v1486, %v1742
        %v1747 = vadd.f32 %v1489, %v1743
        %v1748 = vadd.f32 %v1492, %v1744
        %v1749 = vadd.f32 %v1495, %v1745
        %v1750 = vtanh.pop %v1746
        %v1751 = vtanh.pop %v1747
        %v1752 = vtanh.pop %v1748
        %v1753 = vtanh.pop %v1749
        %v1754 = vsub.f32 1.0, %v1735
        %v1755 = vsub.f32 1.0, %v1737
        %v1756 = vsub.f32 1.0, %v1739
        %v1757 = vsub.f32 1.0, %v1741
        %v1758 = vmul.f32 %v1754, %v1750
        %v1759 = vmul.f32 %v1755, %v1751
        %v1760 = vmul.f32 %v1756, %v1752
        %v1761 = vmul.f32 %v1757, %v1753
        %v1762 = vmul.f32 %v1735, 0.0
        %v1763 = vmul.f32 %v1737, 0.0
        %v1764 = vmul.f32 %v1739, 0.0
        %v1765 = vmul.f32 %v1741, 0.0
        %v1766 = vadd.f32 %v1758, %v1762
        %v1767 = vadd.f32 %v1759, %v1763
        %v1768 = vadd.f32 %v1760, %v1764
        %v1769 = vadd.f32 %v1761, %v1765
        %s1770 = smul.u32 4, 3
        %s1771 = smul.addr %s1770, 8
        %s1772 = scalar_lea.vmem [#allocation2], %s1771
        %v1773 = vld [vmem:[%s1772] sm:$0xff]
        %v1774 = vld [vmem:[%s1772 + $0x8] sm:$0xff]
        %v1775 = vld [vmem:[%s1772 + $0x10] sm:$0xff]
        %v1776 = vld [vmem:[%s1772 + $0x18] sm:$0xff]
        %v1777 = vld [vmem:[%s1772 + $0x20] sm:$0xff]
        %v1778 = vld [vmem:[%s1772 + $0x28] sm:$0xff]
        %v1779 = vld [vmem:[%s1772 + $0x30] sm:$0xff]
        %v1780 = vld [vmem:[%s1772 + $0x38] sm:$0xff]
        %v1781 = vld [vmem:[%s1772 + $0x40] sm:$0xff]
        %v1782 = vld [vmem:[%s1772 + $0x48] sm:$0xff]
        %v1783 = vld [vmem:[%s1772 + $0x50] sm:$0xff]
        %v1784 = vld [vmem:[%s1772 + $0x58] sm:$0xff]
        %1785 = vmatprep.subr.mxu0 %v474
        %1786 = vmatpush1.msra.mxu0 %v473
        %1787 = vmatprep.subr.mxu0 %v471
        %1788 = vmatpush1.msra.mxu0 %v470
        %1789 = vmatprep.subr.mxu0 %v468
        %1790 = vmatpush1.msra.mxu0 %v467
        %1791 = vmatprep.subr.mxu0 %v465
        %1792 = vmatpush1.msra.mxu0 %v464
        %1793 = vmatprep.subr.mxu0 %v462
        %1794 = vmatpush1.msra.mxu0 %v461
        %1795 = vmatprep.subr.mxu0 %v459
        %1796 = vmatpush1.msra.mxu0 %v458
        %1797 = vmatprep.subr.mxu0 %v456
        %1798 = vmatpush1.msra.mxu0 %v455
        %1799 = vmatprep.subr.mxu0 %v453
        %1800 = vmatpush1.msra.mxu0 %v452
        %1801 = vmatprep.subr.mxu0 %v450
        %1802 = vmatpush1.msra.mxu0 %v449
        %1803 = vmatprep.subr.mxu0 %v447
        %1804 = vmatpush1.msra.mxu0 %v446
        %1805 = vmatprep.subr.mxu0 %v444
        %1806 = vmatpush1.msra.mxu0 %v443
        %1807 = vmatprep.subr.mxu0 %v441
        %1808 = vmatpush1.msra.mxu0 %v440
        %1809 = vmatprep.subr.mxu0 %v438
        %1810 = vmatpush1.msra.mxu0 %v437
        %1811 = vmatprep.subr.mxu0 %v435
        %1812 = vmatpush1.msra.mxu0 %v434
        %1813 = vmatprep.subr.mxu0 %v432
        %1814 = vmatpush1.msra.mxu0 %v431
        %1815 = vmatprep.subr.mxu0 %v429
        %1816 = vmatpush1.msra.mxu0 %v428
        %1817 = vmatprep.subr.mxu0 0.0
        %1818 = vmatpush2.msra.mxu0 0.0
        %1819 = vmatprep.subr.mxu0 0.0
        %1820 = vmatpush2.msra.mxu0 0.0
        %1821 = vmatprep.subr.mxu0 0.0
        %1822 = vmatpush2.msra.mxu0 0.0
        %1823 = vmatprep.subr.mxu0 0.0
        %1824 = vmatpush2.msra.mxu0 0.0
        %1825 = vmatprep.subr.mxu0 0.0
        %1826 = vmatpush2.msra.mxu0 0.0
        %1827 = vmatprep.subr.mxu0 0.0
        %1828 = vmatpush2.msra.mxu0 0.0
        %1829 = vmatprep.subr.mxu0 0.0
        %1830 = vmatpush2.msra.mxu0 0.0
        %1831 = vmatprep.subr.mxu0 0.0
        %1832 = vmatpush2.msra.mxu0 0.0
        %1833 = vmatprep.subr.mxu0 0.0
        %1834 = vmatpush2.msra.mxu0 0.0
        %1835 = vmatprep.subr.mxu0 0.0
        %1836 = vmatpush2.msra.mxu0 0.0
        %1837 = vmatprep.subr.mxu0 0.0
        %1838 = vmatpush2.msra.mxu0 0.0
        %1839 = vmatprep.subr.mxu0 0.0
        %1840 = vmatpush2.msra.mxu0 0.0
        %1841 = vmatprep.subr.mxu0 0.0
        %1842 = vmatpush2.msra.mxu0 0.0
        %1843 = vmatprep.subr.mxu0 0.0
        %1844 = vmatpush2.msra.mxu0 0.0
        %1845 = vmatprep.subr.mxu0 0.0
        %1846 = vmatpush2.msra.mxu0 0.0
        %1847 = vmatprep.subr.mxu0 0.0
        %1848 = vmatpush2.msra.mxu0 0.0
        %1849 = vmatprep.mubr.f32.mxu0 0.0
        %1850 = vmatmul.mubr.f32.gmra.mxu0 %v1766
        %v1851 = vpop.f32.mrf.mxu0
        %v1852 = vadd.f32 %v1500, %v1851
        %v1853 = vpop.f32.mrf.mxu0
        %v1854 = vadd.f32 %v1504, %v1853
        %1855 = vmatprep.mubr.f32.mxu0 0.0
        %1856 = vmatmul.mubr.f32.gmra.mxu0 %v1767
        %v1857 = vpop.f32.mrf.mxu0
        %v1858 = vadd.f32 %v1500, %v1857
        %v1859 = vpop.f32.mrf.mxu0
        %v1860 = vadd.f32 %v1504, %v1859
        %1861 = vmatprep.mubr.f32.mxu0 0.0
        %1862 = vmatmul.mubr.f32.gmra.mxu0 %v1768
        %v1863 = vpop.f32.mrf.mxu0
        %v1864 = vadd.f32 %v1500, %v1863
        %v1865 = vpop.f32.mrf.mxu0
        %v1866 = vadd.f32 %v1504, %v1865
        %1867 = vmatprep.mubr.f32.mxu0 0.0
        %1868 = vmatmul.mubr.f32.gmra.mxu0 %v1769
        %v1869 = vpop.f32.mrf.mxu0
        %v1870 = vadd.f32 %v1500, %v1869
        %v1871 = vpop.f32.mrf.mxu0
        %v1872 = vadd.f32 %v1504, %v1871
        %1873 = vdwg.mxu0
        %1874 = vmatprep.subr.mxu0 0.0
        %1875 = vmatpush1.msra.mxu0 %v475
        %1876 = vmatprep.subr.mxu0 0.0
        %1877 = vmatpush1.msra.mxu0 %v472
        %1878 = vmatprep.subr.mxu0 0.0
        %1879 = vmatpush1.msra.mxu0 %v469
        %1880 = vmatprep.subr.mxu0 0.0
        %1881 = vmatpush1.msra.mxu0 %v466
        %1882 = vmatprep.subr.mxu0 0.0
        %1883 = vmatpush1.msra.mxu0 %v463
        %1884 = vmatprep.subr.mxu0 0.0
        %1885 = vmatpush1.msra.mxu0 %v460
        %1886 = vmatprep.subr.mxu0 0.0
        %1887 = vmatpush1.msra.mxu0 %v457
        %1888 = vmatprep.subr.mxu0 0.0
        %1889 = vmatpush1.msra.mxu0 %v454
        %1890 = vmatprep.subr.mxu0 0.0
        %1891 = vmatpush1.msra.mxu0 %v451
        %1892 = vmatprep.subr.mxu0 0.0
        %1893 = vmatpush1.msra.mxu0 %v448
        %1894 = vmatprep.subr.mxu0 0.0
        %1895 = vmatpush1.msra.mxu0 %v445
        %1896 = vmatprep.subr.mxu0 0.0
        %1897 = vmatpush1.msra.mxu0 %v442
        %1898 = vmatprep.subr.mxu0 0.0
        %1899 = vmatpush1.msra.mxu0 %v439
        %1900 = vmatprep.subr.mxu0 0.0
        %1901 = vmatpush1.msra.mxu0 %v436
        %1902 = vmatprep.subr.mxu0 0.0
        %1903 = vmatpush1.msra.mxu0 %v433
        %1904 = vmatprep.subr.mxu0 0.0
        %1905 = vmatpush1.msra.mxu0 %v430
        %1906 = vmatprep.subr.mxu0 0.0
        %1907 = vmatpush2.msra.mxu0 0.0
        %1908 = vmatprep.subr.mxu0 0.0
        %1909 = vmatpush2.msra.mxu0 0.0
        %1910 = vmatprep.subr.mxu0 0.0
        %1911 = vmatpush2.msra.mxu0 0.0
        %1912 = vmatprep.subr.mxu0 0.0
        %1913 = vmatpush2.msra.mxu0 0.0
        %1914 = vmatprep.subr.mxu0 0.0
        %1915 = vmatpush2.msra.mxu0 0.0
        %1916 = vmatprep.subr.mxu0 0.0
        %1917 = vmatpush2.msra.mxu0 0.0
        %1918 = vmatprep.subr.mxu0 0.0
        %1919 = vmatpush2.msra.mxu0 0.0
        %1920 = vmatprep.subr.mxu0 0.0
        %1921 = vmatpush2.msra.mxu0 0.0
        %1922 = vmatprep.subr.mxu0 0.0
        %1923 = vmatpush2.msra.mxu0 0.0
        %1924 = vmatprep.subr.mxu0 0.0
        %1925 = vmatpush2.msra.mxu0 0.0
        %1926 = vmatprep.subr.mxu0 0.0
        %1927 = vmatpush2.msra.mxu0 0.0
        %1928 = vmatprep.subr.mxu0 0.0
        %1929 = vmatpush2.msra.mxu0 0.0
        %1930 = vmatprep.subr.mxu0 0.0
        %1931 = vmatpush2.msra.mxu0 0.0
        %1932 = vmatprep.subr.mxu0 0.0
        %1933 = vmatpush2.msra.mxu0 0.0
        %1934 = vmatprep.subr.mxu0 0.0
        %1935 = vmatpush2.msra.mxu0 0.0
        %1936 = vmatprep.subr.mxu0 0.0
        %1937 = vmatpush2.msra.mxu0 0.0
        %1938 = vmatprep.mubr.f32.mxu0 0.0
        %1939 = vmatmul.mubr.f32.gmra.mxu0 %v1766
        %v1940 = vpop.f32.mrf.mxu0
        %v1941 = vadd.f32 %v1508, %v1940
        %v1942 = vpop.f32.mrf.mxu0
        %1943 = vmatprep.mubr.f32.mxu0 0.0
        %1944 = vmatmul.mubr.f32.gmra.mxu0 %v1767
        %v1945 = vpop.f32.mrf.mxu0
        %v1946 = vadd.f32 %v1508, %v1945
        %v1947 = vpop.f32.mrf.mxu0
        %1948 = vmatprep.mubr.f32.mxu0 0.0
        %1949 = vmatmul.mubr.f32.gmra.mxu0 %v1768
        %v1950 = vpop.f32.mrf.mxu0
        %v1951 = vadd.f32 %v1508, %v1950
        %v1952 = vpop.f32.mrf.mxu0
        %1953 = vmatprep.mubr.f32.mxu0 0.0
        %1954 = vmatmul.mubr.f32.gmra.mxu0 %v1769
        %v1955 = vpop.f32.mrf.mxu0
        %v1956 = vadd.f32 %v1508, %v1955
        %v1957 = vpop.f32.mrf.mxu0
        %1958 = vdwg.mxu0
        %v1959 = vadd.f32 %v1773, %v1852
        %v1960 = vadd.f32 %v1776, %v1858
        %v1961 = vadd.f32 %v1779, %v1864
        %v1962 = vadd.f32 %v1782, %v1870
        %v1963 = vxor.u32 %v1959, 2147483648
        %v1964 = vxor.u32 %v1960, 2147483648
        %v1965 = vxor.u32 %v1961, 2147483648
        %v1966 = vxor.u32 %v1962, 2147483648
        %v1967 = vmul.f32 %v1963, 1.442695
        %v1968 = vpow.pop %v1967
        %v1969 = vmul.f32 %v1964, 1.442695
        %v1970 = vpow.pop %v1969
        %v1971 = vmul.f32 %v1965, 1.442695
        %v1972 = vpow.pop %v1971
        %v1973 = vmul.f32 %v1966, 1.442695
        %v1974 = vpow.pop %v1973
        %v1975 = vadd.f32 %v1968, 1.0
        %v1976 = vadd.f32 %v1970, 1.0
        %v1977 = vadd.f32 %v1972, 1.0
        %v1978 = vadd.f32 %v1974, 1.0
        %v1979 = vrcp.pop %v1975
        %v1980 = vmul.f32 1.0, %v1979
        %v1981 = vrcp.pop %v1976
        %v1982 = vmul.f32 1.0, %v1981
        %v1983 = vrcp.pop %v1977
        %v1984 = vmul.f32 1.0, %v1983
        %v1985 = vrcp.pop %v1978
        %v1986 = vmul.f32 1.0, %v1985
        %v1987 = vadd.f32 %v1774, %v1854
        %v1988 = vadd.f32 %v1777, %v1860
        %v1989 = vadd.f32 %v1780, %v1866
        %v1990 = vadd.f32 %v1783, %v1872
        %v1991 = vxor.u32 %v1987, 2147483648
        %v1992 = vxor.u32 %v1988, 2147483648
        %v1993 = vxor.u32 %v1989, 2147483648
        %v1994 = vxor.u32 %v1990, 2147483648
        %v1995 = vmul.f32 %v1991, 1.442695
        %v1996 = vpow.pop %v1995
        %v1997 = vmul.f32 %v1992, 1.442695
        %v1998 = vpow.pop %v1997
        %v1999 = vmul.f32 %v1993, 1.442695
        %v2000 = vpow.pop %v1999
        %v2001 = vmul.f32 %v1994, 1.442695
        %v2002 = vpow.pop %v2001
        %v2003 = vadd.f32 %v1996, 1.0
        %v2004 = vadd.f32 %v1998, 1.0
        %v2005 = vadd.f32 %v2000, 1.0
        %v2006 = vadd.f32 %v2002, 1.0
        %v2007 = vrcp.pop %v2003
        %v2008 = vmul.f32 1.0, %v2007
        %v2009 = vrcp.pop %v2004
        %v2010 = vmul.f32 1.0, %v2009
        %v2011 = vrcp.pop %v2005
        %v2012 = vmul.f32 1.0, %v2011
        %v2013 = vrcp.pop %v2006
        %v2014 = vmul.f32 1.0, %v2013
        %v2015 = vmul.f32 %v1980, %v1941
        %v2016 = vmul.f32 %v1982, %v1946
        %v2017 = vmul.f32 %v1984, %v1951
        %v2018 = vmul.f32 %v1986, %v1956
        %v2019 = vadd.f32 %v1775, %v2015
        %v2020 = vadd.f32 %v1778, %v2016
        %v2021 = vadd.f32 %v1781, %v2017
        %v2022 = vadd.f32 %v1784, %v2018
        %v2023 = vtanh.pop %v2019
        %v2024 = vtanh.pop %v2020
        %v2025 = vtanh.pop %v2021
        %v2026 = vtanh.pop %v2022
        %v2027 = vsub.f32 1.0, %v2008
        %v2028 = vsub.f32 1.0, %v2010
        %v2029 = vsub.f32 1.0, %v2012
        %v2030 = vsub.f32 1.0, %v2014
        %v2031 = vmul.f32 %v2027, %v2023
        %v2032 = vmul.f32 %v2028, %v2024
        %v2033 = vmul.f32 %v2029, %v2025
        %v2034 = vmul.f32 %v2030, %v2026
        %v2035 = vmul.f32 %v2008, %v1766
        %v2036 = vmul.f32 %v2010, %v1767
        %v2037 = vmul.f32 %v2012, %v1768
        %v2038 = vmul.f32 %v2014, %v1769
        %v2039 = vadd.f32 %v2031, %v2035
        %v2040 = vadd.f32 %v2032, %v2036
        %v2041 = vadd.f32 %v2033, %v2037
        %v2042 = vadd.f32 %v2034, %v2038
        %s2043 = smul.u32 8, 3
        %s2044 = smul.addr %s2043, 8
        %s2045 = scalar_lea.vmem [#allocation2], %s2044
        %v2046 = vld [vmem:[%s2045] sm:$0xff]
        %v2047 = vld [vmem:[%s2045 + $0x8] sm:$0xff]
        %v2048 = vld [vmem:[%s2045 + $0x10] sm:$0xff]
        %v2049 = vld [vmem:[%s2045 + $0x18] sm:$0xff]
        %v2050 = vld [vmem:[%s2045 + $0x20] sm:$0xff]
        %v2051 = vld [vmem:[%s2045 + $0x28] sm:$0xff]
        %v2052 = vld [vmem:[%s2045 + $0x30] sm:$0xff]
        %v2053 = vld [vmem:[%s2045 + $0x38] sm:$0xff]
        %v2054 = vld [vmem:[%s2045 + $0x40] sm:$0xff]
        %v2055 = vld [vmem:[%s2045 + $0x48] sm:$0xff]
        %v2056 = vld [vmem:[%s2045 + $0x50] sm:$0xff]
        %v2057 = vld [vmem:[%s2045 + $0x58] sm:$0xff]
        %2058 = vmatprep.subr.mxu0 %v474
        %2059 = vmatpush1.msra.mxu0 %v473
        %2060 = vmatprep.subr.mxu0 %v471
        %2061 = vmatpush1.msra.mxu0 %v470
        %2062 = vmatprep.subr.mxu0 %v468
        %2063 = vmatpush1.msra.mxu0 %v467
        %2064 = vmatprep.subr.mxu0 %v465
        %2065 = vmatpush1.msra.mxu0 %v464
        %2066 = vmatprep.subr.mxu0 %v462
        %2067 = vmatpush1.msra.mxu0 %v461
        %2068 = vmatprep.subr.mxu0 %v459
        %2069 = vmatpush1.msra.mxu0 %v458
        %2070 = vmatprep.subr.mxu0 %v456
        %2071 = vmatpush1.msra.mxu0 %v455
        %2072 = vmatprep.subr.mxu0 %v453
        %2073 = vmatpush1.msra.mxu0 %v452
        %2074 = vmatprep.subr.mxu0 %v450
        %2075 = vmatpush1.msra.mxu0 %v449
        %2076 = vmatprep.subr.mxu0 %v447
        %2077 = vmatpush1.msra.mxu0 %v446
        %2078 = vmatprep.subr.mxu0 %v444
        %2079 = vmatpush1.msra.mxu0 %v443
        %2080 = vmatprep.subr.mxu0 %v441
        %2081 = vmatpush1.msra.mxu0 %v440
        %2082 = vmatprep.subr.mxu0 %v438
        %2083 = vmatpush1.msra.mxu0 %v437
        %2084 = vmatprep.subr.mxu0 %v435
        %2085 = vmatpush1.msra.mxu0 %v434
        %2086 = vmatprep.subr.mxu0 %v432
        %2087 = vmatpush1.msra.mxu0 %v431
        %2088 = vmatprep.subr.mxu0 %v429
        %2089 = vmatpush1.msra.mxu0 %v428
        %2090 = vmatprep.subr.mxu0 0.0
        %2091 = vmatpush2.msra.mxu0 0.0
        %2092 = vmatprep.subr.mxu0 0.0
        %2093 = vmatpush2.msra.mxu0 0.0
        %2094 = vmatprep.subr.mxu0 0.0
        %2095 = vmatpush2.msra.mxu0 0.0
        %2096 = vmatprep.subr.mxu0 0.0
        %2097 = vmatpush2.msra.mxu0 0.0
        %2098 = vmatprep.subr.mxu0 0.0
        %2099 = vmatpush2.msra.mxu0 0.0
        %2100 = vmatprep.subr.mxu0 0.0
        %2101 = vmatpush2.msra.mxu0 0.0
        %2102 = vmatprep.subr.mxu0 0.0
        %2103 = vmatpush2.msra.mxu0 0.0
        %2104 = vmatprep.subr.mxu0 0.0
        %2105 = vmatpush2.msra.mxu0 0.0
        %2106 = vmatprep.subr.mxu0 0.0
        %2107 = vmatpush2.msra.mxu0 0.0
        %2108 = vmatprep.subr.mxu0 0.0
        %2109 = vmatpush2.msra.mxu0 0.0
        %2110 = vmatprep.subr.mxu0 0.0
        %2111 = vmatpush2.msra.mxu0 0.0
        %2112 = vmatprep.subr.mxu0 0.0
        %2113 = vmatpush2.msra.mxu0 0.0
        %2114 = vmatprep.subr.mxu0 0.0
        %2115 = vmatpush2.msra.mxu0 0.0
        %2116 = vmatprep.subr.mxu0 0.0
        %2117 = vmatpush2.msra.mxu0 0.0
        %2118 = vmatprep.subr.mxu0 0.0
        %2119 = vmatpush2.msra.mxu0 0.0
        %2120 = vmatprep.subr.mxu0 0.0
        %2121 = vmatpush2.msra.mxu0 0.0
        %2122 = vmatprep.mubr.f32.mxu0 0.0
        %2123 = vmatmul.mubr.f32.gmra.mxu0 %v2039
        %v2124 = vpop.f32.mrf.mxu0
        %v2125 = vadd.f32 %v1500, %v2124
        %v2126 = vpop.f32.mrf.mxu0
        %v2127 = vadd.f32 %v1504, %v2126
        %2128 = vmatprep.mubr.f32.mxu0 0.0
        %2129 = vmatmul.mubr.f32.gmra.mxu0 %v2040
        %v2130 = vpop.f32.mrf.mxu0
        %v2131 = vadd.f32 %v1500, %v2130
        %v2132 = vpop.f32.mrf.mxu0
        %v2133 = vadd.f32 %v1504, %v2132
        %2134 = vmatprep.mubr.f32.mxu0 0.0
        %2135 = vmatmul.mubr.f32.gmra.mxu0 %v2041
        %v2136 = vpop.f32.mrf.mxu0
        %v2137 = vadd.f32 %v1500, %v2136
        %v2138 = vpop.f32.mrf.mxu0
        %v2139 = vadd.f32 %v1504, %v2138
        %2140 = vmatprep.mubr.f32.mxu0 0.0
        %2141 = vmatmul.mubr.f32.gmra.mxu0 %v2042
        %v2142 = vpop.f32.mrf.mxu0
        %v2143 = vadd.f32 %v1500, %v2142
        %v2144 = vpop.f32.mrf.mxu0
        %v2145 = vadd.f32 %v1504, %v2144
        %2146 = vdwg.mxu0
        %2147 = vmatprep.subr.mxu0 0.0
        %2148 = vmatpush1.msra.mxu0 %v475
        %2149 = vmatprep.subr.mxu0 0.0
        %2150 = vmatpush1.msra.mxu0 %v472
        %2151 = vmatprep.subr.mxu0 0.0
        %2152 = vmatpush1.msra.mxu0 %v469
        %2153 = vmatprep.subr.mxu0 0.0
        %2154 = vmatpush1.msra.mxu0 %v466
        %2155 = vmatprep.subr.mxu0 0.0
        %2156 = vmatpush1.msra.mxu0 %v463
        %2157 = vmatprep.subr.mxu0 0.0
        %2158 = vmatpush1.msra.mxu0 %v460
        %2159 = vmatprep.subr.mxu0 0.0
        %2160 = vmatpush1.msra.mxu0 %v457
        %2161 = vmatprep.subr.mxu0 0.0
        %2162 = vmatpush1.msra.mxu0 %v454
        %2163 = vmatprep.subr.mxu0 0.0
        %2164 = vmatpush1.msra.mxu0 %v451
        %2165 = vmatprep.subr.mxu0 0.0
        %2166 = vmatpush1.msra.mxu0 %v448
        %2167 = vmatprep.subr.mxu0 0.0
        %2168 = vmatpush1.msra.mxu0 %v445
        %2169 = vmatprep.subr.mxu0 0.0
        %2170 = vmatpush1.msra.mxu0 %v442
        %2171 = vmatprep.subr.mxu0 0.0
        %2172 = vmatpush1.msra.mxu0 %v439
        %2173 = vmatprep.subr.mxu0 0.0
        %2174 = vmatpush1.msra.mxu0 %v436
        %2175 = vmatprep.subr.mxu0 0.0
        %2176 = vmatpush1.msra.mxu0 %v433
        %2177 = vmatprep.subr.mxu0 0.0
        %2178 = vmatpush1.msra.mxu0 %v430
        %2179 = vmatprep.subr.mxu0 0.0
        %2180 = vmatpush2.msra.mxu0 0.0
        %2181 = vmatprep.subr.mxu0 0.0
        %2182 = vmatpush2.msra.mxu0 0.0
        %2183 = vmatprep.subr.mxu0 0.0
        %2184 = vmatpush2.msra.mxu0 0.0
        %2185 = vmatprep.subr.mxu0 0.0
        %2186 = vmatpush2.msra.mxu0 0.0
        %2187 = vmatprep.subr.mxu0 0.0
        %2188 = vmatpush2.msra.mxu0 0.0
        %2189 = vmatprep.subr.mxu0 0.0
        %2190 = vmatpush2.msra.mxu0 0.0
        %2191 = vmatprep.subr.mxu0 0.0
        %2192 = vmatpush2.msra.mxu0 0.0
        %2193 = vmatprep.subr.mxu0 0.0
        %2194 = vmatpush2.msra.mxu0 0.0
        %2195 = vmatprep.subr.mxu0 0.0
        %2196 = vmatpush2.msra.mxu0 0.0
        %2197 = vmatprep.subr.mxu0 0.0
        %2198 = vmatpush2.msra.mxu0 0.0
        %2199 = vmatprep.subr.mxu0 0.0
        %2200 = vmatpush2.msra.mxu0 0.0
        %2201 = vmatprep.subr.mxu0 0.0
        %2202 = vmatpush2.msra.mxu0 0.0
        %2203 = vmatprep.subr.mxu0 0.0
        %2204 = vmatpush2.msra.mxu0 0.0
        %2205 = vmatprep.subr.mxu0 0.0
        %2206 = vmatpush2.msra.mxu0 0.0
        %2207 = vmatprep.subr.mxu0 0.0
        %2208 = vmatpush2.msra.mxu0 0.0
        %2209 = vmatprep.subr.mxu0 0.0
        %2210 = vmatpush2.msra.mxu0 0.0
        %2211 = vmatprep.mubr.f32.mxu0 0.0
        %2212 = vmatmul.mubr.f32.gmra.mxu0 %v2039
        %v2213 = vpop.f32.mrf.mxu0
        %v2214 = vadd.f32 %v1508, %v2213
        %v2215 = vpop.f32.mrf.mxu0
        %2216 = vmatprep.mubr.f32.mxu0 0.0
        %2217 = vmatmul.mubr.f32.gmra.mxu0 %v2040
        %v2218 = vpop.f32.mrf.mxu0
        %v2219 = vadd.f32 %v1508, %v2218
        %v2220 = vpop.f32.mrf.mxu0
        %2221 = vmatprep.mubr.f32.mxu0 0.0
        %2222 = vmatmul.mubr.f32.gmra.mxu0 %v2041
        %v2223 = vpop.f32.mrf.mxu0
        %v2224 = vadd.f32 %v1508, %v2223
        %v2225 = vpop.f32.mrf.mxu0
        %2226 = vmatprep.mubr.f32.mxu0 0.0
        %2227 = vmatmul.mubr.f32.gmra.mxu0 %v2042
        %v2228 = vpop.f32.mrf.mxu0
        %v2229 = vadd.f32 %v1508, %v2228
        %v2230 = vpop.f32.mrf.mxu0
        %2231 = vdwg.mxu0
        %v2232 = vadd.f32 %v2046, %v2125
        %v2233 = vadd.f32 %v2049, %v2131
        %v2234 = vadd.f32 %v2052, %v2137
        %v2235 = vadd.f32 %v2055, %v2143
        %v2236 = vxor.u32 %v2232, 2147483648
        %v2237 = vxor.u32 %v2233, 2147483648
        %v2238 = vxor.u32 %v2234, 2147483648
        %v2239 = vxor.u32 %v2235, 2147483648
        %v2240 = vmul.f32 %v2236, 1.442695
        %v2241 = vpow.pop %v2240
        %v2242 = vmul.f32 %v2237, 1.442695
        %v2243 = vpow.pop %v2242
        %v2244 = vmul.f32 %v2238, 1.442695
        %v2245 = vpow.pop %v2244
        %v2246 = vmul.f32 %v2239, 1.442695
        %v2247 = vpow.pop %v2246
        %v2248 = vadd.f32 %v2241, 1.0
        %v2249 = vadd.f32 %v2243, 1.0
        %v2250 = vadd.f32 %v2245, 1.0
        %v2251 = vadd.f32 %v2247, 1.0
        %v2252 = vrcp.pop %v2248
        %v2253 = vmul.f32 1.0, %v2252
        %v2254 = vrcp.pop %v2249
        %v2255 = vmul.f32 1.0, %v2254
        %v2256 = vrcp.pop %v2250
        %v2257 = vmul.f32 1.0, %v2256
        %v2258 = vrcp.pop %v2251
        %v2259 = vmul.f32 1.0, %v2258
        %v2260 = vadd.f32 %v2047, %v2127
        %v2261 = vadd.f32 %v2050, %v2133
        %v2262 = vadd.f32 %v2053, %v2139
        %v2263 = vadd.f32 %v2056, %v2145
        %v2264 = vxor.u32 %v2260, 2147483648
        %v2265 = vxor.u32 %v2261, 2147483648
        %v2266 = vxor.u32 %v2262, 2147483648
        %v2267 = vxor.u32 %v2263, 2147483648
        %v2268 = vmul.f32 %v2264, 1.442695
        %v2269 = vpow.pop %v2268
        %v2270 = vmul.f32 %v2265, 1.442695
        %v2271 = vpow.pop %v2270
        %v2272 = vmul.f32 %v2266, 1.442695
        %v2273 = vpow.pop %v2272
        %v2274 = vmul.f32 %v2267, 1.442695
        %v2275 = vpow.pop %v2274
        %v2276 = vadd.f32 %v2269, 1.0
        %v2277 = vadd.f32 %v2271, 1.0
        %v2278 = vadd.f32 %v2273, 1.0
        %v2279 = vadd.f32 %v2275, 1.0
        %v2280 = vrcp.pop %v2276
        %v2281 = vmul.f32 1.0, %v2280
        %v2282 = vrcp.pop %v2277
        %v2283 = vmul.f32 1.0, %v2282
        %v2284 = vrcp.pop %v2278
        %v2285 = vmul.f32 1.0, %v2284
        %v2286 = vrcp.pop %v2279
        %v2287 = vmul.f32 1.0, %v2286
        %v2288 = vmul.f32 %v2253, %v2214
        %v2289 = vmul.f32 %v2255, %v2219
        %v2290 = vmul.f32 %v2257, %v2224
        %v2291 = vmul.f32 %v2259, %v2229
        %v2292 = vadd.f32 %v2048, %v2288
        %v2293 = vadd.f32 %v2051, %v2289
        %v2294 = vadd.f32 %v2054, %v2290
        %v2295 = vadd.f32 %v2057, %v2291
        %v2296 = vtanh.pop %v2292
        %v2297 = vtanh.pop %v2293
        %v2298 = vtanh.pop %v2294
        %v2299 = vtanh.pop %v2295
        %v2300 = vsub.f32 1.0, %v2281
        %v2301 = vsub.f32 1.0, %v2283
        %v2302 = vsub.f32 1.0, %v2285
        %v2303 = vsub.f32 1.0, %v2287
        %v2304 = vmul.f32 %v2300, %v2296
        %v2305 = vmul.f32 %v2301, %v2297
        %v2306 = vmul.f32 %v2302, %v2298
        %v2307 = vmul.f32 %v2303, %v2299
        %v2308 = vmul.f32 %v2281, %v2039
        %v2309 = vmul.f32 %v2283, %v2040
        %v2310 = vmul.f32 %v2285, %v2041
        %v2311 = vmul.f32 %v2287, %v2042
        %v2312 = vadd.f32 %v2304, %v2308
        %v2313 = vadd.f32 %v2305, %v2309
        %v2314 = vadd.f32 %v2306, %v2310
        %v2315 = vadd.f32 %v2307, %v2311
        %s2316 = smul.u32 12, 3
        %s2317 = smul.addr %s2316, 8
        %s2318 = scalar_lea.vmem [#allocation2], %s2317
        %v2319 = vld [vmem:[%s2318] sm:$0xff]
        %v2320 = vld [vmem:[%s2318 + $0x8] sm:$0xff]
        %v2321 = vld [vmem:[%s2318 + $0x10] sm:$0xff]
        %v2322 = vld [vmem:[%s2318 + $0x18] sm:$0xff]
        %v2323 = vld [vmem:[%s2318 + $0x20] sm:$0xff]
        %v2324 = vld [vmem:[%s2318 + $0x28] sm:$0xff]
        %v2325 = vld [vmem:[%s2318 + $0x30] sm:$0xff]
        %v2326 = vld [vmem:[%s2318 + $0x38] sm:$0xff]
        %v2327 = vld [vmem:[%s2318 + $0x40] sm:$0xff]
        %v2328 = vld [vmem:[%s2318 + $0x48] sm:$0xff]
        %v2329 = vld [vmem:[%s2318 + $0x50] sm:$0xff]
        %v2330 = vld [vmem:[%s2318 + $0x58] sm:$0xff]
        %2331 = vmatprep.subr.mxu0 %v474
        %2332 = vmatpush1.msra.mxu0 %v473
        %2333 = vmatprep.subr.mxu0 %v471
        %2334 = vmatpush1.msra.mxu0 %v470
        %2335 = vmatprep.subr.mxu0 %v468
        %2336 = vmatpush1.msra.mxu0 %v467
        %2337 = vmatprep.subr.mxu0 %v465
        %2338 = vmatpush1.msra.mxu0 %v464
        %2339 = vmatprep.subr.mxu0 %v462
        %2340 = vmatpush1.msra.mxu0 %v461
        %2341 = vmatprep.subr.mxu0 %v459
        %2342 = vmatpush1.msra.mxu0 %v458
        %2343 = vmatprep.subr.mxu0 %v456
        %2344 = vmatpush1.msra.mxu0 %v455
        %2345 = vmatprep.subr.mxu0 %v453
        %2346 = vmatpush1.msra.mxu0 %v452
        %2347 = vmatprep.subr.mxu0 %v450
        %2348 = vmatpush1.msra.mxu0 %v449
        %2349 = vmatprep.subr.mxu0 %v447
        %2350 = vmatpush1.msra.mxu0 %v446
        %2351 = vmatprep.subr.mxu0 %v444
        %2352 = vmatpush1.msra.mxu0 %v443
        %2353 = vmatprep.subr.mxu0 %v441
        %2354 = vmatpush1.msra.mxu0 %v440
        %2355 = vmatprep.subr.mxu0 %v438
        %2356 = vmatpush1.msra.mxu0 %v437
        %2357 = vmatprep.subr.mxu0 %v435
        %2358 = vmatpush1.msra.mxu0 %v434
        %2359 = vmatprep.subr.mxu0 %v432
        %2360 = vmatpush1.msra.mxu0 %v431
        %2361 = vmatprep.subr.mxu0 %v429
        %2362 = vmatpush1.msra.mxu0 %v428
        %2363 = vmatprep.subr.mxu0 0.0
        %2364 = vmatpush2.msra.mxu0 0.0
        %2365 = vmatprep.subr.mxu0 0.0
        %2366 = vmatpush2.msra.mxu0 0.0
        %2367 = vmatprep.subr.mxu0 0.0
        %2368 = vmatpush2.msra.mxu0 0.0
        %2369 = vmatprep.subr.mxu0 0.0
        %2370 = vmatpush2.msra.mxu0 0.0
        %2371 = vmatprep.subr.mxu0 0.0
        %2372 = vmatpush2.msra.mxu0 0.0
        %2373 = vmatprep.subr.mxu0 0.0
        %2374 = vmatpush2.msra.mxu0 0.0
        %2375 = vmatprep.subr.mxu0 0.0
        %2376 = vmatpush2.msra.mxu0 0.0
        %2377 = vmatprep.subr.mxu0 0.0
        %2378 = vmatpush2.msra.mxu0 0.0
        %2379 = vmatprep.subr.mxu0 0.0
        %2380 = vmatpush2.msra.mxu0 0.0
        %2381 = vmatprep.subr.mxu0 0.0
        %2382 = vmatpush2.msra.mxu0 0.0
        %2383 = vmatprep.subr.mxu0 0.0
        %2384 = vmatpush2.msra.mxu0 0.0
        %2385 = vmatprep.subr.mxu0 0.0
        %2386 = vmatpush2.msra.mxu0 0.0
        %2387 = vmatprep.subr.mxu0 0.0
        %2388 = vmatpush2.msra.mxu0 0.0
        %2389 = vmatprep.subr.mxu0 0.0
        %2390 = vmatpush2.msra.mxu0 0.0
        %2391 = vmatprep.subr.mxu0 0.0
        %2392 = vmatpush2.msra.mxu0 0.0
        %2393 = vmatprep.subr.mxu0 0.0
        %2394 = vmatpush2.msra.mxu0 0.0
        %2395 = vmatprep.mubr.f32.mxu0 0.0
        %2396 = vmatmul.mubr.f32.gmra.mxu0 %v2312
        %v2397 = vpop.f32.mrf.mxu0
        %v2398 = vadd.f32 %v1500, %v2397
        %v2399 = vpop.f32.mrf.mxu0
        %v2400 = vadd.f32 %v1504, %v2399
        %2401 = vmatprep.mubr.f32.mxu0 0.0
        %2402 = vmatmul.mubr.f32.gmra.mxu0 %v2313
        %v2403 = vpop.f32.mrf.mxu0
        %v2404 = vadd.f32 %v1500, %v2403
        %v2405 = vpop.f32.mrf.mxu0
        %v2406 = vadd.f32 %v1504, %v2405
        %2407 = vmatprep.mubr.f32.mxu0 0.0
        %2408 = vmatmul.mubr.f32.gmra.mxu0 %v2314
        %v2409 = vpop.f32.mrf.mxu0
        %v2410 = vadd.f32 %v1500, %v2409
        %v2411 = vpop.f32.mrf.mxu0
        %v2412 = vadd.f32 %v1504, %v2411
        %2413 = vmatprep.mubr.f32.mxu0 0.0
        %2414 = vmatmul.mubr.f32.gmra.mxu0 %v2315
        %v2415 = vpop.f32.mrf.mxu0
        %v2416 = vadd.f32 %v1500, %v2415
        %v2417 = vpop.f32.mrf.mxu0
        %v2418 = vadd.f32 %v1504, %v2417
        %2419 = vdwg.mxu0
        %2420 = vmatprep.subr.mxu0 0.0
        %2421 = vmatpush1.msra.mxu0 %v475
        %2422 = vmatprep.subr.mxu0 0.0
        %2423 = vmatpush1.msra.mxu0 %v472
        %2424 = vmatprep.subr.mxu0 0.0
        %2425 = vmatpush1.msra.mxu0 %v469
        %2426 = vmatprep.subr.mxu0 0.0
        %2427 = vmatpush1.msra.mxu0 %v466
        %2428 = vmatprep.subr.mxu0 0.0
        %2429 = vmatpush1.msra.mxu0 %v463
        %2430 = vmatprep.subr.mxu0 0.0
        %2431 = vmatpush1.msra.mxu0 %v460
        %2432 = vmatprep.subr.mxu0 0.0
        %2433 = vmatpush1.msra.mxu0 %v457
        %2434 = vmatprep.subr.mxu0 0.0
        %2435 = vmatpush1.msra.mxu0 %v454
        %2436 = vmatprep.subr.mxu0 0.0
        %2437 = vmatpush1.msra.mxu0 %v451
        %2438 = vmatprep.subr.mxu0 0.0
        %2439 = vmatpush1.msra.mxu0 %v448
        %2440 = vmatprep.subr.mxu0 0.0
        %2441 = vmatpush1.msra.mxu0 %v445
        %2442 = vmatprep.subr.mxu0 0.0
        %2443 = vmatpush1.msra.mxu0 %v442
        %2444 = vmatprep.subr.mxu0 0.0
        %2445 = vmatpush1.msra.mxu0 %v439
        %2446 = vmatprep.subr.mxu0 0.0
        %2447 = vmatpush1.msra.mxu0 %v436
        %2448 = vmatprep.subr.mxu0 0.0
        %2449 = vmatpush1.msra.mxu0 %v433
        %2450 = vmatprep.subr.mxu0 0.0
        %2451 = vmatpush1.msra.mxu0 %v430
        %2452 = vmatprep.subr.mxu0 0.0
        %2453 = vmatpush2.msra.mxu0 0.0
        %2454 = vmatprep.subr.mxu0 0.0
        %2455 = vmatpush2.msra.mxu0 0.0
        %2456 = vmatprep.subr.mxu0 0.0
        %2457 = vmatpush2.msra.mxu0 0.0
        %2458 = vmatprep.subr.mxu0 0.0
        %2459 = vmatpush2.msra.mxu0 0.0
        %2460 = vmatprep.subr.mxu0 0.0
        %2461 = vmatpush2.msra.mxu0 0.0
        %2462 = vmatprep.subr.mxu0 0.0
        %2463 = vmatpush2.msra.mxu0 0.0
        %2464 = vmatprep.subr.mxu0 0.0
        %2465 = vmatpush2.msra.mxu0 0.0
        %2466 = vmatprep.subr.mxu0 0.0
        %2467 = vmatpush2.msra.mxu0 0.0
        %2468 = vmatprep.subr.mxu0 0.0
        %2469 = vmatpush2.msra.mxu0 0.0
        %2470 = vmatprep.subr.mxu0 0.0
        %2471 = vmatpush2.msra.mxu0 0.0
        %2472 = vmatprep.subr.mxu0 0.0
        %2473 = vmatpush2.msra.mxu0 0.0
        %2474 = vmatprep.subr.mxu0 0.0
        %2475 = vmatpush2.msra.mxu0 0.0
        %2476 = vmatprep.subr.mxu0 0.0
        %2477 = vmatpush2.msra.mxu0 0.0
        %2478 = vmatprep.subr.mxu0 0.0
        %2479 = vmatpush2.msra.mxu0 0.0
        %2480 = vmatprep.subr.mxu0 0.0
        %2481 = vmatpush2.msra.mxu0 0.0
        %2482 = vmatprep.subr.mxu0 0.0
        %2483 = vmatpush2.msra.mxu0 0.0
        %2484 = vmatprep.mubr.f32.mxu0 0.0
        %2485 = vmatmul.mubr.f32.gmra.mxu0 %v2312
        %v2486 = vpop.f32.mrf.mxu0
        %v2487 = vadd.f32 %v1508, %v2486
        %v2488 = vpop.f32.mrf.mxu0
        %2489 = vmatprep.mubr.f32.mxu0 0.0
        %2490 = vmatmul.mubr.f32.gmra.mxu0 %v2313
        %v2491 = vpop.f32.mrf.mxu0
        %v2492 = vadd.f32 %v1508, %v2491
        %v2493 = vpop.f32.mrf.mxu0
        %2494 = vmatprep.mubr.f32.mxu0 0.0
        %2495 = vmatmul.mubr.f32.gmra.mxu0 %v2314
        %v2496 = vpop.f32.mrf.mxu0
        %v2497 = vadd.f32 %v1508, %v2496
        %v2498 = vpop.f32.mrf.mxu0
        %2499 = vmatprep.mubr.f32.mxu0 0.0
        %2500 = vmatmul.mubr.f32.gmra.mxu0 %v2315
        %v2501 = vpop.f32.mrf.mxu0
        %v2502 = vadd.f32 %v1508, %v2501
        %v2503 = vpop.f32.mrf.mxu0
        %2504 = vdwg.mxu0
        %v2505 = vadd.f32 %v2319, %v2398
        %v2506 = vadd.f32 %v2322, %v2404
        %v2507 = vadd.f32 %v2325, %v2410
        %v2508 = vadd.f32 %v2328, %v2416
        %v2509 = vxor.u32 %v2505, 2147483648
        %v2510 = vxor.u32 %v2506, 2147483648
        %v2511 = vxor.u32 %v2507, 2147483648
        %v2512 = vxor.u32 %v2508, 2147483648
        %v2513 = vmul.f32 %v2509, 1.442695
        %v2514 = vpow.pop %v2513
        %v2515 = vmul.f32 %v2510, 1.442695
        %v2516 = vpow.pop %v2515
        %v2517 = vmul.f32 %v2511, 1.442695
        %v2518 = vpow.pop %v2517
        %v2519 = vmul.f32 %v2512, 1.442695
        %v2520 = vpow.pop %v2519
        %v2521 = vadd.f32 %v2514, 1.0
        %v2522 = vadd.f32 %v2516, 1.0
        %v2523 = vadd.f32 %v2518, 1.0
        %v2524 = vadd.f32 %v2520, 1.0
        %v2525 = vrcp.pop %v2521
        %v2526 = vmul.f32 1.0, %v2525
        %v2527 = vrcp.pop %v2522
        %v2528 = vmul.f32 1.0, %v2527
        %v2529 = vrcp.pop %v2523
        %v2530 = vmul.f32 1.0, %v2529
        %v2531 = vrcp.pop %v2524
        %v2532 = vmul.f32 1.0, %v2531
        %v2533 = vadd.f32 %v2320, %v2400
        %v2534 = vadd.f32 %v2323, %v2406
        %v2535 = vadd.f32 %v2326, %v2412
        %v2536 = vadd.f32 %v2329, %v2418
        %v2537 = vxor.u32 %v2533, 2147483648
        %v2538 = vxor.u32 %v2534, 2147483648
        %v2539 = vxor.u32 %v2535, 2147483648
        %v2540 = vxor.u32 %v2536, 2147483648
        %v2541 = vmul.f32 %v2537, 1.442695
        %v2542 = vpow.pop %v2541
        %v2543 = vmul.f32 %v2538, 1.442695
        %v2544 = vpow.pop %v2543
        %v2545 = vmul.f32 %v2539, 1.442695
        %v2546 = vpow.pop %v2545
        %v2547 = vmul.f32 %v2540, 1.442695
        %v2548 = vpow.pop %v2547
        %v2549 = vadd.f32 %v2542, 1.0
        %v2550 = vadd.f32 %v2544, 1.0
        %v2551 = vadd.f32 %v2546, 1.0
        %v2552 = vadd.f32 %v2548, 1.0
        %v2553 = vrcp.pop %v2549
        %v2554 = vmul.f32 1.0, %v2553
        %v2555 = vrcp.pop %v2550
        %v2556 = vmul.f32 1.0, %v2555
        %v2557 = vrcp.pop %v2551
        %v2558 = vmul.f32 1.0, %v2557
        %v2559 = vrcp.pop %v2552
        %v2560 = vmul.f32 1.0, %v2559
        %v2561 = vmul.f32 %v2526, %v2487
        %v2562 = vmul.f32 %v2528, %v2492
        %v2563 = vmul.f32 %v2530, %v2497
        %v2564 = vmul.f32 %v2532, %v2502
        %v2565 = vadd.f32 %v2321, %v2561
        %v2566 = vadd.f32 %v2324, %v2562
        %v2567 = vadd.f32 %v2327, %v2563
        %v2568 = vadd.f32 %v2330, %v2564
        %v2569 = vtanh.pop %v2565
        %v2570 = vtanh.pop %v2566
        %v2571 = vtanh.pop %v2567
        %v2572 = vtanh.pop %v2568
        %v2573 = vsub.f32 1.0, %v2554
        %v2574 = vsub.f32 1.0, %v2556
        %v2575 = vsub.f32 1.0, %v2558
        %v2576 = vsub.f32 1.0, %v2560
        %v2577 = vmul.f32 %v2573, %v2569
        %v2578 = vmul.f32 %v2574, %v2570
        %v2579 = vmul.f32 %v2575, %v2571
        %v2580 = vmul.f32 %v2576, %v2572
        %v2581 = vmul.f32 %v2554, %v2312
        %v2582 = vmul.f32 %v2556, %v2313
        %v2583 = vmul.f32 %v2558, %v2314
        %v2584 = vmul.f32 %v2560, %v2315
        %v2585 = vadd.f32 %v2577, %v2581
        %v2586 = vadd.f32 %v2578, %v2582
        %v2587 = vadd.f32 %v2579, %v2583
        %v2588 = vadd.f32 %v2580, %v2584
        %s2589 = smul.u32 16, 3
        %s2590 = smul.addr %s2589, 8
        %s2591 = scalar_lea.vmem [#allocation2], %s2590
        %v2592 = vld [vmem:[%s2591] sm:$0xff]
        %v2593 = vld [vmem:[%s2591 + $0x8] sm:$0xff]
        %v2594 = vld [vmem:[%s2591 + $0x10] sm:$0xff]
        %v2595 = vld [vmem:[%s2591 + $0x18] sm:$0xff]
        %v2596 = vld [vmem:[%s2591 + $0x20] sm:$0xff]
        %v2597 = vld [vmem:[%s2591 + $0x28] sm:$0xff]
        %v2598 = vld [vmem:[%s2591 + $0x30] sm:$0xff]
        %v2599 = vld [vmem:[%s2591 + $0x38] sm:$0xff]
        %v2600 = vld [vmem:[%s2591 + $0x40] sm:$0xff]
        %v2601 = vld [vmem:[%s2591 + $0x48] sm:$0xff]
        %v2602 = vld [vmem:[%s2591 + $0x50] sm:$0xff]
        %v2603 = vld [vmem:[%s2591 + $0x58] sm:$0xff]
        %2604 = vmatprep.subr.mxu0 %v474
        %2605 = vmatpush1.msra.mxu0 %v473
        %2606 = vmatprep.subr.mxu0 %v471
        %2607 = vmatpush1.msra.mxu0 %v470
        %2608 = vmatprep.subr.mxu0 %v468
        %2609 = vmatpush1.msra.mxu0 %v467
        %2610 = vmatprep.subr.mxu0 %v465
        %2611 = vmatpush1.msra.mxu0 %v464
        %2612 = vmatprep.subr.mxu0 %v462
        %2613 = vmatpush1.msra.mxu0 %v461
        %2614 = vmatprep.subr.mxu0 %v459
        %2615 = vmatpush1.msra.mxu0 %v458
        %2616 = vmatprep.subr.mxu0 %v456
        %2617 = vmatpush1.msra.mxu0 %v455
        %2618 = vmatprep.subr.mxu0 %v453
        %2619 = vmatpush1.msra.mxu0 %v452
        %2620 = vmatprep.subr.mxu0 %v450
        %2621 = vmatpush1.msra.mxu0 %v449
        %2622 = vmatprep.subr.mxu0 %v447
        %2623 = vmatpush1.msra.mxu0 %v446
        %2624 = vmatprep.subr.mxu0 %v444
        %2625 = vmatpush1.msra.mxu0 %v443
        %2626 = vmatprep.subr.mxu0 %v441
        %2627 = vmatpush1.msra.mxu0 %v440
        %2628 = vmatprep.subr.mxu0 %v438
        %2629 = vmatpush1.msra.mxu0 %v437
        %2630 = vmatprep.subr.mxu0 %v435
        %2631 = vmatpush1.msra.mxu0 %v434
        %2632 = vmatprep.subr.mxu0 %v432
        %2633 = vmatpush1.msra.mxu0 %v431
        %2634 = vmatprep.subr.mxu0 %v429
        %2635 = vmatpush1.msra.mxu0 %v428
        %2636 = vmatprep.subr.mxu0 0.0
        %2637 = vmatpush2.msra.mxu0 0.0
        %2638 = vmatprep.subr.mxu0 0.0
        %2639 = vmatpush2.msra.mxu0 0.0
        %2640 = vmatprep.subr.mxu0 0.0
        %2641 = vmatpush2.msra.mxu0 0.0
        %2642 = vmatprep.subr.mxu0 0.0
        %2643 = vmatpush2.msra.mxu0 0.0
        %2644 = vmatprep.subr.mxu0 0.0
        %2645 = vmatpush2.msra.mxu0 0.0
        %2646 = vmatprep.subr.mxu0 0.0
        %2647 = vmatpush2.msra.mxu0 0.0
        %2648 = vmatprep.subr.mxu0 0.0
        %2649 = vmatpush2.msra.mxu0 0.0
        %2650 = vmatprep.subr.mxu0 0.0
        %2651 = vmatpush2.msra.mxu0 0.0
        %2652 = vmatprep.subr.mxu0 0.0
        %2653 = vmatpush2.msra.mxu0 0.0
        %2654 = vmatprep.subr.mxu0 0.0
        %2655 = vmatpush2.msra.mxu0 0.0
        %2656 = vmatprep.subr.mxu0 0.0
        %2657 = vmatpush2.msra.mxu0 0.0
        %2658 = vmatprep.subr.mxu0 0.0
        %2659 = vmatpush2.msra.mxu0 0.0
        %2660 = vmatprep.subr.mxu0 0.0
        %2661 = vmatpush2.msra.mxu0 0.0
        %2662 = vmatprep.subr.mxu0 0.0
        %2663 = vmatpush2.msra.mxu0 0.0
        %2664 = vmatprep.subr.mxu0 0.0
        %2665 = vmatpush2.msra.mxu0 0.0
        %2666 = vmatprep.subr.mxu0 0.0
        %2667 = vmatpush2.msra.mxu0 0.0
        %2668 = vmatprep.mubr.f32.mxu0 0.0
        %2669 = vmatmul.mubr.f32.gmra.mxu0 %v2585
        %v2670 = vpop.f32.mrf.mxu0
        %v2671 = vadd.f32 %v1500, %v2670
        %v2672 = vpop.f32.mrf.mxu0
        %v2673 = vadd.f32 %v1504, %v2672
        %2674 = vmatprep.mubr.f32.mxu0 0.0
        %2675 = vmatmul.mubr.f32.gmra.mxu0 %v2586
        %v2676 = vpop.f32.mrf.mxu0
        %v2677 = vadd.f32 %v1500, %v2676
        %v2678 = vpop.f32.mrf.mxu0
        %v2679 = vadd.f32 %v1504, %v2678
        %2680 = vmatprep.mubr.f32.mxu0 0.0
        %2681 = vmatmul.mubr.f32.gmra.mxu0 %v2587
        %v2682 = vpop.f32.mrf.mxu0
        %v2683 = vadd.f32 %v1500, %v2682
        %v2684 = vpop.f32.mrf.mxu0
        %v2685 = vadd.f32 %v1504, %v2684
        %2686 = vmatprep.mubr.f32.mxu0 0.0
        %2687 = vmatmul.mubr.f32.gmra.mxu0 %v2588
        %v2688 = vpop.f32.mrf.mxu0
        %v2689 = vadd.f32 %v1500, %v2688
        %v2690 = vpop.f32.mrf.mxu0
        %v2691 = vadd.f32 %v1504, %v2690
        %2692 = vdwg.mxu0
        %2693 = vmatprep.subr.mxu0 0.0
        %2694 = vmatpush1.msra.mxu0 %v475
        %2695 = vmatprep.subr.mxu0 0.0
        %2696 = vmatpush1.msra.mxu0 %v472
        %2697 = vmatprep.subr.mxu0 0.0
        %2698 = vmatpush1.msra.mxu0 %v469
        %2699 = vmatprep.subr.mxu0 0.0
        %2700 = vmatpush1.msra.mxu0 %v466
        %2701 = vmatprep.subr.mxu0 0.0
        %2702 = vmatpush1.msra.mxu0 %v463
        %2703 = vmatprep.subr.mxu0 0.0
        %2704 = vmatpush1.msra.mxu0 %v460
        %2705 = vmatprep.subr.mxu0 0.0
        %2706 = vmatpush1.msra.mxu0 %v457
        %2707 = vmatprep.subr.mxu0 0.0
        %2708 = vmatpush1.msra.mxu0 %v454
        %2709 = vmatprep.subr.mxu0 0.0
        %2710 = vmatpush1.msra.mxu0 %v451
        %2711 = vmatprep.subr.mxu0 0.0
        %2712 = vmatpush1.msra.mxu0 %v448
        %2713 = vmatprep.subr.mxu0 0.0
        %2714 = vmatpush1.msra.mxu0 %v445
        %2715 = vmatprep.subr.mxu0 0.0
        %2716 = vmatpush1.msra.mxu0 %v442
        %2717 = vmatprep.subr.mxu0 0.0
        %2718 = vmatpush1.msra.mxu0 %v439
        %2719 = vmatprep.subr.mxu0 0.0
        %2720 = vmatpush1.msra.mxu0 %v436
        %2721 = vmatprep.subr.mxu0 0.0
        %2722 = vmatpush1.msra.mxu0 %v433
        %2723 = vmatprep.subr.mxu0 0.0
        %2724 = vmatpush1.msra.mxu0 %v430
        %2725 = vmatprep.subr.mxu0 0.0
        %2726 = vmatpush2.msra.mxu0 0.0
        %2727 = vmatprep.subr.mxu0 0.0
        %2728 = vmatpush2.msra.mxu0 0.0
        %2729 = vmatprep.subr.mxu0 0.0
        %2730 = vmatpush2.msra.mxu0 0.0
        %2731 = vmatprep.subr.mxu0 0.0
        %2732 = vmatpush2.msra.mxu0 0.0
        %2733 = vmatprep.subr.mxu0 0.0
        %2734 = vmatpush2.msra.mxu0 0.0
        %2735 = vmatprep.subr.mxu0 0.0
        %2736 = vmatpush2.msra.mxu0 0.0
        %2737 = vmatprep.subr.mxu0 0.0
        %2738 = vmatpush2.msra.mxu0 0.0
        %2739 = vmatprep.subr.mxu0 0.0
        %2740 = vmatpush2.msra.mxu0 0.0
        %2741 = vmatprep.subr.mxu0 0.0
        %2742 = vmatpush2.msra.mxu0 0.0
        %2743 = vmatprep.subr.mxu0 0.0
        %2744 = vmatpush2.msra.mxu0 0.0
        %2745 = vmatprep.subr.mxu0 0.0
        %2746 = vmatpush2.msra.mxu0 0.0
        %2747 = vmatprep.subr.mxu0 0.0
        %2748 = vmatpush2.msra.mxu0 0.0
        %2749 = vmatprep.subr.mxu0 0.0
        %2750 = vmatpush2.msra.mxu0 0.0
        %2751 = vmatprep.subr.mxu0 0.0
        %2752 = vmatpush2.msra.mxu0 0.0
        %2753 = vmatprep.subr.mxu0 0.0
        %2754 = vmatpush2.msra.mxu0 0.0
        %2755 = vmatprep.subr.mxu0 0.0
        %2756 = vmatpush2.msra.mxu0 0.0
        %2757 = vmatprep.mubr.f32.mxu0 0.0
        %2758 = vmatmul.mubr.f32.gmra.mxu0 %v2585
        %v2759 = vpop.f32.mrf.mxu0
        %v2760 = vadd.f32 %v1508, %v2759
        %v2761 = vpop.f32.mrf.mxu0
        %2762 = vmatprep.mubr.f32.mxu0 0.0
        %2763 = vmatmul.mubr.f32.gmra.mxu0 %v2586
        %v2764 = vpop.f32.mrf.mxu0
        %v2765 = vadd.f32 %v1508, %v2764
        %v2766 = vpop.f32.mrf.mxu0
        %2767 = vmatprep.mubr.f32.mxu0 0.0
        %2768 = vmatmul.mubr.f32.gmra.mxu0 %v2587
        %v2769 = vpop.f32.mrf.mxu0
        %v2770 = vadd.f32 %v1508, %v2769
        %v2771 = vpop.f32.mrf.mxu0
        %2772 = vmatprep.mubr.f32.mxu0 0.0
        %2773 = vmatmul.mubr.f32.gmra.mxu0 %v2588
        %v2774 = vpop.f32.mrf.mxu0
        %v2775 = vadd.f32 %v1508, %v2774
        %v2776 = vpop.f32.mrf.mxu0
        %2777 = vdwg.mxu0
        %v2778 = vadd.f32 %v2592, %v2671
        %v2779 = vadd.f32 %v2595, %v2677
        %v2780 = vadd.f32 %v2598, %v2683
        %v2781 = vadd.f32 %v2601, %v2689
        %v2782 = vxor.u32 %v2778, 2147483648
        %v2783 = vxor.u32 %v2779, 2147483648
        %v2784 = vxor.u32 %v2780, 2147483648
        %v2785 = vxor.u32 %v2781, 2147483648
        %v2786 = vmul.f32 %v2782, 1.442695
        %v2787 = vpow.pop %v2786
        %v2788 = vmul.f32 %v2783, 1.442695
        %v2789 = vpow.pop %v2788
        %v2790 = vmul.f32 %v2784, 1.442695
        %v2791 = vpow.pop %v2790
        %v2792 = vmul.f32 %v2785, 1.442695
        %v2793 = vpow.pop %v2792
        %v2794 = vadd.f32 %v2787, 1.0
        %v2795 = vadd.f32 %v2789, 1.0
        %v2796 = vadd.f32 %v2791, 1.0
        %v2797 = vadd.f32 %v2793, 1.0
        %v2798 = vrcp.pop %v2794
        %v2799 = vmul.f32 1.0, %v2798
        %v2800 = vrcp.pop %v2795
        %v2801 = vmul.f32 1.0, %v2800
        %v2802 = vrcp.pop %v2796
        %v2803 = vmul.f32 1.0, %v2802
        %v2804 = vrcp.pop %v2797
        %v2805 = vmul.f32 1.0, %v2804
        %v2806 = vadd.f32 %v2593, %v2673
        %v2807 = vadd.f32 %v2596, %v2679
        %v2808 = vadd.f32 %v2599, %v2685
        %v2809 = vadd.f32 %v2602, %v2691
        %v2810 = vxor.u32 %v2806, 2147483648
        %v2811 = vxor.u32 %v2807, 2147483648
        %v2812 = vxor.u32 %v2808, 2147483648
        %v2813 = vxor.u32 %v2809, 2147483648
        %v2814 = vmul.f32 %v2810, 1.442695
        %v2815 = vpow.pop %v2814
        %v2816 = vmul.f32 %v2811, 1.442695
        %v2817 = vpow.pop %v2816
        %v2818 = vmul.f32 %v2812, 1.442695
        %v2819 = vpow.pop %v2818
        %v2820 = vmul.f32 %v2813, 1.442695
        %v2821 = vpow.pop %v2820
        %v2822 = vadd.f32 %v2815, 1.0
        %v2823 = vadd.f32 %v2817, 1.0
        %v2824 = vadd.f32 %v2819, 1.0
        %v2825 = vadd.f32 %v2821, 1.0
        %v2826 = vrcp.pop %v2822
        %v2827 = vmul.f32 1.0, %v2826
        %v2828 = vrcp.pop %v2823
        %v2829 = vmul.f32 1.0, %v2828
        %v2830 = vrcp.pop %v2824
        %v2831 = vmul.f32 1.0, %v2830
        %v2832 = vrcp.pop %v2825
        %v2833 = vmul.f32 1.0, %v2832
        %v2834 = vmul.f32 %v2799, %v2760
        %v2835 = vmul.f32 %v2801, %v2765
        %v2836 = vmul.f32 %v2803, %v2770
        %v2837 = vmul.f32 %v2805, %v2775
        %v2838 = vadd.f32 %v2594, %v2834
        %v2839 = vadd.f32 %v2597, %v2835
        %v2840 = vadd.f32 %v2600, %v2836
        %v2841 = vadd.f32 %v2603, %v2837
        %v2842 = vtanh.pop %v2838
        %v2843 = vtanh.pop %v2839
        %v2844 = vtanh.pop %v2840
        %v2845 = vtanh.pop %v2841
        %v2846 = vsub.f32 1.0, %v2827
        %v2847 = vsub.f32 1.0, %v2829
        %v2848 = vsub.f32 1.0, %v2831
        %v2849 = vsub.f32 1.0, %v2833
        %v2850 = vmul.f32 %v2846, %v2842
        %v2851 = vmul.f32 %v2847, %v2843
        %v2852 = vmul.f32 %v2848, %v2844
        %v2853 = vmul.f32 %v2849, %v2845
        %v2854 = vmul.f32 %v2827, %v2585
        %v2855 = vmul.f32 %v2829, %v2586
        %v2856 = vmul.f32 %v2831, %v2587
        %v2857 = vmul.f32 %v2833, %v2588
        %v2858 = vadd.f32 %v2850, %v2854
        %v2859 = vadd.f32 %v2851, %v2855
        %v2860 = vadd.f32 %v2852, %v2856
        %v2861 = vadd.f32 %v2853, %v2857
        %s2862 = smul.u32 20, 3
        %s2863 = smul.addr %s2862, 8
        %s2864 = scalar_lea.vmem [#allocation2], %s2863
        %v2865 = vld [vmem:[%s2864] sm:$0xff]
        %v2866 = vld [vmem:[%s2864 + $0x8] sm:$0xff]
        %v2867 = vld [vmem:[%s2864 + $0x10] sm:$0xff]
        %v2868 = vld [vmem:[%s2864 + $0x18] sm:$0xff]
        %v2869 = vld [vmem:[%s2864 + $0x20] sm:$0xff]
        %v2870 = vld [vmem:[%s2864 + $0x28] sm:$0xff]
        %v2871 = vld [vmem:[%s2864 + $0x30] sm:$0xff]
        %v2872 = vld [vmem:[%s2864 + $0x38] sm:$0xff]
        %v2873 = vld [vmem:[%s2864 + $0x40] sm:$0xff]
        %v2874 = vld [vmem:[%s2864 + $0x48] sm:$0xff]
        %v2875 = vld [vmem:[%s2864 + $0x50] sm:$0xff]
        %v2876 = vld [vmem:[%s2864 + $0x58] sm:$0xff]
        %2877 = vmatprep.subr.mxu0 %v474
        %2878 = vmatpush1.msra.mxu0 %v473
        %2879 = vmatprep.subr.mxu0 %v471
        %2880 = vmatpush1.msra.mxu0 %v470
        %2881 = vmatprep.subr.mxu0 %v468
        %2882 = vmatpush1.msra.mxu0 %v467
        %2883 = vmatprep.subr.mxu0 %v465
        %2884 = vmatpush1.msra.mxu0 %v464
        %2885 = vmatprep.subr.mxu0 %v462
        %2886 = vmatpush1.msra.mxu0 %v461
        %2887 = vmatprep.subr.mxu0 %v459
        %2888 = vmatpush1.msra.mxu0 %v458
        %2889 = vmatprep.subr.mxu0 %v456
        %2890 = vmatpush1.msra.mxu0 %v455
        %2891 = vmatprep.subr.mxu0 %v453
        %2892 = vmatpush1.msra.mxu0 %v452
        %2893 = vmatprep.subr.mxu0 %v450
        %2894 = vmatpush1.msra.mxu0 %v449
        %2895 = vmatprep.subr.mxu0 %v447
        %2896 = vmatpush1.msra.mxu0 %v446
        %2897 = vmatprep.subr.mxu0 %v444
        %2898 = vmatpush1.msra.mxu0 %v443
        %2899 = vmatprep.subr.mxu0 %v441
        %2900 = vmatpush1.msra.mxu0 %v440
        %2901 = vmatprep.subr.mxu0 %v438
        %2902 = vmatpush1.msra.mxu0 %v437
        %2903 = vmatprep.subr.mxu0 %v435
        %2904 = vmatpush1.msra.mxu0 %v434
        %2905 = vmatprep.subr.mxu0 %v432
        %2906 = vmatpush1.msra.mxu0 %v431
        %2907 = vmatprep.subr.mxu0 %v429
        %2908 = vmatpush1.msra.mxu0 %v428
        %2909 = vmatprep.subr.mxu0 0.0
        %2910 = vmatpush2.msra.mxu0 0.0
        %2911 = vmatprep.subr.mxu0 0.0
        %2912 = vmatpush2.msra.mxu0 0.0
        %2913 = vmatprep.subr.mxu0 0.0
        %2914 = vmatpush2.msra.mxu0 0.0
        %2915 = vmatprep.subr.mxu0 0.0
        %2916 = vmatpush2.msra.mxu0 0.0
        %2917 = vmatprep.subr.mxu0 0.0
        %2918 = vmatpush2.msra.mxu0 0.0
        %2919 = vmatprep.subr.mxu0 0.0
        %2920 = vmatpush2.msra.mxu0 0.0
        %2921 = vmatprep.subr.mxu0 0.0
        %2922 = vmatpush2.msra.mxu0 0.0
        %2923 = vmatprep.subr.mxu0 0.0
        %2924 = vmatpush2.msra.mxu0 0.0
        %2925 = vmatprep.subr.mxu0 0.0
        %2926 = vmatpush2.msra.mxu0 0.0
        %2927 = vmatprep.subr.mxu0 0.0
        %2928 = vmatpush2.msra.mxu0 0.0
        %2929 = vmatprep.subr.mxu0 0.0
        %2930 = vmatpush2.msra.mxu0 0.0
        %2931 = vmatprep.subr.mxu0 0.0
        %2932 = vmatpush2.msra.mxu0 0.0
        %2933 = vmatprep.subr.mxu0 0.0
        %2934 = vmatpush2.msra.mxu0 0.0
        %2935 = vmatprep.subr.mxu0 0.0
        %2936 = vmatpush2.msra.mxu0 0.0
        %2937 = vmatprep.subr.mxu0 0.0
        %2938 = vmatpush2.msra.mxu0 0.0
        %2939 = vmatprep.subr.mxu0 0.0
        %2940 = vmatpush2.msra.mxu0 0.0
        %2941 = vmatprep.mubr.f32.mxu0 0.0
        %2942 = vmatmul.mubr.f32.gmra.mxu0 %v2858
        %v2943 = vpop.f32.mrf.mxu0
        %v2944 = vadd.f32 %v1500, %v2943
        %v2945 = vpop.f32.mrf.mxu0
        %v2946 = vadd.f32 %v1504, %v2945
        %2947 = vmatprep.mubr.f32.mxu0 0.0
        %2948 = vmatmul.mubr.f32.gmra.mxu0 %v2859
        %v2949 = vpop.f32.mrf.mxu0
        %v2950 = vadd.f32 %v1500, %v2949
        %v2951 = vpop.f32.mrf.mxu0
        %v2952 = vadd.f32 %v1504, %v2951
        %2953 = vmatprep.mubr.f32.mxu0 0.0
        %2954 = vmatmul.mubr.f32.gmra.mxu0 %v2860
        %v2955 = vpop.f32.mrf.mxu0
        %v2956 = vadd.f32 %v1500, %v2955
        %v2957 = vpop.f32.mrf.mxu0
        %v2958 = vadd.f32 %v1504, %v2957
        %2959 = vmatprep.mubr.f32.mxu0 0.0
        %2960 = vmatmul.mubr.f32.gmra.mxu0 %v2861
        %v2961 = vpop.f32.mrf.mxu0
        %v2962 = vadd.f32 %v1500, %v2961
        %v2963 = vpop.f32.mrf.mxu0
        %v2964 = vadd.f32 %v1504, %v2963
        %2965 = vdwg.mxu0
        %2966 = vmatprep.subr.mxu0 0.0
        %2967 = vmatpush1.msra.mxu0 %v475
        %2968 = vmatprep.subr.mxu0 0.0
        %2969 = vmatpush1.msra.mxu0 %v472
        %2970 = vmatprep.subr.mxu0 0.0
        %2971 = vmatpush1.msra.mxu0 %v469
        %2972 = vmatprep.subr.mxu0 0.0
        %2973 = vmatpush1.msra.mxu0 %v466
        %2974 = vmatprep.subr.mxu0 0.0
        %2975 = vmatpush1.msra.mxu0 %v463
        %2976 = vmatprep.subr.mxu0 0.0
        %2977 = vmatpush1.msra.mxu0 %v460
        %2978 = vmatprep.subr.mxu0 0.0
        %2979 = vmatpush1.msra.mxu0 %v457
        %2980 = vmatprep.subr.mxu0 0.0
        %2981 = vmatpush1.msra.mxu0 %v454
        %2982 = vmatprep.subr.mxu0 0.0
        %2983 = vmatpush1.msra.mxu0 %v451
        %2984 = vmatprep.subr.mxu0 0.0
        %2985 = vmatpush1.msra.mxu0 %v448
        %2986 = vmatprep.subr.mxu0 0.0
        %2987 = vmatpush1.msra.mxu0 %v445
        %2988 = vmatprep.subr.mxu0 0.0
        %2989 = vmatpush1.msra.mxu0 %v442
        %2990 = vmatprep.subr.mxu0 0.0
        %2991 = vmatpush1.msra.mxu0 %v439
        %2992 = vmatprep.subr.mxu0 0.0
        %2993 = vmatpush1.msra.mxu0 %v436
        %2994 = vmatprep.subr.mxu0 0.0
        %2995 = vmatpush1.msra.mxu0 %v433
        %2996 = vmatprep.subr.mxu0 0.0
        %2997 = vmatpush1.msra.mxu0 %v430
        %2998 = vmatprep.subr.mxu0 0.0
        %2999 = vmatpush2.msra.mxu0 0.0
        %3000 = vmatprep.subr.mxu0 0.0
        %3001 = vmatpush2.msra.mxu0 0.0
        %3002 = vmatprep.subr.mxu0 0.0
        %3003 = vmatpush2.msra.mxu0 0.0
        %3004 = vmatprep.subr.mxu0 0.0
        %3005 = vmatpush2.msra.mxu0 0.0
        %3006 = vmatprep.subr.mxu0 0.0
        %3007 = vmatpush2.msra.mxu0 0.0
        %3008 = vmatprep.subr.mxu0 0.0
        %3009 = vmatpush2.msra.mxu0 0.0
        %3010 = vmatprep.subr.mxu0 0.0
        %3011 = vmatpush2.msra.mxu0 0.0
        %3012 = vmatprep.subr.mxu0 0.0
        %3013 = vmatpush2.msra.mxu0 0.0
        %3014 = vmatprep.subr.mxu0 0.0
        %3015 = vmatpush2.msra.mxu0 0.0
        %3016 = vmatprep.subr.mxu0 0.0
        %3017 = vmatpush2.msra.mxu0 0.0
        %3018 = vmatprep.subr.mxu0 0.0
        %3019 = vmatpush2.msra.mxu0 0.0
        %3020 = vmatprep.subr.mxu0 0.0
        %3021 = vmatpush2.msra.mxu0 0.0
        %3022 = vmatprep.subr.mxu0 0.0
        %3023 = vmatpush2.msra.mxu0 0.0
        %3024 = vmatprep.subr.mxu0 0.0
        %3025 = vmatpush2.msra.mxu0 0.0
        %3026 = vmatprep.subr.mxu0 0.0
        %3027 = vmatpush2.msra.mxu0 0.0
        %3028 = vmatprep.subr.mxu0 0.0
        %3029 = vmatpush2.msra.mxu0 0.0
        %3030 = vmatprep.mubr.f32.mxu0 0.0
        %3031 = vmatmul.mubr.f32.gmra.mxu0 %v2858
        %v3032 = vpop.f32.mrf.mxu0
        %v3033 = vadd.f32 %v1508, %v3032
        %v3034 = vpop.f32.mrf.mxu0
        %3035 = vmatprep.mubr.f32.mxu0 0.0
        %3036 = vmatmul.mubr.f32.gmra.mxu0 %v2859
        %v3037 = vpop.f32.mrf.mxu0
        %v3038 = vadd.f32 %v1508, %v3037
        %v3039 = vpop.f32.mrf.mxu0
        %3040 = vmatprep.mubr.f32.mxu0 0.0
        %3041 = vmatmul.mubr.f32.gmra.mxu0 %v2860
        %v3042 = vpop.f32.mrf.mxu0
        %v3043 = vadd.f32 %v1508, %v3042
        %v3044 = vpop.f32.mrf.mxu0
        %3045 = vmatprep.mubr.f32.mxu0 0.0
        %3046 = vmatmul.mubr.f32.gmra.mxu0 %v2861
        %v3047 = vpop.f32.mrf.mxu0
        %v3048 = vadd.f32 %v1508, %v3047
        %v3049 = vpop.f32.mrf.mxu0
        %3050 = vdwg.mxu0
        %v3051 = vadd.f32 %v2865, %v2944
        %v3052 = vadd.f32 %v2868, %v2950
        %v3053 = vadd.f32 %v2871, %v2956
        %v3054 = vadd.f32 %v2874, %v2962
        %v3055 = vxor.u32 %v3051, 2147483648
        %v3056 = vxor.u32 %v3052, 2147483648
        %v3057 = vxor.u32 %v3053, 2147483648
        %v3058 = vxor.u32 %v3054, 2147483648
        %v3059 = vmul.f32 %v3055, 1.442695
        %v3060 = vpow.pop %v3059
        %v3061 = vmul.f32 %v3056, 1.442695
        %v3062 = vpow.pop %v3061
        %v3063 = vmul.f32 %v3057, 1.442695
        %v3064 = vpow.pop %v3063
        %v3065 = vmul.f32 %v3058, 1.442695
        %v3066 = vpow.pop %v3065
        %v3067 = vadd.f32 %v3060, 1.0
        %v3068 = vadd.f32 %v3062, 1.0
        %v3069 = vadd.f32 %v3064, 1.0
        %v3070 = vadd.f32 %v3066, 1.0
        %v3071 = vrcp.pop %v3067
        %v3072 = vmul.f32 1.0, %v3071
        %v3073 = vrcp.pop %v3068
        %v3074 = vmul.f32 1.0, %v3073
        %v3075 = vrcp.pop %v3069
        %v3076 = vmul.f32 1.0, %v3075
        %v3077 = vrcp.pop %v3070
        %v3078 = vmul.f32 1.0, %v3077
        %v3079 = vadd.f32 %v2866, %v2946
        %v3080 = vadd.f32 %v2869, %v2952
        %v3081 = vadd.f32 %v2872, %v2958
        %v3082 = vadd.f32 %v2875, %v2964
        %v3083 = vxor.u32 %v3079, 2147483648
        %v3084 = vxor.u32 %v3080, 2147483648
        %v3085 = vxor.u32 %v3081, 2147483648
        %v3086 = vxor.u32 %v3082, 2147483648
        %v3087 = vmul.f32 %v3083, 1.442695
        %v3088 = vpow.pop %v3087
        %v3089 = vmul.f32 %v3084, 1.442695
        %v3090 = vpow.pop %v3089
        %v3091 = vmul.f32 %v3085, 1.442695
        %v3092 = vpow.pop %v3091
        %v3093 = vmul.f32 %v3086, 1.442695
        %v3094 = vpow.pop %v3093
        %v3095 = vadd.f32 %v3088, 1.0
        %v3096 = vadd.f32 %v3090, 1.0
        %v3097 = vadd.f32 %v3092, 1.0
        %v3098 = vadd.f32 %v3094, 1.0
        %v3099 = vrcp.pop %v3095
        %v3100 = vmul.f32 1.0, %v3099
        %v3101 = vrcp.pop %v3096
        %v3102 = vmul.f32 1.0, %v3101
        %v3103 = vrcp.pop %v3097
        %v3104 = vmul.f32 1.0, %v3103
        %v3105 = vrcp.pop %v3098
        %v3106 = vmul.f32 1.0, %v3105
        %v3107 = vmul.f32 %v3072, %v3033
        %v3108 = vmul.f32 %v3074, %v3038
        %v3109 = vmul.f32 %v3076, %v3043
        %v3110 = vmul.f32 %v3078, %v3048
        %v3111 = vadd.f32 %v2867, %v3107
        %v3112 = vadd.f32 %v2870, %v3108
        %v3113 = vadd.f32 %v2873, %v3109
        %v3114 = vadd.f32 %v2876, %v3110
        %v3115 = vtanh.pop %v3111
        %v3116 = vtanh.pop %v3112
        %v3117 = vtanh.pop %v3113
        %v3118 = vtanh.pop %v3114
        %v3119 = vsub.f32 1.0, %v3100
        %v3120 = vsub.f32 1.0, %v3102
        %v3121 = vsub.f32 1.0, %v3104
        %v3122 = vsub.f32 1.0, %v3106
        %v3123 = vmul.f32 %v3119, %v3115
        %v3124 = vmul.f32 %v3120, %v3116
        %v3125 = vmul.f32 %v3121, %v3117
        %v3126 = vmul.f32 %v3122, %v3118
        %v3127 = vmul.f32 %v3100, %v2858
        %v3128 = vmul.f32 %v3102, %v2859
        %v3129 = vmul.f32 %v3104, %v2860
        %v3130 = vmul.f32 %v3106, %v2861
        %v3131 = vadd.f32 %v3123, %v3127
        %v3132 = vadd.f32 %v3124, %v3128
        %v3133 = vadd.f32 %v3125, %v3129
        %v3134 = vadd.f32 %v3126, %v3130
        %s3135 = smul.u32 24, 3
        %s3136 = smul.addr %s3135, 8
        %s3137 = scalar_lea.vmem [#allocation2], %s3136
        %v3138 = vld [vmem:[%s3137] sm:$0xff]
        %v3139 = vld [vmem:[%s3137 + $0x8] sm:$0xff]
        %v3140 = vld [vmem:[%s3137 + $0x10] sm:$0xff]
        %v3141 = vld [vmem:[%s3137 + $0x18] sm:$0xff]
        %v3142 = vld [vmem:[%s3137 + $0x20] sm:$0xff]
        %v3143 = vld [vmem:[%s3137 + $0x28] sm:$0xff]
        %v3144 = vld [vmem:[%s3137 + $0x30] sm:$0xff]
        %v3145 = vld [vmem:[%s3137 + $0x38] sm:$0xff]
        %v3146 = vld [vmem:[%s3137 + $0x40] sm:$0xff]
        %v3147 = vld [vmem:[%s3137 + $0x48] sm:$0xff]
        %v3148 = vld [vmem:[%s3137 + $0x50] sm:$0xff]
        %v3149 = vld [vmem:[%s3137 + $0x58] sm:$0xff]
        %3150 = vmatprep.subr.mxu0 %v474
        %3151 = vmatpush1.msra.mxu0 %v473
        %3152 = vmatprep.subr.mxu0 %v471
        %3153 = vmatpush1.msra.mxu0 %v470
        %3154 = vmatprep.subr.mxu0 %v468
        %3155 = vmatpush1.msra.mxu0 %v467
        %3156 = vmatprep.subr.mxu0 %v465
        %3157 = vmatpush1.msra.mxu0 %v464
        %3158 = vmatprep.subr.mxu0 %v462
        %3159 = vmatpush1.msra.mxu0 %v461
        %3160 = vmatprep.subr.mxu0 %v459
        %3161 = vmatpush1.msra.mxu0 %v458
        %3162 = vmatprep.subr.mxu0 %v456
        %3163 = vmatpush1.msra.mxu0 %v455
        %3164 = vmatprep.subr.mxu0 %v453
        %3165 = vmatpush1.msra.mxu0 %v452
        %3166 = vmatprep.subr.mxu0 %v450
        %3167 = vmatpush1.msra.mxu0 %v449
        %3168 = vmatprep.subr.mxu0 %v447
        %3169 = vmatpush1.msra.mxu0 %v446
        %3170 = vmatprep.subr.mxu0 %v444
        %3171 = vmatpush1.msra.mxu0 %v443
        %3172 = vmatprep.subr.mxu0 %v441
        %3173 = vmatpush1.msra.mxu0 %v440
        %3174 = vmatprep.subr.mxu0 %v438
        %3175 = vmatpush1.msra.mxu0 %v437
        %3176 = vmatprep.subr.mxu0 %v435
        %3177 = vmatpush1.msra.mxu0 %v434
        %3178 = vmatprep.subr.mxu0 %v432
        %3179 = vmatpush1.msra.mxu0 %v431
        %3180 = vmatprep.subr.mxu0 %v429
        %3181 = vmatpush1.msra.mxu0 %v428
        %3182 = vmatprep.subr.mxu0 0.0
        %3183 = vmatpush2.msra.mxu0 0.0
        %3184 = vmatprep.subr.mxu0 0.0
        %3185 = vmatpush2.msra.mxu0 0.0
        %3186 = vmatprep.subr.mxu0 0.0
        %3187 = vmatpush2.msra.mxu0 0.0
        %3188 = vmatprep.subr.mxu0 0.0
        %3189 = vmatpush2.msra.mxu0 0.0
        %3190 = vmatprep.subr.mxu0 0.0
        %3191 = vmatpush2.msra.mxu0 0.0
        %3192 = vmatprep.subr.mxu0 0.0
        %3193 = vmatpush2.msra.mxu0 0.0
        %3194 = vmatprep.subr.mxu0 0.0
        %3195 = vmatpush2.msra.mxu0 0.0
        %3196 = vmatprep.subr.mxu0 0.0
        %3197 = vmatpush2.msra.mxu0 0.0
        %3198 = vmatprep.subr.mxu0 0.0
        %3199 = vmatpush2.msra.mxu0 0.0
        %3200 = vmatprep.subr.mxu0 0.0
        %3201 = vmatpush2.msra.mxu0 0.0
        %3202 = vmatprep.subr.mxu0 0.0
        %3203 = vmatpush2.msra.mxu0 0.0
        %3204 = vmatprep.subr.mxu0 0.0
        %3205 = vmatpush2.msra.mxu0 0.0
        %3206 = vmatprep.subr.mxu0 0.0
        %3207 = vmatpush2.msra.mxu0 0.0
        %3208 = vmatprep.subr.mxu0 0.0
        %3209 = vmatpush2.msra.mxu0 0.0
        %3210 = vmatprep.subr.mxu0 0.0
        %3211 = vmatpush2.msra.mxu0 0.0
        %3212 = vmatprep.subr.mxu0 0.0
        %3213 = vmatpush2.msra.mxu0 0.0
        %3214 = vmatprep.mubr.f32.mxu0 0.0
        %3215 = vmatmul.mubr.f32.gmra.mxu0 %v3131
        %v3216 = vpop.f32.mrf.mxu0
        %v3217 = vadd.f32 %v1500, %v3216
        %v3218 = vpop.f32.mrf.mxu0
        %v3219 = vadd.f32 %v1504, %v3218
        %3220 = vmatprep.mubr.f32.mxu0 0.0
        %3221 = vmatmul.mubr.f32.gmra.mxu0 %v3132
        %v3222 = vpop.f32.mrf.mxu0
        %v3223 = vadd.f32 %v1500, %v3222
        %v3224 = vpop.f32.mrf.mxu0
        %v3225 = vadd.f32 %v1504, %v3224
        %3226 = vmatprep.mubr.f32.mxu0 0.0
        %3227 = vmatmul.mubr.f32.gmra.mxu0 %v3133
        %v3228 = vpop.f32.mrf.mxu0
        %v3229 = vadd.f32 %v1500, %v3228
        %v3230 = vpop.f32.mrf.mxu0
        %v3231 = vadd.f32 %v1504, %v3230
        %3232 = vmatprep.mubr.f32.mxu0 0.0
        %3233 = vmatmul.mubr.f32.gmra.mxu0 %v3134
        %v3234 = vpop.f32.mrf.mxu0
        %v3235 = vadd.f32 %v1500, %v3234
        %v3236 = vpop.f32.mrf.mxu0
        %v3237 = vadd.f32 %v1504, %v3236
        %3238 = vdwg.mxu0
        %3239 = vmatprep.subr.mxu0 0.0
        %3240 = vmatpush1.msra.mxu0 %v475
        %3241 = vmatprep.subr.mxu0 0.0
        %3242 = vmatpush1.msra.mxu0 %v472
        %3243 = vmatprep.subr.mxu0 0.0
        %3244 = vmatpush1.msra.mxu0 %v469
        %3245 = vmatprep.subr.mxu0 0.0
        %3246 = vmatpush1.msra.mxu0 %v466
        %3247 = vmatprep.subr.mxu0 0.0
        %3248 = vmatpush1.msra.mxu0 %v463
        %3249 = vmatprep.subr.mxu0 0.0
        %3250 = vmatpush1.msra.mxu0 %v460
        %3251 = vmatprep.subr.mxu0 0.0
        %3252 = vmatpush1.msra.mxu0 %v457
        %3253 = vmatprep.subr.mxu0 0.0
        %3254 = vmatpush1.msra.mxu0 %v454
        %3255 = vmatprep.subr.mxu0 0.0
        %3256 = vmatpush1.msra.mxu0 %v451
        %3257 = vmatprep.subr.mxu0 0.0
        %3258 = vmatpush1.msra.mxu0 %v448
        %3259 = vmatprep.subr.mxu0 0.0
        %3260 = vmatpush1.msra.mxu0 %v445
        %3261 = vmatprep.subr.mxu0 0.0
        %3262 = vmatpush1.msra.mxu0 %v442
        %3263 = vmatprep.subr.mxu0 0.0
        %3264 = vmatpush1.msra.mxu0 %v439
        %3265 = vmatprep.subr.mxu0 0.0
        %3266 = vmatpush1.msra.mxu0 %v436
        %3267 = vmatprep.subr.mxu0 0.0
        %3268 = vmatpush1.msra.mxu0 %v433
        %3269 = vmatprep.subr.mxu0 0.0
        %3270 = vmatpush1.msra.mxu0 %v430
        %3271 = vmatprep.subr.mxu0 0.0
        %3272 = vmatpush2.msra.mxu0 0.0
        %3273 = vmatprep.subr.mxu0 0.0
        %3274 = vmatpush2.msra.mxu0 0.0
        %3275 = vmatprep.subr.mxu0 0.0
        %3276 = vmatpush2.msra.mxu0 0.0
        %3277 = vmatprep.subr.mxu0 0.0
        %3278 = vmatpush2.msra.mxu0 0.0
        %3279 = vmatprep.subr.mxu0 0.0
        %3280 = vmatpush2.msra.mxu0 0.0
        %3281 = vmatprep.subr.mxu0 0.0
        %3282 = vmatpush2.msra.mxu0 0.0
        %3283 = vmatprep.subr.mxu0 0.0
        %3284 = vmatpush2.msra.mxu0 0.0
        %3285 = vmatprep.subr.mxu0 0.0
        %3286 = vmatpush2.msra.mxu0 0.0
        %3287 = vmatprep.subr.mxu0 0.0
        %3288 = vmatpush2.msra.mxu0 0.0
        %3289 = vmatprep.subr.mxu0 0.0
        %3290 = vmatpush2.msra.mxu0 0.0
        %3291 = vmatprep.subr.mxu0 0.0
        %3292 = vmatpush2.msra.mxu0 0.0
        %3293 = vmatprep.subr.mxu0 0.0
        %3294 = vmatpush2.msra.mxu0 0.0
        %3295 = vmatprep.subr.mxu0 0.0
        %3296 = vmatpush2.msra.mxu0 0.0
        %3297 = vmatprep.subr.mxu0 0.0
        %3298 = vmatpush2.msra.mxu0 0.0
        %3299 = vmatprep.subr.mxu0 0.0
        %3300 = vmatpush2.msra.mxu0 0.0
        %3301 = vmatprep.subr.mxu0 0.0
        %3302 = vmatpush2.msra.mxu0 0.0
        %3303 = vmatprep.mubr.f32.mxu0 0.0
        %3304 = vmatmul.mubr.f32.gmra.mxu0 %v3131
        %v3305 = vpop.f32.mrf.mxu0
        %v3306 = vadd.f32 %v1508, %v3305
        %v3307 = vpop.f32.mrf.mxu0
        %3308 = vmatprep.mubr.f32.mxu0 0.0
        %3309 = vmatmul.mubr.f32.gmra.mxu0 %v3132
        %v3310 = vpop.f32.mrf.mxu0
        %v3311 = vadd.f32 %v1508, %v3310
        %v3312 = vpop.f32.mrf.mxu0
        %3313 = vmatprep.mubr.f32.mxu0 0.0
        %3314 = vmatmul.mubr.f32.gmra.mxu0 %v3133
        %v3315 = vpop.f32.mrf.mxu0
        %v3316 = vadd.f32 %v1508, %v3315
        %v3317 = vpop.f32.mrf.mxu0
        %3318 = vmatprep.mubr.f32.mxu0 0.0
        %3319 = vmatmul.mubr.f32.gmra.mxu0 %v3134
        %v3320 = vpop.f32.mrf.mxu0
        %v3321 = vadd.f32 %v1508, %v3320
        %v3322 = vpop.f32.mrf.mxu0
        %3323 = vdwg.mxu0
        %v3324 = vadd.f32 %v3138, %v3217
        %v3325 = vadd.f32 %v3141, %v3223
        %v3326 = vadd.f32 %v3144, %v3229
        %v3327 = vadd.f32 %v3147, %v3235
        %v3328 = vxor.u32 %v3324, 2147483648
        %v3329 = vxor.u32 %v3325, 2147483648
        %v3330 = vxor.u32 %v3326, 2147483648
        %v3331 = vxor.u32 %v3327, 2147483648
        %v3332 = vmul.f32 %v3328, 1.442695
        %v3333 = vpow.pop %v3332
        %v3334 = vmul.f32 %v3329, 1.442695
        %v3335 = vpow.pop %v3334
        %v3336 = vmul.f32 %v3330, 1.442695
        %v3337 = vpow.pop %v3336
        %v3338 = vmul.f32 %v3331, 1.442695
        %v3339 = vpow.pop %v3338
        %v3340 = vadd.f32 %v3333, 1.0
        %v3341 = vadd.f32 %v3335, 1.0
        %v3342 = vadd.f32 %v3337, 1.0
        %v3343 = vadd.f32 %v3339, 1.0
        %v3344 = vrcp.pop %v3340
        %v3345 = vmul.f32 1.0, %v3344
        %v3346 = vrcp.pop %v3341
        %v3347 = vmul.f32 1.0, %v3346
        %v3348 = vrcp.pop %v3342
        %v3349 = vmul.f32 1.0, %v3348
        %v3350 = vrcp.pop %v3343
        %v3351 = vmul.f32 1.0, %v3350
        %v3352 = vadd.f32 %v3139, %v3219
        %v3353 = vadd.f32 %v3142, %v3225
        %v3354 = vadd.f32 %v3145, %v3231
        %v3355 = vadd.f32 %v3148, %v3237
        %v3356 = vxor.u32 %v3352, 2147483648
        %v3357 = vxor.u32 %v3353, 2147483648
        %v3358 = vxor.u32 %v3354, 2147483648
        %v3359 = vxor.u32 %v3355, 2147483648
        %v3360 = vmul.f32 %v3356, 1.442695
        %v3361 = vpow.pop %v3360
        %v3362 = vmul.f32 %v3357, 1.442695
        %v3363 = vpow.pop %v3362
        %v3364 = vmul.f32 %v3358, 1.442695
        %v3365 = vpow.pop %v3364
        %v3366 = vmul.f32 %v3359, 1.442695
        %v3367 = vpow.pop %v3366
        %v3368 = vadd.f32 %v3361, 1.0
        %v3369 = vadd.f32 %v3363, 1.0
        %v3370 = vadd.f32 %v3365, 1.0
        %v3371 = vadd.f32 %v3367, 1.0
        %v3372 = vrcp.pop %v3368
        %v3373 = vmul.f32 1.0, %v3372
        %v3374 = vrcp.pop %v3369
        %v3375 = vmul.f32 1.0, %v3374
        %v3376 = vrcp.pop %v3370
        %v3377 = vmul.f32 1.0, %v3376
        %v3378 = vrcp.pop %v3371
        %v3379 = vmul.f32 1.0, %v3378
        %v3380 = vmul.f32 %v3345, %v3306
        %v3381 = vmul.f32 %v3347, %v3311
        %v3382 = vmul.f32 %v3349, %v3316
        %v3383 = vmul.f32 %v3351, %v3321
        %v3384 = vadd.f32 %v3140, %v3380
        %v3385 = vadd.f32 %v3143, %v3381
        %v3386 = vadd.f32 %v3146, %v3382
        %v3387 = vadd.f32 %v3149, %v3383
        %v3388 = vtanh.pop %v3384
        %v3389 = vtanh.pop %v3385
        %v3390 = vtanh.pop %v3386
        %v3391 = vtanh.pop %v3387
        %v3392 = vsub.f32 1.0, %v3373
        %v3393 = vsub.f32 1.0, %v3375
        %v3394 = vsub.f32 1.0, %v3377
        %v3395 = vsub.f32 1.0, %v3379
        %v3396 = vmul.f32 %v3392, %v3388
        %v3397 = vmul.f32 %v3393, %v3389
        %v3398 = vmul.f32 %v3394, %v3390
        %v3399 = vmul.f32 %v3395, %v3391
        %v3400 = vmul.f32 %v3373, %v3131
        %v3401 = vmul.f32 %v3375, %v3132
        %v3402 = vmul.f32 %v3377, %v3133
        %v3403 = vmul.f32 %v3379, %v3134
        %v3404 = vadd.f32 %v3396, %v3400
        %v3405 = vadd.f32 %v3397, %v3401
        %v3406 = vadd.f32 %v3398, %v3402
        %v3407 = vadd.f32 %v3399, %v3403
        %s3408 = smul.u32 28, 3
        %s3409 = smul.addr %s3408, 8
        %s3410 = scalar_lea.vmem [#allocation2], %s3409
        %v3411 = vld [vmem:[%s3410] sm:$0xff]
        %v3412 = vld [vmem:[%s3410 + $0x8] sm:$0xff]
        %v3413 = vld [vmem:[%s3410 + $0x10] sm:$0xff]
        %v3414 = vld [vmem:[%s3410 + $0x18] sm:$0xff]
        %v3415 = vld [vmem:[%s3410 + $0x20] sm:$0xff]
        %v3416 = vld [vmem:[%s3410 + $0x28] sm:$0xff]
        %v3417 = vld [vmem:[%s3410 + $0x30] sm:$0xff]
        %v3418 = vld [vmem:[%s3410 + $0x38] sm:$0xff]
        %v3419 = vld [vmem:[%s3410 + $0x40] sm:$0xff]
        %v3420 = vld [vmem:[%s3410 + $0x48] sm:$0xff]
        %v3421 = vld [vmem:[%s3410 + $0x50] sm:$0xff]
        %v3422 = vld [vmem:[%s3410 + $0x58] sm:$0xff]
        %3423 = vmatprep.subr.mxu0 %v474
        %3424 = vmatpush1.msra.mxu0 %v473
        %3425 = vmatprep.subr.mxu0 %v471
        %3426 = vmatpush1.msra.mxu0 %v470
        %3427 = vmatprep.subr.mxu0 %v468
        %3428 = vmatpush1.msra.mxu0 %v467
        %3429 = vmatprep.subr.mxu0 %v465
        %3430 = vmatpush1.msra.mxu0 %v464
        %3431 = vmatprep.subr.mxu0 %v462
        %3432 = vmatpush1.msra.mxu0 %v461
        %3433 = vmatprep.subr.mxu0 %v459
        %3434 = vmatpush1.msra.mxu0 %v458
        %3435 = vmatprep.subr.mxu0 %v456
        %3436 = vmatpush1.msra.mxu0 %v455
        %3437 = vmatprep.subr.mxu0 %v453
        %3438 = vmatpush1.msra.mxu0 %v452
        %3439 = vmatprep.subr.mxu0 %v450
        %3440 = vmatpush1.msra.mxu0 %v449
        %3441 = vmatprep.subr.mxu0 %v447
        %3442 = vmatpush1.msra.mxu0 %v446
        %3443 = vmatprep.subr.mxu0 %v444
        %3444 = vmatpush1.msra.mxu0 %v443
        %3445 = vmatprep.subr.mxu0 %v441
        %3446 = vmatpush1.msra.mxu0 %v440
        %3447 = vmatprep.subr.mxu0 %v438
        %3448 = vmatpush1.msra.mxu0 %v437
        %3449 = vmatprep.subr.mxu0 %v435
        %3450 = vmatpush1.msra.mxu0 %v434
        %3451 = vmatprep.subr.mxu0 %v432
        %3452 = vmatpush1.msra.mxu0 %v431
        %3453 = vmatprep.subr.mxu0 %v429
        %3454 = vmatpush1.msra.mxu0 %v428
        %3455 = vmatprep.subr.mxu0 0.0
        %3456 = vmatpush2.msra.mxu0 0.0
        %3457 = vmatprep.subr.mxu0 0.0
        %3458 = vmatpush2.msra.mxu0 0.0
        %3459 = vmatprep.subr.mxu0 0.0
        %3460 = vmatpush2.msra.mxu0 0.0
        %3461 = vmatprep.subr.mxu0 0.0
        %3462 = vmatpush2.msra.mxu0 0.0
        %3463 = vmatprep.subr.mxu0 0.0
        %3464 = vmatpush2.msra.mxu0 0.0
        %3465 = vmatprep.subr.mxu0 0.0
        %3466 = vmatpush2.msra.mxu0 0.0
        %3467 = vmatprep.subr.mxu0 0.0
        %3468 = vmatpush2.msra.mxu0 0.0
        %3469 = vmatprep.subr.mxu0 0.0
        %3470 = vmatpush2.msra.mxu0 0.0
        %3471 = vmatprep.subr.mxu0 0.0
        %3472 = vmatpush2.msra.mxu0 0.0
        %3473 = vmatprep.subr.mxu0 0.0
        %3474 = vmatpush2.msra.mxu0 0.0
        %3475 = vmatprep.subr.mxu0 0.0
        %3476 = vmatpush2.msra.mxu0 0.0
        %3477 = vmatprep.subr.mxu0 0.0
        %3478 = vmatpush2.msra.mxu0 0.0
        %3479 = vmatprep.subr.mxu0 0.0
        %3480 = vmatpush2.msra.mxu0 0.0
        %3481 = vmatprep.subr.mxu0 0.0
        %3482 = vmatpush2.msra.mxu0 0.0
        %3483 = vmatprep.subr.mxu0 0.0
        %3484 = vmatpush2.msra.mxu0 0.0
        %3485 = vmatprep.subr.mxu0 0.0
        %3486 = vmatpush2.msra.mxu0 0.0
        %3487 = vmatprep.mubr.f32.mxu0 0.0
        %3488 = vmatmul.mubr.f32.gmra.mxu0 %v3404
        %v3489 = vpop.f32.mrf.mxu0
        %v3490 = vadd.f32 %v1500, %v3489
        %v3491 = vpop.f32.mrf.mxu0
        %v3492 = vadd.f32 %v1504, %v3491
        %3493 = vmatprep.mubr.f32.mxu0 0.0
        %3494 = vmatmul.mubr.f32.gmra.mxu0 %v3405
        %v3495 = vpop.f32.mrf.mxu0
        %v3496 = vadd.f32 %v1500, %v3495
        %v3497 = vpop.f32.mrf.mxu0
        %v3498 = vadd.f32 %v1504, %v3497
        %3499 = vmatprep.mubr.f32.mxu0 0.0
        %3500 = vmatmul.mubr.f32.gmra.mxu0 %v3406
        %v3501 = vpop.f32.mrf.mxu0
        %v3502 = vadd.f32 %v1500, %v3501
        %v3503 = vpop.f32.mrf.mxu0
        %v3504 = vadd.f32 %v1504, %v3503
        %3505 = vmatprep.mubr.f32.mxu0 0.0
        %3506 = vmatmul.mubr.f32.gmra.mxu0 %v3407
        %v3507 = vpop.f32.mrf.mxu0
        %v3508 = vadd.f32 %v1500, %v3507
        %v3509 = vpop.f32.mrf.mxu0
        %v3510 = vadd.f32 %v1504, %v3509
        %3511 = vdwg.mxu0
        %3512 = vmatprep.subr.mxu0 0.0
        %3513 = vmatpush1.msra.mxu0 %v475
        %3514 = vmatprep.subr.mxu0 0.0
        %3515 = vmatpush1.msra.mxu0 %v472
        %3516 = vmatprep.subr.mxu0 0.0
        %3517 = vmatpush1.msra.mxu0 %v469
        %3518 = vmatprep.subr.mxu0 0.0
        %3519 = vmatpush1.msra.mxu0 %v466
        %3520 = vmatprep.subr.mxu0 0.0
        %3521 = vmatpush1.msra.mxu0 %v463
        %3522 = vmatprep.subr.mxu0 0.0
        %3523 = vmatpush1.msra.mxu0 %v460
        %3524 = vmatprep.subr.mxu0 0.0
        %3525 = vmatpush1.msra.mxu0 %v457
        %3526 = vmatprep.subr.mxu0 0.0
        %3527 = vmatpush1.msra.mxu0 %v454
        %3528 = vmatprep.subr.mxu0 0.0
        %3529 = vmatpush1.msra.mxu0 %v451
        %3530 = vmatprep.subr.mxu0 0.0
        %3531 = vmatpush1.msra.mxu0 %v448
        %3532 = vmatprep.subr.mxu0 0.0
        %3533 = vmatpush1.msra.mxu0 %v445
        %3534 = vmatprep.subr.mxu0 0.0
        %3535 = vmatpush1.msra.mxu0 %v442
        %3536 = vmatprep.subr.mxu0 0.0
        %3537 = vmatpush1.msra.mxu0 %v439
        %3538 = vmatprep.subr.mxu0 0.0
        %3539 = vmatpush1.msra.mxu0 %v436
        %3540 = vmatprep.subr.mxu0 0.0
        %3541 = vmatpush1.msra.mxu0 %v433
        %3542 = vmatprep.subr.mxu0 0.0
        %3543 = vmatpush1.msra.mxu0 %v430
        %3544 = vmatprep.subr.mxu0 0.0
        %3545 = vmatpush2.msra.mxu0 0.0
        %3546 = vmatprep.subr.mxu0 0.0
        %3547 = vmatpush2.msra.mxu0 0.0
        %3548 = vmatprep.subr.mxu0 0.0
        %3549 = vmatpush2.msra.mxu0 0.0
        %3550 = vmatprep.subr.mxu0 0.0
        %3551 = vmatpush2.msra.mxu0 0.0
        %3552 = vmatprep.subr.mxu0 0.0
        %3553 = vmatpush2.msra.mxu0 0.0
        %3554 = vmatprep.subr.mxu0 0.0
        %3555 = vmatpush2.msra.mxu0 0.0
        %3556 = vmatprep.subr.mxu0 0.0
        %3557 = vmatpush2.msra.mxu0 0.0
        %3558 = vmatprep.subr.mxu0 0.0
        %3559 = vmatpush2.msra.mxu0 0.0
        %3560 = vmatprep.subr.mxu0 0.0
        %3561 = vmatpush2.msra.mxu0 0.0
        %3562 = vmatprep.subr.mxu0 0.0
        %3563 = vmatpush2.msra.mxu0 0.0
        %3564 = vmatprep.subr.mxu0 0.0
        %3565 = vmatpush2.msra.mxu0 0.0
        %3566 = vmatprep.subr.mxu0 0.0
        %3567 = vmatpush2.msra.mxu0 0.0
        %3568 = vmatprep.subr.mxu0 0.0
        %3569 = vmatpush2.msra.mxu0 0.0
        %3570 = vmatprep.subr.mxu0 0.0
        %3571 = vmatpush2.msra.mxu0 0.0
        %3572 = vmatprep.subr.mxu0 0.0
        %3573 = vmatpush2.msra.mxu0 0.0
        %3574 = vmatprep.subr.mxu0 0.0
        %3575 = vmatpush2.msra.mxu0 0.0
        %3576 = vmatprep.mubr.f32.mxu0 0.0
        %3577 = vmatmul.mubr.f32.gmra.mxu0 %v3404
        %v3578 = vpop.f32.mrf.mxu0
        %v3579 = vadd.f32 %v1508, %v3578
        %v3580 = vpop.f32.mrf.mxu0
        %3581 = vmatprep.mubr.f32.mxu0 0.0
        %3582 = vmatmul.mubr.f32.gmra.mxu0 %v3405
        %v3583 = vpop.f32.mrf.mxu0
        %v3584 = vadd.f32 %v1508, %v3583
        %v3585 = vpop.f32.mrf.mxu0
        %3586 = vmatprep.mubr.f32.mxu0 0.0
        %3587 = vmatmul.mubr.f32.gmra.mxu0 %v3406
        %v3588 = vpop.f32.mrf.mxu0
        %v3589 = vadd.f32 %v1508, %v3588
        %v3590 = vpop.f32.mrf.mxu0
        %3591 = vmatprep.mubr.f32.mxu0 0.0
        %3592 = vmatmul.mubr.f32.gmra.mxu0 %v3407
        %v3593 = vpop.f32.mrf.mxu0
        %v3594 = vadd.f32 %v1508, %v3593
        %v3595 = vpop.f32.mrf.mxu0
        %3596 = vdwg.mxu0
        %v3597 = vadd.f32 %v3411, %v3490
        %v3598 = vadd.f32 %v3414, %v3496
        %v3599 = vadd.f32 %v3417, %v3502
        %v3600 = vadd.f32 %v3420, %v3508
        %v3601 = vxor.u32 %v3597, 2147483648
        %v3602 = vxor.u32 %v3598, 2147483648
        %v3603 = vxor.u32 %v3599, 2147483648
        %v3604 = vxor.u32 %v3600, 2147483648
        %v3605 = vmul.f32 %v3601, 1.442695
        %v3606 = vpow.pop %v3605
        %v3607 = vmul.f32 %v3602, 1.442695
        %v3608 = vpow.pop %v3607
        %v3609 = vmul.f32 %v3603, 1.442695
        %v3610 = vpow.pop %v3609
        %v3611 = vmul.f32 %v3604, 1.442695
        %v3612 = vpow.pop %v3611
        %v3613 = vadd.f32 %v3606, 1.0
        %v3614 = vadd.f32 %v3608, 1.0
        %v3615 = vadd.f32 %v3610, 1.0
        %v3616 = vadd.f32 %v3612, 1.0
        %v3617 = vrcp.pop %v3613
        %v3618 = vmul.f32 1.0, %v3617
        %v3619 = vrcp.pop %v3614
        %v3620 = vmul.f32 1.0, %v3619
        %v3621 = vrcp.pop %v3615
        %v3622 = vmul.f32 1.0, %v3621
        %v3623 = vrcp.pop %v3616
        %v3624 = vmul.f32 1.0, %v3623
        %v3625 = vadd.f32 %v3412, %v3492
        %v3626 = vadd.f32 %v3415, %v3498
        %v3627 = vadd.f32 %v3418, %v3504
        %v3628 = vadd.f32 %v3421, %v3510
        %v3629 = vxor.u32 %v3625, 2147483648
        %v3630 = vxor.u32 %v3626, 2147483648
        %v3631 = vxor.u32 %v3627, 2147483648
        %v3632 = vxor.u32 %v3628, 2147483648
        %v3633 = vmul.f32 %v3629, 1.442695
        %v3634 = vpow.pop %v3633
        %v3635 = vmul.f32 %v3630, 1.442695
        %v3636 = vpow.pop %v3635
        %v3637 = vmul.f32 %v3631, 1.442695
        %v3638 = vpow.pop %v3637
        %v3639 = vmul.f32 %v3632, 1.442695
        %v3640 = vpow.pop %v3639
        %v3641 = vadd.f32 %v3634, 1.0
        %v3642 = vadd.f32 %v3636, 1.0
        %v3643 = vadd.f32 %v3638, 1.0
        %v3644 = vadd.f32 %v3640, 1.0
        %v3645 = vrcp.pop %v3641
        %v3646 = vmul.f32 1.0, %v3645
        %v3647 = vrcp.pop %v3642
        %v3648 = vmul.f32 1.0, %v3647
        %v3649 = vrcp.pop %v3643
        %v3650 = vmul.f32 1.0, %v3649
        %v3651 = vrcp.pop %v3644
        %v3652 = vmul.f32 1.0, %v3651
        %v3653 = vmul.f32 %v3618, %v3579
        %v3654 = vmul.f32 %v3620, %v3584
        %v3655 = vmul.f32 %v3622, %v3589
        %v3656 = vmul.f32 %v3624, %v3594
        %v3657 = vadd.f32 %v3413, %v3653
        %v3658 = vadd.f32 %v3416, %v3654
        %v3659 = vadd.f32 %v3419, %v3655
        %v3660 = vadd.f32 %v3422, %v3656
        %v3661 = vtanh.pop %v3657
        %v3662 = vtanh.pop %v3658
        %v3663 = vtanh.pop %v3659
        %v3664 = vtanh.pop %v3660
        %v3665 = vsub.f32 1.0, %v3646
        %v3666 = vsub.f32 1.0, %v3648
        %v3667 = vsub.f32 1.0, %v3650
        %v3668 = vsub.f32 1.0, %v3652
        %v3669 = vmul.f32 %v3665, %v3661
        %v3670 = vmul.f32 %v3666, %v3662
        %v3671 = vmul.f32 %v3667, %v3663
        %v3672 = vmul.f32 %v3668, %v3664
        %v3673 = vmul.f32 %v3646, %v3404
        %v3674 = vmul.f32 %v3648, %v3405
        %v3675 = vmul.f32 %v3650, %v3406
        %v3676 = vmul.f32 %v3652, %v3407
        %v3677 = vadd.f32 %v3669, %v3673
        %v3678 = vadd.f32 %v3670, %v3674
        %v3679 = vadd.f32 %v3671, %v3675
        %v3680 = vadd.f32 %v3672, %v3676
        %3681 = vmatprep.subr.mxu0 %v474
        %3682 = vmatpush1.msra.mxu0 %v473
        %3683 = vmatprep.subr.mxu0 %v471
        %3684 = vmatpush1.msra.mxu0 %v470
        %3685 = vmatprep.subr.mxu0 %v468
        %3686 = vmatpush1.msra.mxu0 %v467
        %3687 = vmatprep.subr.mxu0 %v465
        %3688 = vmatpush1.msra.mxu0 %v464
        %3689 = vmatprep.subr.mxu0 %v462
        %3690 = vmatpush1.msra.mxu0 %v461
        %3691 = vmatprep.subr.mxu0 %v459
        %3692 = vmatpush1.msra.mxu0 %v458
        %3693 = vmatprep.subr.mxu0 %v456
        %3694 = vmatpush1.msra.mxu0 %v455
        %3695 = vmatprep.subr.mxu0 %v453
        %3696 = vmatpush1.msra.mxu0 %v452
        %3697 = vmatprep.subr.mxu0 %v450
        %3698 = vmatpush1.msra.mxu0 %v449
        %3699 = vmatprep.subr.mxu0 %v447
        %3700 = vmatpush1.msra.mxu0 %v446
        %3701 = vmatprep.subr.mxu0 %v444
        %3702 = vmatpush1.msra.mxu0 %v443
        %3703 = vmatprep.subr.mxu0 %v441
        %3704 = vmatpush1.msra.mxu0 %v440
        %3705 = vmatprep.subr.mxu0 %v438
        %3706 = vmatpush1.msra.mxu0 %v437
        %3707 = vmatprep.subr.mxu0 %v435
        %3708 = vmatpush1.msra.mxu0 %v434
        %3709 = vmatprep.subr.mxu0 %v432
        %3710 = vmatpush1.msra.mxu0 %v431
        %3711 = vmatprep.subr.mxu0 %v429
        %3712 = vmatpush1.msra.mxu0 %v428
        %3713 = vmatprep.subr.mxu0 0.0
        %3714 = vmatpush2.msra.mxu0 0.0
        %3715 = vmatprep.subr.mxu0 0.0
        %3716 = vmatpush2.msra.mxu0 0.0
        %3717 = vmatprep.subr.mxu0 0.0
        %3718 = vmatpush2.msra.mxu0 0.0
        %3719 = vmatprep.subr.mxu0 0.0
        %3720 = vmatpush2.msra.mxu0 0.0
        %3721 = vmatprep.subr.mxu0 0.0
        %3722 = vmatpush2.msra.mxu0 0.0
        %3723 = vmatprep.subr.mxu0 0.0
        %3724 = vmatpush2.msra.mxu0 0.0
        %3725 = vmatprep.subr.mxu0 0.0
        %3726 = vmatpush2.msra.mxu0 0.0
        %3727 = vmatprep.subr.mxu0 0.0
        %3728 = vmatpush2.msra.mxu0 0.0
        %3729 = vmatprep.subr.mxu0 0.0
        %3730 = vmatpush2.msra.mxu0 0.0
        %3731 = vmatprep.subr.mxu0 0.0
        %3732 = vmatpush2.msra.mxu0 0.0
        %3733 = vmatprep.subr.mxu0 0.0
        %3734 = vmatpush2.msra.mxu0 0.0
        %3735 = vmatprep.subr.mxu0 0.0
        %3736 = vmatpush2.msra.mxu0 0.0
        %3737 = vmatprep.subr.mxu0 0.0
        %3738 = vmatpush2.msra.mxu0 0.0
        %3739 = vmatprep.subr.mxu0 0.0
        %3740 = vmatpush2.msra.mxu0 0.0
        %3741 = vmatprep.subr.mxu0 0.0
        %3742 = vmatpush2.msra.mxu0 0.0
        %3743 = vmatprep.subr.mxu0 0.0
        %3744 = vmatpush2.msra.mxu0 0.0
        %3745 = vmatprep.mubr.f32.mxu0 0.0
        %3746 = vmatmul.mubr.f32.gmra.mxu0 %v3677
        %v3747 = vpop.f32.mrf.mxu0
        %v3748 = vadd.f32 %v1500, %v3747
        %v3749 = vpop.f32.mrf.mxu0
        %v3750 = vadd.f32 %v1504, %v3749
        %3751 = vmatprep.mubr.f32.mxu0 0.0
        %3752 = vmatmul.mubr.f32.gmra.mxu0 %v3678
        %v3753 = vpop.f32.mrf.mxu0
        %v3754 = vadd.f32 %v1500, %v3753
        %v3755 = vpop.f32.mrf.mxu0
        %v3756 = vadd.f32 %v1504, %v3755
        %3757 = vmatprep.mubr.f32.mxu0 0.0
        %3758 = vmatmul.mubr.f32.gmra.mxu0 %v3679
        %v3759 = vpop.f32.mrf.mxu0
        %v3760 = vadd.f32 %v1500, %v3759
        %v3761 = vpop.f32.mrf.mxu0
        %v3762 = vadd.f32 %v1504, %v3761
        %3763 = vmatprep.mubr.f32.mxu0 0.0
        %3764 = vmatmul.mubr.f32.gmra.mxu0 %v3680
        %v3765 = vpop.f32.mrf.mxu0
        %v3766 = vadd.f32 %v1500, %v3765
        %v3767 = vpop.f32.mrf.mxu0
        %v3768 = vadd.f32 %v1504, %v3767
        %3769 = vdwg.mxu0
        %3770 = vmatprep.subr.mxu0 0.0
        %3771 = vmatpush1.msra.mxu0 %v475
        %3772 = vmatprep.subr.mxu0 0.0
        %3773 = vmatpush1.msra.mxu0 %v472
        %3774 = vmatprep.subr.mxu0 0.0
        %3775 = vmatpush1.msra.mxu0 %v469
        %3776 = vmatprep.subr.mxu0 0.0
        %3777 = vmatpush1.msra.mxu0 %v466
        %3778 = vmatprep.subr.mxu0 0.0
        %3779 = vmatpush1.msra.mxu0 %v463
        %3780 = vmatprep.subr.mxu0 0.0
        %3781 = vmatpush1.msra.mxu0 %v460
        %3782 = vmatprep.subr.mxu0 0.0
        %3783 = vmatpush1.msra.mxu0 %v457
        %3784 = vmatprep.subr.mxu0 0.0
        %3785 = vmatpush1.msra.mxu0 %v454
        %3786 = vmatprep.subr.mxu0 0.0
        %3787 = vmatpush1.msra.mxu0 %v451
        %3788 = vmatprep.subr.mxu0 0.0
        %3789 = vmatpush1.msra.mxu0 %v448
        %3790 = vmatprep.subr.mxu0 0.0
        %3791 = vmatpush1.msra.mxu0 %v445
        %3792 = vmatprep.subr.mxu0 0.0
        %3793 = vmatpush1.msra.mxu0 %v442
        %3794 = vmatprep.subr.mxu0 0.0
        %3795 = vmatpush1.msra.mxu0 %v439
        %3796 = vmatprep.subr.mxu0 0.0
        %3797 = vmatpush1.msra.mxu0 %v436
        %3798 = vmatprep.subr.mxu0 0.0
        %3799 = vmatpush1.msra.mxu0 %v433
        %3800 = vmatprep.subr.mxu0 0.0
        %3801 = vmatpush1.msra.mxu0 %v430
        %3802 = vmatprep.subr.mxu0 0.0
        %3803 = vmatpush2.msra.mxu0 0.0
        %3804 = vmatprep.subr.mxu0 0.0
        %3805 = vmatpush2.msra.mxu0 0.0
        %3806 = vmatprep.subr.mxu0 0.0
        %3807 = vmatpush2.msra.mxu0 0.0
        %3808 = vmatprep.subr.mxu0 0.0
        %3809 = vmatpush2.msra.mxu0 0.0
        %3810 = vmatprep.subr.mxu0 0.0
        %3811 = vmatpush2.msra.mxu0 0.0
        %3812 = vmatprep.subr.mxu0 0.0
        %3813 = vmatpush2.msra.mxu0 0.0
        %3814 = vmatprep.subr.mxu0 0.0
        %3815 = vmatpush2.msra.mxu0 0.0
        %3816 = vmatprep.subr.mxu0 0.0
        %3817 = vmatpush2.msra.mxu0 0.0
        %3818 = vmatprep.subr.mxu0 0.0
        %3819 = vmatpush2.msra.mxu0 0.0
        %3820 = vmatprep.subr.mxu0 0.0
        %3821 = vmatpush2.msra.mxu0 0.0
        %3822 = vmatprep.subr.mxu0 0.0
        %3823 = vmatpush2.msra.mxu0 0.0
        %3824 = vmatprep.subr.mxu0 0.0
        %3825 = vmatpush2.msra.mxu0 0.0
        %3826 = vmatprep.subr.mxu0 0.0
        %3827 = vmatpush2.msra.mxu0 0.0
        %3828 = vmatprep.subr.mxu0 0.0
        %3829 = vmatpush2.msra.mxu0 0.0
        %3830 = vmatprep.subr.mxu0 0.0
        %3831 = vmatpush2.msra.mxu0 0.0
        %3832 = vmatprep.subr.mxu0 0.0
        %3833 = vmatpush2.msra.mxu0 0.0
        %3834 = vmatprep.mubr.f32.mxu0 0.0
        %3835 = vmatmul.mubr.f32.gmra.mxu0 %v3677
        %v3836 = vpop.f32.mrf.mxu0
        %v3837 = vadd.f32 %v1508, %v3836
        %v3838 = vpop.f32.mrf.mxu0
        %3839 = vmatprep.mubr.f32.mxu0 0.0
        %3840 = vmatmul.mubr.f32.gmra.mxu0 %v3678
        %v3841 = vpop.f32.mrf.mxu0
        %v3842 = vadd.f32 %v1508, %v3841
        %v3843 = vpop.f32.mrf.mxu0
        %3844 = vmatprep.mubr.f32.mxu0 0.0
        %3845 = vmatmul.mubr.f32.gmra.mxu0 %v3679
        %v3846 = vpop.f32.mrf.mxu0
        %v3847 = vadd.f32 %v1508, %v3846
        %v3848 = vpop.f32.mrf.mxu0
        %3849 = vmatprep.mubr.f32.mxu0 0.0
        %3850 = vmatmul.mubr.f32.gmra.mxu0 %v3680
        %v3851 = vpop.f32.mrf.mxu0
        %v3852 = vadd.f32 %v1508, %v3851
        %v3853 = vpop.f32.mrf.mxu0
        %3854 = vdwg.mxu0
        %v3855 = vld [vmem:[%s1] sm:$0xff]
        %v3856 = vld [vmem:[%s1 + $0x8] sm:$0xff]
        %v3857 = vld [vmem:[%s1 + $0x10] sm:$0xff]
        %v3858 = vld [vmem:[%s1 + $0x18] sm:$0xff]
        %v3859 = vld [vmem:[%s1 + $0x20] sm:$0xff]
        %v3860 = vld [vmem:[%s1 + $0x28] sm:$0xff]
        %v3861 = vld [vmem:[%s1 + $0x30] sm:$0xff]
        %v3862 = vld [vmem:[%s1 + $0x38] sm:$0xff]
        %3863 = vmatprep.subr.mxu0 %v426
        %3864 = vmatpush1.msra.mxu0 %v425
        %3865 = vmatprep.subr.mxu0 %v423
        %3866 = vmatpush1.msra.mxu0 %v422
        %3867 = vmatprep.subr.mxu0 %v420
        %3868 = vmatpush1.msra.mxu0 %v419
        %3869 = vmatprep.subr.mxu0 %v417
        %3870 = vmatpush1.msra.mxu0 %v416
        %3871 = vmatprep.subr.mxu0 %v414
        %3872 = vmatpush1.msra.mxu0 %v413
        %3873 = vmatprep.subr.mxu0 %v411
        %3874 = vmatpush1.msra.mxu0 %v410
        %3875 = vmatprep.subr.mxu0 %v408
        %3876 = vmatpush1.msra.mxu0 %v407
        %3877 = vmatprep.subr.mxu0 %v405
        %3878 = vmatpush1.msra.mxu0 %v404
        %3879 = vmatprep.subr.mxu0 %v402
        %3880 = vmatpush1.msra.mxu0 %v401
        %3881 = vmatprep.subr.mxu0 %v399
        %3882 = vmatpush1.msra.mxu0 %v398
        %3883 = vmatprep.subr.mxu0 %v396
        %3884 = vmatpush1.msra.mxu0 %v395
        %3885 = vmatprep.subr.mxu0 %v393
        %3886 = vmatpush1.msra.mxu0 %v392
        %3887 = vmatprep.subr.mxu0 %v390
        %3888 = vmatpush1.msra.mxu0 %v389
        %3889 = vmatprep.subr.mxu0 %v387
        %3890 = vmatpush1.msra.mxu0 %v386
        %3891 = vmatprep.subr.mxu0 %v384
        %3892 = vmatpush1.msra.mxu0 %v383
        %3893 = vmatprep.subr.mxu0 %v381
        %3894 = vmatpush1.msra.mxu0 %v380
        %3895 = vmatprep.subr.mxu0 0.0
        %3896 = vmatpush2.msra.mxu0 0.0
        %3897 = vmatprep.subr.mxu0 0.0
        %3898 = vmatpush2.msra.mxu0 0.0
        %3899 = vmatprep.subr.mxu0 0.0
        %3900 = vmatpush2.msra.mxu0 0.0
        %3901 = vmatprep.subr.mxu0 0.0
        %3902 = vmatpush2.msra.mxu0 0.0
        %3903 = vmatprep.subr.mxu0 0.0
        %3904 = vmatpush2.msra.mxu0 0.0
        %3905 = vmatprep.subr.mxu0 0.0
        %3906 = vmatpush2.msra.mxu0 0.0
        %3907 = vmatprep.subr.mxu0 0.0
        %3908 = vmatpush2.msra.mxu0 0.0
        %3909 = vmatprep.subr.mxu0 0.0
        %3910 = vmatpush2.msra.mxu0 0.0
        %3911 = vmatprep.subr.mxu0 0.0
        %3912 = vmatpush2.msra.mxu0 0.0
        %3913 = vmatprep.subr.mxu0 0.0
        %3914 = vmatpush2.msra.mxu0 0.0
        %3915 = vmatprep.subr.mxu0 0.0
        %3916 = vmatpush2.msra.mxu0 0.0
        %3917 = vmatprep.subr.mxu0 0.0
        %3918 = vmatpush2.msra.mxu0 0.0
        %3919 = vmatprep.subr.mxu0 0.0
        %3920 = vmatpush2.msra.mxu0 0.0
        %3921 = vmatprep.subr.mxu0 0.0
        %3922 = vmatpush2.msra.mxu0 0.0
        %3923 = vmatprep.subr.mxu0 0.0
        %3924 = vmatpush2.msra.mxu0 0.0
        %3925 = vmatprep.subr.mxu0 0.0
        %3926 = vmatpush2.msra.mxu0 0.0
        %3927 = vmatprep.mubr.f32.mxu0 0.0
        %3928 = vmatmul.mubr.f32.gmra.mxu0 %v3855
        %v3929 = vpop.f32.mrf.mxu0
        %v3930 = vadd.f32 %v891, %v3929
        %v3931 = vpop.f32.mrf.mxu0
        %v3932 = vadd.f32 %v895, %v3931
        %3933 = vmatprep.mubr.f32.mxu0 0.0
        %3934 = vmatmul.mubr.f32.gmra.mxu0 %v3856
        %v3935 = vpop.f32.mrf.mxu0
        %v3936 = vadd.f32 %v891, %v3935
        %v3937 = vpop.f32.mrf.mxu0
        %v3938 = vadd.f32 %v895, %v3937
        %3939 = vmatprep.mubr.f32.mxu0 0.0
        %3940 = vmatmul.mubr.f32.gmra.mxu0 %v3857
        %v3941 = vpop.f32.mrf.mxu0
        %v3942 = vadd.f32 %v891, %v3941
        %v3943 = vpop.f32.mrf.mxu0
        %v3944 = vadd.f32 %v895, %v3943
        %3945 = vmatprep.mubr.f32.mxu0 0.0
        %3946 = vmatmul.mubr.f32.gmra.mxu0 %v3858
        %v3947 = vpop.f32.mrf.mxu0
        %v3948 = vadd.f32 %v891, %v3947
        %v3949 = vpop.f32.mrf.mxu0
        %v3950 = vadd.f32 %v895, %v3949
        %3951 = vmatprep.mubr.f32.mxu0 0.0
        %3952 = vmatmul.mubr.f32.gmra.mxu0 %v3859
        %v3953 = vpop.f32.mrf.mxu0
        %v3954 = vadd.f32 %v891, %v3953
        %v3955 = vpop.f32.mrf.mxu0
        %v3956 = vadd.f32 %v895, %v3955
        %3957 = vmatprep.mubr.f32.mxu0 0.0
        %3958 = vmatmul.mubr.f32.gmra.mxu0 %v3860
        %v3959 = vpop.f32.mrf.mxu0
        %v3960 = vadd.f32 %v891, %v3959
        %v3961 = vpop.f32.mrf.mxu0
        %v3962 = vadd.f32 %v895, %v3961
        %3963 = vmatprep.mubr.f32.mxu0 0.0
        %3964 = vmatmul.mubr.f32.gmra.mxu0 %v3861
        %v3965 = vpop.f32.mrf.mxu0
        %v3966 = vadd.f32 %v891, %v3965
        %v3967 = vpop.f32.mrf.mxu0
        %v3968 = vadd.f32 %v895, %v3967
        %3969 = vmatprep.mubr.f32.mxu0 0.0
        %3970 = vmatmul.mubr.f32.gmra.mxu0 %v3862
        %v3971 = vpop.f32.mrf.mxu0
        %v3972 = vadd.f32 %v891, %v3971
        %v3973 = vpop.f32.mrf.mxu0
        %v3974 = vadd.f32 %v895, %v3973
        %3975 = vdwg.mxu0
        %3976 = vmatprep.subr.mxu0 0.0
        %3977 = vmatpush1.msra.mxu0 %v427
        %3978 = vmatprep.subr.mxu0 0.0
        %3979 = vmatpush1.msra.mxu0 %v424
        %3980 = vmatprep.subr.mxu0 0.0
        %3981 = vmatpush1.msra.mxu0 %v421
        %3982 = vmatprep.subr.mxu0 0.0
        %3983 = vmatpush1.msra.mxu0 %v418
        %3984 = vmatprep.subr.mxu0 0.0
        %3985 = vmatpush1.msra.mxu0 %v415
        %3986 = vmatprep.subr.mxu0 0.0
        %3987 = vmatpush1.msra.mxu0 %v412
        %3988 = vmatprep.subr.mxu0 0.0
        %3989 = vmatpush1.msra.mxu0 %v409
        %3990 = vmatprep.subr.mxu0 0.0
        %3991 = vmatpush1.msra.mxu0 %v406
        %3992 = vmatprep.subr.mxu0 0.0
        %3993 = vmatpush1.msra.mxu0 %v403
        %3994 = vmatprep.subr.mxu0 0.0
        %3995 = vmatpush1.msra.mxu0 %v400
        %3996 = vmatprep.subr.mxu0 0.0
        %3997 = vmatpush1.msra.mxu0 %v397
        %3998 = vmatprep.subr.mxu0 0.0
        %3999 = vmatpush1.msra.mxu0 %v394
        %4000 = vmatprep.subr.mxu0 0.0
        %4001 = vmatpush1.msra.mxu0 %v391
        %4002 = vmatprep.subr.mxu0 0.0
        %4003 = vmatpush1.msra.mxu0 %v388
        %4004 = vmatprep.subr.mxu0 0.0
        %4005 = vmatpush1.msra.mxu0 %v385
        %4006 = vmatprep.subr.mxu0 0.0
        %4007 = vmatpush1.msra.mxu0 %v382
        %4008 = vmatprep.subr.mxu0 0.0
        %4009 = vmatpush2.msra.mxu0 0.0
        %4010 = vmatprep.subr.mxu0 0.0
        %4011 = vmatpush2.msra.mxu0 0.0
        %4012 = vmatprep.subr.mxu0 0.0
        %4013 = vmatpush2.msra.mxu0 0.0
        %4014 = vmatprep.subr.mxu0 0.0
        %4015 = vmatpush2.msra.mxu0 0.0
        %4016 = vmatprep.subr.mxu0 0.0
        %4017 = vmatpush2.msra.mxu0 0.0
        %4018 = vmatprep.subr.mxu0 0.0
        %4019 = vmatpush2.msra.mxu0 0.0
        %4020 = vmatprep.subr.mxu0 0.0
        %4021 = vmatpush2.msra.mxu0 0.0
        %4022 = vmatprep.subr.mxu0 0.0
        %4023 = vmatpush2.msra.mxu0 0.0
        %4024 = vmatprep.subr.mxu0 0.0
        %4025 = vmatpush2.msra.mxu0 0.0
        %4026 = vmatprep.subr.mxu0 0.0
        %4027 = vmatpush2.msra.mxu0 0.0
        %4028 = vmatprep.subr.mxu0 0.0
        %4029 = vmatpush2.msra.mxu0 0.0
        %4030 = vmatprep.subr.mxu0 0.0
        %4031 = vmatpush2.msra.mxu0 0.0
        %4032 = vmatprep.subr.mxu0 0.0
        %4033 = vmatpush2.msra.mxu0 0.0
        %4034 = vmatprep.subr.mxu0 0.0
        %4035 = vmatpush2.msra.mxu0 0.0
        %4036 = vmatprep.subr.mxu0 0.0
        %4037 = vmatpush2.msra.mxu0 0.0
        %4038 = vmatprep.subr.mxu0 0.0
        %4039 = vmatpush2.msra.mxu0 0.0
        %4040 = vmatprep.mubr.f32.mxu0 0.0
        %4041 = vmatmul.mubr.f32.gmra.mxu0 %v3855
        %v4042 = vpop.f32.mrf.mxu0
        %v4043 = vadd.f32 %v899, %v4042
        %v4044 = vpop.f32.mrf.mxu0
        %4045 = vmatprep.mubr.f32.mxu0 0.0
        %4046 = vmatmul.mubr.f32.gmra.mxu0 %v3856
        %v4047 = vpop.f32.mrf.mxu0
        %v4048 = vadd.f32 %v899, %v4047
        %v4049 = vpop.f32.mrf.mxu0
        %4050 = vmatprep.mubr.f32.mxu0 0.0
        %4051 = vmatmul.mubr.f32.gmra.mxu0 %v3857
        %v4052 = vpop.f32.mrf.mxu0
        %v4053 = vadd.f32 %v899, %v4052
        %v4054 = vpop.f32.mrf.mxu0
        %4055 = vmatprep.mubr.f32.mxu0 0.0
        %4056 = vmatmul.mubr.f32.gmra.mxu0 %v3858
        %v4057 = vpop.f32.mrf.mxu0
        %v4058 = vadd.f32 %v899, %v4057
        %v4059 = vpop.f32.mrf.mxu0
        %4060 = vmatprep.mubr.f32.mxu0 0.0
        %4061 = vmatmul.mubr.f32.gmra.mxu0 %v3859
        %v4062 = vpop.f32.mrf.mxu0
        %v4063 = vadd.f32 %v899, %v4062
        %v4064 = vpop.f32.mrf.mxu0
        %4065 = vmatprep.mubr.f32.mxu0 0.0
        %4066 = vmatmul.mubr.f32.gmra.mxu0 %v3860
        %v4067 = vpop.f32.mrf.mxu0
        %v4068 = vadd.f32 %v899, %v4067
        %v4069 = vpop.f32.mrf.mxu0
        %4070 = vmatprep.mubr.f32.mxu0 0.0
        %4071 = vmatmul.mubr.f32.gmra.mxu0 %v3861
        %v4072 = vpop.f32.mrf.mxu0
        %v4073 = vadd.f32 %v899, %v4072
        %v4074 = vpop.f32.mrf.mxu0
        %4075 = vmatprep.mubr.f32.mxu0 0.0
        %4076 = vmatmul.mubr.f32.gmra.mxu0 %v3862
        %v4077 = vpop.f32.mrf.mxu0
        %v4078 = vadd.f32 %v899, %v4077
        %v4079 = vpop.f32.mrf.mxu0
        %4080 = vdwg.mxu0
        %v4081 = vadd.f32 %v3930, %v3748
        %v4082 = vadd.f32 %v3936, %v3754
        %v4083 = vadd.f32 %v3942, %v3760
        %v4084 = vadd.f32 %v3948, %v3766
        %v4085 = vxor.u32 %v4081, 2147483648
        %v4086 = vxor.u32 %v4082, 2147483648
        %v4087 = vxor.u32 %v4083, 2147483648
        %v4088 = vxor.u32 %v4084, 2147483648
        %v4089 = vmul.f32 %v4085, 1.442695
        %v4090 = vpow.pop %v4089
        %v4091 = vmul.f32 %v4086, 1.442695
        %v4092 = vpow.pop %v4091
        %v4093 = vmul.f32 %v4087, 1.442695
        %v4094 = vpow.pop %v4093
        %v4095 = vmul.f32 %v4088, 1.442695
        %v4096 = vpow.pop %v4095
        %v4097 = vadd.f32 %v4090, 1.0
        %v4098 = vadd.f32 %v4092, 1.0
        %v4099 = vadd.f32 %v4094, 1.0
        %v4100 = vadd.f32 %v4096, 1.0
        %v4101 = vrcp.pop %v4097
        %v4102 = vmul.f32 1.0, %v4101
        %v4103 = vrcp.pop %v4098
        %v4104 = vmul.f32 1.0, %v4103
        %v4105 = vrcp.pop %v4099
        %v4106 = vmul.f32 1.0, %v4105
        %v4107 = vrcp.pop %v4100
        %v4108 = vmul.f32 1.0, %v4107
        %v4109 = vadd.f32 %v3932, %v3750
        %v4110 = vadd.f32 %v3938, %v3756
        %v4111 = vadd.f32 %v3944, %v3762
        %v4112 = vadd.f32 %v3950, %v3768
        %v4113 = vxor.u32 %v4109, 2147483648
        %v4114 = vxor.u32 %v4110, 2147483648
        %v4115 = vxor.u32 %v4111, 2147483648
        %v4116 = vxor.u32 %v4112, 2147483648
        %v4117 = vmul.f32 %v4113, 1.442695
        %v4118 = vpow.pop %v4117
        %v4119 = vmul.f32 %v4114, 1.442695
        %v4120 = vpow.pop %v4119
        %v4121 = vmul.f32 %v4115, 1.442695
        %v4122 = vpow.pop %v4121
        %v4123 = vmul.f32 %v4116, 1.442695
        %v4124 = vpow.pop %v4123
        %v4125 = vadd.f32 %v4118, 1.0
        %v4126 = vadd.f32 %v4120, 1.0
        %v4127 = vadd.f32 %v4122, 1.0
        %v4128 = vadd.f32 %v4124, 1.0
        %v4129 = vrcp.pop %v4125
        %v4130 = vmul.f32 1.0, %v4129
        %v4131 = vrcp.pop %v4126
        %v4132 = vmul.f32 1.0, %v4131
        %v4133 = vrcp.pop %v4127
        %v4134 = vmul.f32 1.0, %v4133
        %v4135 = vrcp.pop %v4128
        %v4136 = vmul.f32 1.0, %v4135
        %v4137 = vmul.f32 %v4102, %v3837
        %v4138 = vmul.f32 %v4104, %v3842
        %v4139 = vmul.f32 %v4106, %v3847
        %v4140 = vmul.f32 %v4108, %v3852
        %v4141 = vadd.f32 %v4043, %v4137
        %v4142 = vadd.f32 %v4048, %v4138
        %v4143 = vadd.f32 %v4053, %v4139
        %v4144 = vadd.f32 %v4058, %v4140
        %v4145 = vtanh.pop %v4141
        %v4146 = vtanh.pop %v4142
        %v4147 = vtanh.pop %v4143
        %v4148 = vtanh.pop %v4144
        %v4149 = vsub.f32 1.0, %v4130
        %v4150 = vsub.f32 1.0, %v4132
        %v4151 = vsub.f32 1.0, %v4134
        %v4152 = vsub.f32 1.0, %v4136
        %v4153 = vmul.f32 %v4149, %v4145
        %v4154 = vmul.f32 %v4150, %v4146
        %v4155 = vmul.f32 %v4151, %v4147
        %v4156 = vmul.f32 %v4152, %v4148
        %v4157 = vmul.f32 %v4130, %v3677
        %v4158 = vmul.f32 %v4132, %v3678
        %v4159 = vmul.f32 %v4134, %v3679
        %v4160 = vmul.f32 %v4136, %v3680
        %v4161 = vadd.f32 %v4153, %v4157
        %v4162 = vadd.f32 %v4154, %v4158
        %v4163 = vadd.f32 %v4155, %v4159
        %v4164 = vadd.f32 %v4156, %v4160
        %v4166 = vlaneseq
        %v4167 = vshrl.u32 %v4166, 7
        %v4168 = vsub.s32 0, %v4167
        %v4169 = vrot.slane %v494, %v4168
        %4171 = vmatprep.subr.mxu0 0.0
        %4172 = vmatpush1.msra.mxu0 %v493
        %4173 = vmatprep.subr.mxu0 0.0
        %4174 = vmatpush1.msra.mxu0 %v492
        %4175 = vmatprep.subr.mxu0 0.0
        %4176 = vmatpush1.msra.mxu0 %v491
        %4177 = vmatprep.subr.mxu0 0.0
        %4178 = vmatpush1.msra.mxu0 %v490
        %4179 = vmatprep.subr.mxu0 0.0
        %4180 = vmatpush1.msra.mxu0 %v489
        %4181 = vmatprep.subr.mxu0 0.0
        %4182 = vmatpush1.msra.mxu0 %v488
        %4183 = vmatprep.subr.mxu0 0.0
        %4184 = vmatpush1.msra.mxu0 %v487
        %4185 = vmatprep.subr.mxu0 0.0
        %4186 = vmatpush1.msra.mxu0 %v486
        %4187 = vmatprep.subr.mxu0 0.0
        %4188 = vmatpush1.msra.mxu0 %v485
        %4189 = vmatprep.subr.mxu0 0.0
        %4190 = vmatpush1.msra.mxu0 %v484
        %4191 = vmatprep.subr.mxu0 0.0
        %4192 = vmatpush1.msra.mxu0 %v483
        %4193 = vmatprep.subr.mxu0 0.0
        %4194 = vmatpush1.msra.mxu0 %v482
        %4195 = vmatprep.subr.mxu0 0.0
        %4196 = vmatpush1.msra.mxu0 %v481
        %4197 = vmatprep.subr.mxu0 0.0
        %4198 = vmatpush1.msra.mxu0 %v480
        %4199 = vmatprep.subr.mxu0 0.0
        %4200 = vmatpush1.msra.mxu0 %v479
        %4201 = vmatprep.subr.mxu0 0.0
        %4202 = vmatpush1.msra.mxu0 %v478
        %4203 = vmatprep.subr.mxu0 0.0
        %4204 = vmatpush2.msra.mxu0 0.0
        %4205 = vmatprep.subr.mxu0 0.0
        %4206 = vmatpush2.msra.mxu0 0.0
        %4207 = vmatprep.subr.mxu0 0.0
        %4208 = vmatpush2.msra.mxu0 0.0
        %4209 = vmatprep.subr.mxu0 0.0
        %4210 = vmatpush2.msra.mxu0 0.0
        %4211 = vmatprep.subr.mxu0 0.0
        %4212 = vmatpush2.msra.mxu0 0.0
        %4213 = vmatprep.subr.mxu0 0.0
        %4214 = vmatpush2.msra.mxu0 0.0
        %4215 = vmatprep.subr.mxu0 0.0
        %4216 = vmatpush2.msra.mxu0 0.0
        %4217 = vmatprep.subr.mxu0 0.0
        %4218 = vmatpush2.msra.mxu0 0.0
        %4219 = vmatprep.subr.mxu0 0.0
        %4220 = vmatpush2.msra.mxu0 0.0
        %4221 = vmatprep.subr.mxu0 0.0
        %4222 = vmatpush2.msra.mxu0 0.0
        %4223 = vmatprep.subr.mxu0 0.0
        %4224 = vmatpush2.msra.mxu0 0.0
        %4225 = vmatprep.subr.mxu0 0.0
        %4226 = vmatpush2.msra.mxu0 0.0
        %4227 = vmatprep.subr.mxu0 0.0
        %4228 = vmatpush2.msra.mxu0 0.0
        %4229 = vmatprep.subr.mxu0 0.0
        %4230 = vmatpush2.msra.mxu0 0.0
        %4231 = vmatprep.subr.mxu0 0.0
        %4232 = vmatpush2.msra.mxu0 0.0
        %4233 = vmatprep.subr.mxu0 0.0
        %4234 = vmatpush2.msra.mxu0 0.0
        %4235 = vmatprep.mubr.f32.mxu0 0.0
        %4236 = vmatmul.mubr.f32.gmra.mxu0 %v4161
        %v4237 = vpop.f32.mrf.mxu0
        %v4238 = vadd.f32 %v4169, %v4237
        %v4239 = vpop.f32.mrf.mxu0
        %4240 = vmatprep.mubr.f32.mxu0 0.0
        %4241 = vmatmul.mubr.f32.gmra.mxu0 %v4162
        %v4242 = vpop.f32.mrf.mxu0
        %v4243 = vadd.f32 %v4169, %v4242
        %v4244 = vpop.f32.mrf.mxu0
        %4245 = vmatprep.mubr.f32.mxu0 0.0
        %4246 = vmatmul.mubr.f32.gmra.mxu0 %v4163
        %v4247 = vpop.f32.mrf.mxu0
        %v4248 = vadd.f32 %v4169, %v4247
        %v4249 = vpop.f32.mrf.mxu0
        %4250 = vmatprep.mubr.f32.mxu0 0.0
        %4251 = vmatmul.mubr.f32.gmra.mxu0 %v4164
        %v4252 = vpop.f32.mrf.mxu0
        %v4253 = vadd.f32 %v4169, %v4252
        %v4254 = vpop.f32.mrf.mxu0
        %4255 = vdwg.mxu0
        %v4256 = vadd.f32 %v3954, %v3748
        %v4257 = vadd.f32 %v3960, %v3754
        %v4258 = vadd.f32 %v3966, %v3760
        %v4259 = vadd.f32 %v3972, %v3766
        %v4260 = vxor.u32 %v4256, 2147483648
        %v4261 = vxor.u32 %v4257, 2147483648
        %v4262 = vxor.u32 %v4258, 2147483648
        %v4263 = vxor.u32 %v4259, 2147483648
        %v4264 = vmul.f32 %v4260, 1.442695
        %v4265 = vpow.pop %v4264
        %v4266 = vmul.f32 %v4261, 1.442695
        %v4267 = vpow.pop %v4266
        %v4268 = vmul.f32 %v4262, 1.442695
        %v4269 = vpow.pop %v4268
        %v4270 = vmul.f32 %v4263, 1.442695
        %v4271 = vpow.pop %v4270
        %v4272 = vadd.f32 %v4265, 1.0
        %v4273 = vadd.f32 %v4267, 1.0
        %v4274 = vadd.f32 %v4269, 1.0
        %v4275 = vadd.f32 %v4271, 1.0
        %v4276 = vrcp.pop %v4272
        %v4277 = vmul.f32 1.0, %v4276
        %v4278 = vrcp.pop %v4273
        %v4279 = vmul.f32 1.0, %v4278
        %v4280 = vrcp.pop %v4274
        %v4281 = vmul.f32 1.0, %v4280
        %v4282 = vrcp.pop %v4275
        %v4283 = vmul.f32 1.0, %v4282
        %v4284 = vadd.f32 %v3956, %v3750
        %v4285 = vadd.f32 %v3962, %v3756
        %v4286 = vadd.f32 %v3968, %v3762
        %v4287 = vadd.f32 %v3974, %v3768
        %v4288 = vxor.u32 %v4284, 2147483648
        %v4289 = vxor.u32 %v4285, 2147483648
        %v4290 = vxor.u32 %v4286, 2147483648
        %v4291 = vxor.u32 %v4287, 2147483648
        %v4292 = vmul.f32 %v4288, 1.442695
        %v4293 = vpow.pop %v4292
        %v4294 = vmul.f32 %v4289, 1.442695
        %v4295 = vpow.pop %v4294
        %v4296 = vmul.f32 %v4290, 1.442695
        %v4297 = vpow.pop %v4296
        %v4298 = vmul.f32 %v4291, 1.442695
        %v4299 = vpow.pop %v4298
        %v4300 = vadd.f32 %v4293, 1.0
        %v4301 = vadd.f32 %v4295, 1.0
        %v4302 = vadd.f32 %v4297, 1.0
        %v4303 = vadd.f32 %v4299, 1.0
        %v4304 = vrcp.pop %v4300
        %v4305 = vmul.f32 1.0, %v4304
        %v4306 = vrcp.pop %v4301
        %v4307 = vmul.f32 1.0, %v4306
        %v4308 = vrcp.pop %v4302
        %v4309 = vmul.f32 1.0, %v4308
        %v4310 = vrcp.pop %v4303
        %v4311 = vmul.f32 1.0, %v4310
        %v4312 = vmul.f32 %v4277, %v3837
        %v4313 = vmul.f32 %v4279, %v3842
        %v4314 = vmul.f32 %v4281, %v3847
        %v4315 = vmul.f32 %v4283, %v3852
        %v4316 = vadd.f32 %v4063, %v4312
        %v4317 = vadd.f32 %v4068, %v4313
        %v4318 = vadd.f32 %v4073, %v4314
        %v4319 = vadd.f32 %v4078, %v4315
        %v4320 = vtanh.pop %v4316
        %v4321 = vtanh.pop %v4317
        %v4322 = vtanh.pop %v4318
        %v4323 = vtanh.pop %v4319
        %v4324 = vsub.f32 1.0, %v4305
        %v4325 = vsub.f32 1.0, %v4307
        %v4326 = vsub.f32 1.0, %v4309
        %v4327 = vsub.f32 1.0, %v4311
        %v4328 = vmul.f32 %v4324, %v4320
        %v4329 = vmul.f32 %v4325, %v4321
        %v4330 = vmul.f32 %v4326, %v4322
        %v4331 = vmul.f32 %v4327, %v4323
        %v4332 = vmul.f32 %v4305, %v3677
        %v4333 = vmul.f32 %v4307, %v3678
        %v4334 = vmul.f32 %v4309, %v3679
        %v4335 = vmul.f32 %v4311, %v3680
        %v4336 = vadd.f32 %v4328, %v4332
        %v4337 = vadd.f32 %v4329, %v4333
        %v4338 = vadd.f32 %v4330, %v4334
        %v4339 = vadd.f32 %v4331, %v4335
        %4340 = vmatprep.subr.mxu0 0.0
        %4341 = vmatpush1.msra.mxu0 %v493
        %4342 = vmatprep.subr.mxu0 0.0
        %4343 = vmatpush1.msra.mxu0 %v492
        %4344 = vmatprep.subr.mxu0 0.0
        %4345 = vmatpush1.msra.mxu0 %v491
        %4346 = vmatprep.subr.mxu0 0.0
        %4347 = vmatpush1.msra.mxu0 %v490
        %4348 = vmatprep.subr.mxu0 0.0
        %4349 = vmatpush1.msra.mxu0 %v489
        %4350 = vmatprep.subr.mxu0 0.0
        %4351 = vmatpush1.msra.mxu0 %v488
        %4352 = vmatprep.subr.mxu0 0.0
        %4353 = vmatpush1.msra.mxu0 %v487
        %4354 = vmatprep.subr.mxu0 0.0
        %4355 = vmatpush1.msra.mxu0 %v486
        %4356 = vmatprep.subr.mxu0 0.0
        %4357 = vmatpush1.msra.mxu0 %v485
        %4358 = vmatprep.subr.mxu0 0.0
        %4359 = vmatpush1.msra.mxu0 %v484
        %4360 = vmatprep.subr.mxu0 0.0
        %4361 = vmatpush1.msra.mxu0 %v483
        %4362 = vmatprep.subr.mxu0 0.0
        %4363 = vmatpush1.msra.mxu0 %v482
        %4364 = vmatprep.subr.mxu0 0.0
        %4365 = vmatpush1.msra.mxu0 %v481
        %4366 = vmatprep.subr.mxu0 0.0
        %4367 = vmatpush1.msra.mxu0 %v480
        %4368 = vmatprep.subr.mxu0 0.0
        %4369 = vmatpush1.msra.mxu0 %v479
        %4370 = vmatprep.subr.mxu0 0.0
        %4371 = vmatpush1.msra.mxu0 %v478
        %4372 = vmatprep.subr.mxu0 0.0
        %4373 = vmatpush2.msra.mxu0 0.0
        %4374 = vmatprep.subr.mxu0 0.0
        %4375 = vmatpush2.msra.mxu0 0.0
        %4376 = vmatprep.subr.mxu0 0.0
        %4377 = vmatpush2.msra.mxu0 0.0
        %4378 = vmatprep.subr.mxu0 0.0
        %4379 = vmatpush2.msra.mxu0 0.0
        %4380 = vmatprep.subr.mxu0 0.0
        %4381 = vmatpush2.msra.mxu0 0.0
        %4382 = vmatprep.subr.mxu0 0.0
        %4383 = vmatpush2.msra.mxu0 0.0
        %4384 = vmatprep.subr.mxu0 0.0
        %4385 = vmatpush2.msra.mxu0 0.0
        %4386 = vmatprep.subr.mxu0 0.0
        %4387 = vmatpush2.msra.mxu0 0.0
        %4388 = vmatprep.subr.mxu0 0.0
        %4389 = vmatpush2.msra.mxu0 0.0
        %4390 = vmatprep.subr.mxu0 0.0
        %4391 = vmatpush2.msra.mxu0 0.0
        %4392 = vmatprep.subr.mxu0 0.0
        %4393 = vmatpush2.msra.mxu0 0.0
        %4394 = vmatprep.subr.mxu0 0.0
        %4395 = vmatpush2.msra.mxu0 0.0
        %4396 = vmatprep.subr.mxu0 0.0
        %4397 = vmatpush2.msra.mxu0 0.0
        %4398 = vmatprep.subr.mxu0 0.0
        %4399 = vmatpush2.msra.mxu0 0.0
        %4400 = vmatprep.subr.mxu0 0.0
        %4401 = vmatpush2.msra.mxu0 0.0
        %4402 = vmatprep.subr.mxu0 0.0
        %4403 = vmatpush2.msra.mxu0 0.0
        %4404 = vmatprep.mubr.f32.mxu0 0.0
        %4405 = vmatmul.mubr.f32.gmra.mxu0 %v4336
        %v4406 = vpop.f32.mrf.mxu0
        %v4407 = vadd.f32 %v4169, %v4406
        %v4408 = vpop.f32.mrf.mxu0
        %4409 = vmatprep.mubr.f32.mxu0 0.0
        %4410 = vmatmul.mubr.f32.gmra.mxu0 %v4337
        %v4411 = vpop.f32.mrf.mxu0
        %v4412 = vadd.f32 %v4169, %v4411
        %v4413 = vpop.f32.mrf.mxu0
        %4414 = vmatprep.mubr.f32.mxu0 0.0
        %4415 = vmatmul.mubr.f32.gmra.mxu0 %v4338
        %v4416 = vpop.f32.mrf.mxu0
        %v4417 = vadd.f32 %v4169, %v4416
        %v4418 = vpop.f32.mrf.mxu0
        %4419 = vmatprep.mubr.f32.mxu0 0.0
        %4420 = vmatmul.mubr.f32.gmra.mxu0 %v4339
        %v4421 = vpop.f32.mrf.mxu0
        %v4422 = vadd.f32 %v4169, %v4421
        %v4423 = vpop.f32.mrf.mxu0
        %4424 = vdwg.mxu0
        %4429 = vrot.lane.b32.xlu0 %v4407, 8
        %v4430 = vpop.permute.xlu0 %4429
        %4431 = vrot.lane.b32.xlu0 %v4412, 8
        %v4432 = vpop.permute.xlu0 %4431
        %4433 = vrot.lane.b32.xlu0 %v4417, 8
        %v4434 = vpop.permute.xlu0 %4433
        %4435 = vrot.lane.b32.xlu0 %v4422, 8
        %v4436 = vpop.permute.xlu0 %4435
        %v4441 = vsel %vm533, %v4238, %v4430
        %v4442 = vsel %vm533, %v4243, %v4432
        %v4443 = vsel %vm533, %v4248, %v4434
        %v4444 = vsel %vm533, %v4253, %v4436
        %vm4445 = vcmask 130048
        %4446 = vst.msk [vmem:[%s376] sm:$0xff] %vm4445, %v4441
        %4447 = vst.msk [vmem:[%s376 + $0x8] sm:$0xff] %vm4445, %v4442
        %4448 = vst.msk [vmem:[%s376 + $0x10] sm:$0xff] %vm4445, %v4443
        %4449 = vst.msk [vmem:[%s376 + $0x18] sm:$0xff] %vm4445, %v4444
        %s4450 = smul.u32 4, %s22
        %p4451 = scmp.lt.s32.totalorder %s4450, 7
        %s4452 = scalar_select %p4451, %s4450, 7
        %s4453 = smul.addr %s4452, 8
        %s4454 = scalar_lea.vmem %s10, %s4453
        // Predicated region
        $region65: #{tpu_custom_call.1} parent=59 // pred_check
          %p4455 = pneg %p255
        $region66: #{tpu_custom_call.1} parent=59 // pred_check_branch
          %4457 = sbr.rel (%p4455) target = $region68
        $region67: #{tpu_custom_call.1} parent=59 // pred_region
          %s4458 = smul.u32 4, %s22
        $region68: #{tpu_custom_call.1} parent=59 // pred_fallthru
          _
      $region60: #{tpu_custom_call.1} parent=5 // pred_fallthru
        _
      %p4459 = scmp.le.s32.totalorder 2, %s17
      // Predicated region
      $region69: #{tpu_custom_call.1} parent=5 // pred_check
        %p4460 = pneg %p4459
      $region70: #{tpu_custom_call.1} parent=5 // pred_check_branch
        %4462 = sbr.rel (%p4460) target = $region72
      $region71: #{tpu_custom_call.1} parent=5 // pred_region
        %s4463 = ssub.s32 %s17, 2
        // Predicated region
        $region73: #{tpu_custom_call.1} parent=71 // pred_check
          %p4464 = pneg %p261
        $region74: #{tpu_custom_call.1} parent=71 // pred_check_branch
          %4466 = sbr.rel (%p4464) target = $region76
        $region75: #{tpu_custom_call.1} parent=71 // pred_region
          %s4467 = smul.u32 4, %s23
          %p4468 = scmp.lt.s32.totalorder %s4467, 7
          %s4469 = scalar_select %p4468, %s4467, 7
          %s4470 = smul.addr %s4469, 8
          %s4471 = scalar_lea.vmem %s10, %s4470
        $region76: #{tpu_custom_call.1} parent=71 // pred_fallthru
          _
      $region72: #{tpu_custom_call.1} parent=5 // pred_fallthru
        _
    $region6: #{tpu_custom_call.1} parent=1 // loop_footer
      %s21 = sadd.s32 1, %s17
    $region7: #{tpu_custom_call.1} parent=1 // loop_footer_branch
      %16 = sbr.rel target = $region3
    $region8: #{tpu_custom_call.1} parent=1 // loop_exit
      _
    %4472 = vsyncpa [#allocation4], 1
    %s4473 = scalar_lea.sflag [#allocation4], 1
    %4474 = vsyncpa %s4473, 1

</llo_original>
